<compile_context>
chip_gen: v7x
topology: tpu7x:2x2x1
jax: 0.10.0
libtpu: 0.0.40
codegen_flags: <defaults>
</compile_context>

<pallas_src>
import functools

import jax
import jax.numpy as jnp
from jax.experimental import pallas as pl
from jax.experimental.pallas import tpu as pltpu


def _round_up(x, m):
    return ((x + m - 1) // m) * m


# ---------------------------------------------------------------------------
# Pallas kernel: one M-tile of  out = [LeakyReLU](X @ W + b) + shift
# ---------------------------------------------------------------------------
def _fused_matmul_kernel(x_ref, w_ref, b_ref, shift_ref, o_ref, *, apply_lrelu):
    acc = jnp.dot(x_ref[...], w_ref[...], preferred_element_type=jnp.float32)
    acc = acc + b_ref[...]                         # (TM, N) + (1, N), f32 epilogue
    if apply_lrelu:
        acc = jnp.where(acc >= 0, acc, 0.2 * acc)
    acc = acc + shift_ref[...]                     # folded-BN shift (zeros if no BN)
    o_ref[...] = acc.astype(o_ref.dtype)


_TM_MAX = 2048  # rows per grid step; working set ~5 MiB bf16 -> fits v5e/v6e/v7x easily


def fused_matmul(x, w, b, shift, *, apply_lrelu, out_dtype):
    """x:(M,K), w:(K,N) bf16 (pre-packed), b/shift:(1,N) f32 -> (M,N) out_dtype."""
    M, K = x.shape
    Kw, N = w.shape
    assert K == Kw, (K, Kw)

    x = x.astype(jnp.bfloat16)

    # Tile M; K and N stay full-extent (satisfies the (8,128) rule without HBM padding).
    Mp16 = _round_up(max(M, 16), 16)
    TM = min(_TM_MAX, Mp16)
    Mp = _round_up(M, TM)
    if Mp != M:
        x = jnp.pad(x, ((0, Mp - M), (0, 0)))
    grid = (Mp // TM,)

    out_bytes = Mp * N * jnp.dtype(out_dtype).itemsize
    cost = pl.CostEstimate(
        flops=2 * Mp * K * N,
        transcendentals=0,
        bytes_accessed=Mp * K * 2 + K * N * 2 + 2 * N * 4 + out_bytes,
    )

    out = pl.pallas_call(
        functools.partial(_fused_matmul_kernel, apply_lrelu=apply_lrelu),
        out_shape=jax.ShapeDtypeStruct((Mp, N), out_dtype),
        grid=grid,
        in_specs=[
            pl.BlockSpec((TM, K), lambda i: (i, 0)),   # X tile, pipelined over M
            pl.BlockSpec((K, N), lambda i: (0, 0)),    # W resident across the grid
            pl.BlockSpec((1, N), lambda i: (0, 0)),    # bias (BN-folded)
            pl.BlockSpec((1, N), lambda i: (0, 0)),    # BN shift
        ],
        out_specs=pl.BlockSpec((TM, N), lambda i: (i, 0)),
        compiler_params=pltpu.CompilerParams(
            dimension_semantics=("parallel",)),
        cost_estimate=cost,
    )(x, w, b, shift)

    if Mp != M:
        out = out[:M]
    return out


# ---------------------------------------------------------------------------
# Glue: NHWC im2col for 3x3 / stride 2 / pad 1 convs (pure data movement).
# Column order is (kh, kw, Cin), matching the pre-packed weight layout.
# ---------------------------------------------------------------------------
def im2col_nhwc(x, k=3, stride=2, pad=1):
    B, H, W, C = x.shape
    xp = jnp.pad(x, ((0, 0), (pad, pad), (pad, pad), (0, 0)))
    Ho = (H + 2 * pad - k) // stride + 1
    Wo = (W + 2 * pad - k) // stride + 1
    cols = []
    for i in range(k):
        for j in range(k):
            cols.append(xp[:, i:i + stride * Ho:stride, j:j + stride * Wo:stride, :])
    cols = jnp.stack(cols, axis=3)                      # (B, Ho, Wo, 9, C)
    patches = cols.reshape(B * Ho * Wo, k * k * C)      # column = kh*3*C + kw*C + c
    return patches, Ho, Wo


# ---------------------------------------------------------------------------
# Parameters (deterministic, synthetic), BN folding, and one-time packing.
# ---------------------------------------------------------------------------
def bn_eval_affine(c, eps):
    # running_mean=0, running_var=1, gamma=1, beta=0 (PyTorch init), eval mode.
    gamma = jnp.ones((c,), jnp.float32)
    beta = jnp.zeros((c,), jnp.float32)
    running_mean = jnp.zeros((c,), jnp.float32)
    running_var = jnp.ones((c,), jnp.float32)
    scale = gamma / jnp.sqrt(running_var + eps)
    shift = beta - running_mean * scale
    return scale, shift


def init_params(key):
    ks = jax.random.split(key, 10)

    def conv_w(k, cout, cin):
        fan_in = cin * 9
        return jax.random.normal(k, (cout, cin, 3, 3), jnp.float32) * (1.0 / jnp.sqrt(fan_in))

    params = {
        "w1": conv_w(ks[0], 16, 3),   "b1": jax.random.normal(ks[1], (16,), jnp.float32) * 0.01,
        "w2": conv_w(ks[2], 32, 16),  "b2": jax.random.normal(ks[3], (32,), jnp.float32) * 0.01,
        "w3": conv_w(ks[4], 64, 32),  "b3": jax.random.normal(ks[5], (64,), jnp.float32) * 0.01,
        "w4": conv_w(ks[6], 128, 64), "b4": jax.random.normal(ks[7], (128,), jnp.float32) * 0.01,
        # Linear(128 * 2 * 2 = 512, 300): torch weight shape (300, 512)
        "w_fc": jax.random.normal(ks[8], (300, 512), jnp.float32) * (1.0 / jnp.sqrt(512.0)),
        "b_fc": jax.random.normal(ks[9], (300,), jnp.float32) * 0.01,
    }
    params["bn2_scale"], params["bn2_shift"] = bn_eval_affine(32, 0.8)
    params["bn3_scale"], params["bn3_shift"] = bn_eval_affine(64, 0.8)
    params["bn4_scale"], params["bn4_shift"] = bn_eval_affine(128, 0.8)
    return params


def prepare_params(params):
    """One-time pack: im2col-order weights, fold BN into W/b, cast to bf16."""
    def pack_conv(w, b, scale=None, shift=None):
        cout, cin, kh, kw = w.shape
        # rows ordered (kh, kw, cin) to match im2col_nhwc columns
        wmat = jnp.transpose(w, (2, 3, 1, 0)).reshape(kh * kw * cin, cout)
        if scale is None:
            scale = jnp.ones((cout,), jnp.float32)
            shift = jnp.zeros((cout,), jnp.float32)
        wmat = wmat * scale[None, :]
        bb = b * scale
        return {
            "w": wmat.astype(jnp.bfloat16),
            "b": bb.astype(jnp.float32).reshape(1, cout),
            "shift": shift.astype(jnp.float32).reshape(1, cout),
        }

    convs = [
        pack_conv(params["w1"], params["b1"]),
        pack_conv(params["w2"], params["b2"], params["bn2_scale"], params["bn2_shift"]),
        pack_conv(params["w3"], params["b3"], params["bn3_scale"], params["bn3_shift"]),
        pack_conv(params["w4"], params["b4"], params["bn4_scale"], params["bn4_shift"]),
    ]

    # FC: reorder the 512 input rows from torch's NCHW flatten (c,h,w) to NHWC (h,w,c)
    # so the activations never need a transpose before the final matmul.
    w_fc = params["w_fc"].reshape(300, 128, 2, 2)          # (O, C, H, W)
    w_fc = jnp.transpose(w_fc, (2, 3, 1, 0)).reshape(512, 300)
    fc = {
        "w": w_fc.astype(jnp.bfloat16),
        "b": params["b_fc"].astype(jnp.float32).reshape(1, 300),
        "shift": jnp.zeros((1, 300), jnp.float32),
    }
    return {"convs": convs, "fc": fc}


# ---------------------------------------------------------------------------
# Full forward (NHWC between layers, intermediate activations kept in bf16).
# ---------------------------------------------------------------------------
def convnet_cifar10_forward(img, prepped):
    B = img.shape[0]
    # nn.Unflatten(1, (3,32,32)) then a single NCHW -> NHWC relayout at the entry.
    x = img.reshape(B, 3, 32, 32).transpose(0, 2, 3, 1).astype(jnp.bfloat16)

    for layer in prepped["convs"]:
        patches, Ho, Wo = im2col_nhwc(x)                       # (B*Ho*Wo, 9*Cin)
        out = fused_matmul(patches, layer["w"], layer["b"], layer["shift"],
                           apply_lrelu=True, out_dtype=jnp.bfloat16)
        x = out.reshape(B, Ho, Wo, -1)                         # stays NHWC

    feat_in = x.reshape(B, -1)                                 # NHWC flatten (h, w, c)
    feature = fused_matmul(feat_in, prepped["fc"]["w"], prepped["fc"]["b"],
                           prepped["fc"]["shift"],
                           apply_lrelu=False, out_dtype=jnp.float32)   # (B, 300)
    return feature


if __name__ == "__main__":
    key = jax.random.PRNGKey(0)
    pkey, xkey = jax.random.split(key)
    params = init_params(pkey)
    prepped = prepare_params(params)

    batch = 2
    img = jax.random.normal(xkey, (batch, 3 * 32 * 32), jnp.float32)

    fwd = jax.jit(convnet_cifar10_forward)
    feature = jax.block_until_ready(fwd(img, prepped))
    assert feature.shape == (batch, 300), feature.shape
    assert bool(jnp.all(jnp.isfinite(feature)))
    print("KERNEL_OK")
</pallas_src>

<mosaic_0001>
module attributes {stable_mosaic.version = 11 : i64} {
  func.func @_fused_matmul_kernel(%arg0: i32, %arg1: memref<512x27xbf16, #tpu.memory_space<vmem>>, %arg2: memref<27x16xbf16, #tpu.memory_space<vmem>>, %arg3: memref<1x16xf32, #tpu.memory_space<vmem>>, %arg4: memref<1x16xf32, #tpu.memory_space<vmem>>, %arg5: memref<512x16xbf16, #tpu.memory_space<vmem>>) attributes {dimension_semantics = [#tpu.dimension_semantics<parallel>], iteration_bounds = array<i64: 1>, scalar_prefetch = 0 : i64, scratch_operands = 0 : i64, tpu.core_type = #tpu.core_type<tc>, window_params = [{transform_indices = @transform_0, window_bounds = array<i64: 512, 27>}, {pipeline_mode = #tpu.pipeline_mode<synchronous>, transform_indices = @transform_1, window_bounds = array<i64: 27, 16>}, {pipeline_mode = #tpu.pipeline_mode<synchronous>, transform_indices = @transform_2, window_bounds = array<i64: 1, 16>}, {pipeline_mode = #tpu.pipeline_mode<synchronous>, transform_indices = @transform_3, window_bounds = array<i64: 1, 16>}, {transform_indices = @transform_4, window_bounds = array<i64: 512, 16>}]} {
    %c0 = arith.constant 0 : index
    %c0_0 = arith.constant 0 : index
    %0 = vector.load %arg1[%c0, %c0_0] : memref<512x27xbf16, #tpu.memory_space<vmem>>, vector<512x27xbf16>
    %c0_1 = arith.constant 0 : index
    %c0_2 = arith.constant 0 : index
    %1 = vector.load %arg2[%c0_1, %c0_2] : memref<27x16xbf16, #tpu.memory_space<vmem>>, vector<27x16xbf16>
    %cst = arith.constant dense<0.000000e+00> : vector<512x16xf32>
    %2 = tpu.matmul %0, %1, %cst {dimension_numbers = #tpu.dot_dimension_numbers<[1], [0], [0], [1], [0, 0, 1, 1], [], []>} : vector<512x27xbf16>, vector<27x16xbf16>, vector<512x16xf32> -> vector<512x16xf32>
    %c0_3 = arith.constant 0 : index
    %c0_4 = arith.constant 0 : index
    %3 = vector.load %arg3[%c0_3, %c0_4] : memref<1x16xf32, #tpu.memory_space<vmem>>, vector<1x16xf32>
    %4 = vector.broadcast %3 : vector<1x16xf32> to vector<512x16xf32>
    %5 = arith.addf %2, %4 : vector<512x16xf32>
    %cst_5 = arith.constant 0.000000e+00 : f32
    %6 = vector.broadcast %cst_5 : f32 to vector<512x16xf32>
    %7 = arith.cmpf oge, %5, %6 : vector<512x16xf32>
    %cst_6 = arith.constant 2.000000e-01 : f32
    %8 = vector.broadcast %cst_6 : f32 to vector<512x16xf32>
    %9 = arith.mulf %8, %5 : vector<512x16xf32>
    %10 = arith.select %7, %5, %9 : vector<512x16xi1>, vector<512x16xf32>
    %c0_7 = arith.constant 0 : index
    %c0_8 = arith.constant 0 : index
    %11 = vector.load %arg4[%c0_7, %c0_8] : memref<1x16xf32, #tpu.memory_space<vmem>>, vector<1x16xf32>
    %12 = vector.broadcast %11 : vector<1x16xf32> to vector<512x16xf32>
    %13 = arith.addf %10, %12 : vector<512x16xf32>
    %14 = arith.truncf %13 : vector<512x16xf32> to vector<512x16xbf16>
    %c0_9 = arith.constant 0 : index
    %c0_10 = arith.constant 0 : index
    %15 = vector.load %arg5[%c0_9, %c0_10] : memref<512x16xbf16, #tpu.memory_space<vmem>>, vector<512x16xbf16>
    tpu.vector_store %arg5[%c0_9, %c0_10], %14 {strides = array<i32>} : memref<512x16xbf16, #tpu.memory_space<vmem>>, vector<512x16xbf16>,
    return
  }
  func.func @transform_0(%arg0: i32) -> (i32, i32) {
    %c0_i32 = arith.constant 0 : i32
    %c0_i32_0 = arith.constant 0 : i32
    return %arg0, %c0_i32 : i32, i32
  }
  func.func @transform_1(%arg0: i32) -> (i32, i32) {
    %c0_i32 = arith.constant 0 : i32
    %c0_i32_0 = arith.constant 0 : i32
    %c0_i32_1 = arith.constant 0 : i32
    return %c0_i32, %c0_i32_0 : i32, i32
  }
  func.func @transform_2(%arg0: i32) -> (i32, i32) {
    %c0_i32 = arith.constant 0 : i32
    %c0_i32_0 = arith.constant 0 : i32
    %c0_i32_1 = arith.constant 0 : i32
    return %c0_i32, %c0_i32_0 : i32, i32
  }
  func.func @transform_3(%arg0: i32) -> (i32, i32) {
    %c0_i32 = arith.constant 0 : i32
    %c0_i32_0 = arith.constant 0 : i32
    %c0_i32_1 = arith.constant 0 : i32
    return %c0_i32, %c0_i32_0 : i32, i32
  }
  func.func @transform_4(%arg0: i32) -> (i32, i32) {
    %c0_i32 = arith.constant 0 : i32
    %c0_i32_0 = arith.constant 0 : i32
    return %arg0, %c0_i32 : i32, i32
  }
}

module attributes {stable_mosaic.version = 11 : i64} {
  func.func @_fused_matmul_kernel(%arg0: i32, %arg1: memref<128x144xbf16, #tpu.memory_space<vmem>>, %arg2: memref<144x32xbf16, #tpu.memory_space<vmem>>, %arg3: memref<1x32xf32, #tpu.memory_space<vmem>>, %arg4: memref<1x32xf32, #tpu.memory_space<vmem>>, %arg5: memref<128x32xbf16, #tpu.memory_space<vmem>>) attributes {dimension_semantics = [#tpu.dimension_semantics<parallel>], iteration_bounds = array<i64: 1>, scalar_prefetch = 0 : i64, scratch_operands = 0 : i64, tpu.core_type = #tpu.core_type<tc>, window_params = [{transform_indices = @transform_0, window_bounds = array<i64: 128, 144>}, {pipeline_mode = #tpu.pipeline_mode<synchronous>, transform_indices = @transform_1, window_bounds = array<i64: 144, 32>}, {pipeline_mode = #tpu.pipeline_mode<synchronous>, transform_indices = @transform_2, window_bounds = array<i64: 1, 32>}, {pipeline_mode = #tpu.pipeline_mode<synchronous>, transform_indices = @transform_3, window_bounds = array<i64: 1, 32>}, {transform_indices = @transform_4, window_bounds = array<i64: 128, 32>}]} {
    %c0 = arith.constant 0 : index
    %c0_0 = arith.constant 0 : index
    %0 = vector.load %arg1[%c0, %c0_0] : memref<128x144xbf16, #tpu.memory_space<vmem>>, vector<128x144xbf16>
    %c0_1 = arith.constant 0 : index
    %c0_2 = arith.constant 0 : index
    %1 = vector.load %arg2[%c0_1, %c0_2] : memref<144x32xbf16, #tpu.memory_space<vmem>>, vector<144x32xbf16>
    %cst = arith.constant dense<0.000000e+00> : vector<128x32xf32>
    %2 = tpu.matmul %0, %1, %cst {dimension_numbers = #tpu.dot_dimension_numbers<[1], [0], [0], [1], [0, 0, 1, 1], [], []>} : vector<128x144xbf16>, vector<144x32xbf16>, vector<128x32xf32> -> vector<128x32xf32>
    %c0_3 = arith.constant 0 : index
    %c0_4 = arith.constant 0 : index
    %3 = vector.load %arg3[%c0_3, %c0_4] : memref<1x32xf32, #tpu.memory_space<vmem>>, vector<1x32xf32>
    %4 = vector.broadcast %3 : vector<1x32xf32> to vector<128x32xf32>
    %5 = arith.addf %2, %4 : vector<128x32xf32>
    %cst_5 = arith.constant 0.000000e+00 : f32
    %6 = vector.broadcast %cst_5 : f32 to vector<128x32xf32>
    %7 = arith.cmpf oge, %5, %6 : vector<128x32xf32>
    %cst_6 = arith.constant 2.000000e-01 : f32
    %8 = vector.broadcast %cst_6 : f32 to vector<128x32xf32>
    %9 = arith.mulf %8, %5 : vector<128x32xf32>
    %10 = arith.select %7, %5, %9 : vector<128x32xi1>, vector<128x32xf32>
    %c0_7 = arith.constant 0 : index
    %c0_8 = arith.constant 0 : index
    %11 = vector.load %arg4[%c0_7, %c0_8] : memref<1x32xf32, #tpu.memory_space<vmem>>, vector<1x32xf32>
    %12 = vector.broadcast %11 : vector<1x32xf32> to vector<128x32xf32>
    %13 = arith.addf %10, %12 : vector<128x32xf32>
    %14 = arith.truncf %13 : vector<128x32xf32> to vector<128x32xbf16>
    %c0_9 = arith.constant 0 : index
    %c0_10 = arith.constant 0 : index
    %15 = vector.load %arg5[%c0_9, %c0_10] : memref<128x32xbf16, #tpu.memory_space<vmem>>, vector<128x32xbf16>
    tpu.vector_store %arg5[%c0_9, %c0_10], %14 {strides = array<i32>} : memref<128x32xbf16, #tpu.memory_space<vmem>>, vector<128x32xbf16>,
    return
  }
  func.func @transform_0(%arg0: i32) -> (i32, i32) {
    %c0_i32 = arith.constant 0 : i32
    %c0_i32_0 = arith.constant 0 : i32
    return %arg0, %c0_i32 : i32, i32
  }
  func.func @transform_1(%arg0: i32) -> (i32, i32) {
    %c0_i32 = arith.constant 0 : i32
    %c0_i32_0 = arith.constant 0 : i32
    %c0_i32_1 = arith.constant 0 : i32
    return %c0_i32, %c0_i32_0 : i32, i32
  }
  func.func @transform_2(%arg0: i32) -> (i32, i32) {
    %c0_i32 = arith.constant 0 : i32
    %c0_i32_0 = arith.constant 0 : i32
    %c0_i32_1 = arith.constant 0 : i32
    return %c0_i32, %c0_i32_0 : i32, i32
  }
  func.func @transform_3(%arg0: i32) -> (i32, i32) {
    %c0_i32 = arith.constant 0 : i32
    %c0_i32_0 = arith.constant 0 : i32
    %c0_i32_1 = arith.constant 0 : i32
    return %c0_i32, %c0_i32_0 : i32, i32
  }
  func.func @transform_4(%arg0: i32) -> (i32, i32) {
    %c0_i32 = arith.constant 0 : i32
    %c0_i32_0 = arith.constant 0 : i32
    return %arg0, %c0_i32 : i32, i32
  }
}

module attributes {stable_mosaic.version = 11 : i64} {
  func.func @_fused_matmul_kernel(%arg0: i32, %arg1: memref<32x288xbf16, #tpu.memory_space<vmem>>, %arg2: memref<288x64xbf16, #tpu.memory_space<vmem>>, %arg3: memref<1x64xf32, #tpu.memory_space<vmem>>, %arg4: memref<1x64xf32, #tpu.memory_space<vmem>>, %arg5: memref<32x64xbf16, #tpu.memory_space<vmem>>) attributes {dimension_semantics = [#tpu.dimension_semantics<parallel>], iteration_bounds = array<i64: 1>, scalar_prefetch = 0 : i64, scratch_operands = 0 : i64, tpu.core_type = #tpu.core_type<tc>, window_params = [{transform_indices = @transform_0, window_bounds = array<i64: 32, 288>}, {pipeline_mode = #tpu.pipeline_mode<synchronous>, transform_indices = @transform_1, window_bounds = array<i64: 288, 64>}, {pipeline_mode = #tpu.pipeline_mode<synchronous>, transform_indices = @transform_2, window_bounds = array<i64: 1, 64>}, {pipeline_mode = #tpu.pipeline_mode<synchronous>, transform_indices = @transform_3, window_bounds = array<i64: 1, 64>}, {transform_indices = @transform_4, window_bounds = array<i64: 32, 64>}]} {
    %c0 = arith.constant 0 : index
    %c0_0 = arith.constant 0 : index
    %0 = vector.load %arg1[%c0, %c0_0] : memref<32x288xbf16, #tpu.memory_space<vmem>>, vector<32x288xbf16>
    %c0_1 = arith.constant 0 : index
    %c0_2 = arith.constant 0 : index
    %1 = vector.load %arg2[%c0_1, %c0_2] : memref<288x64xbf16, #tpu.memory_space<vmem>>, vector<288x64xbf16>
    %cst = arith.constant dense<0.000000e+00> : vector<32x64xf32>
    %2 = tpu.matmul %0, %1, %cst {dimension_numbers = #tpu.dot_dimension_numbers<[1], [0], [0], [1], [0, 0, 1, 1], [], []>} : vector<32x288xbf16>, vector<288x64xbf16>, vector<32x64xf32> -> vector<32x64xf32>
    %c0_3 = arith.constant 0 : index
    %c0_4 = arith.constant 0 : index
    %3 = vector.load %arg3[%c0_3, %c0_4] : memref<1x64xf32, #tpu.memory_space<vmem>>, vector<1x64xf32>
    %4 = vector.broadcast %3 : vector<1x64xf32> to vector<32x64xf32>
    %5 = arith.addf %2, %4 : vector<32x64xf32>
    %cst_5 = arith.constant 0.000000e+00 : f32
    %6 = vector.broadcast %cst_5 : f32 to vector<32x64xf32>
    %7 = arith.cmpf oge, %5, %6 : vector<32x64xf32>
    %cst_6 = arith.constant 2.000000e-01 : f32
    %8 = vector.broadcast %cst_6 : f32 to vector<32x64xf32>
    %9 = arith.mulf %8, %5 : vector<32x64xf32>
    %10 = arith.select %7, %5, %9 : vector<32x64xi1>, vector<32x64xf32>
    %c0_7 = arith.constant 0 : index
    %c0_8 = arith.constant 0 : index
    %11 = vector.load %arg4[%c0_7, %c0_8] : memref<1x64xf32, #tpu.memory_space<vmem>>, vector<1x64xf32>
    %12 = vector.broadcast %11 : vector<1x64xf32> to vector<32x64xf32>
    %13 = arith.addf %10, %12 : vector<32x64xf32>
    %14 = arith.truncf %13 : vector<32x64xf32> to vector<32x64xbf16>
    %c0_9 = arith.constant 0 : index
    %c0_10 = arith.constant 0 : index
    %15 = vector.load %arg5[%c0_9, %c0_10] : memref<32x64xbf16, #tpu.memory_space<vmem>>, vector<32x64xbf16>
    tpu.vector_store %arg5[%c0_9, %c0_10], %14 {strides = array<i32>} : memref<32x64xbf16, #tpu.memory_space<vmem>>, vector<32x64xbf16>,
    return
  }
  func.func @transform_0(%arg0: i32) -> (i32, i32) {
    %c0_i32 = arith.constant 0 : i32
    %c0_i32_0 = arith.constant 0 : i32
    return %arg0, %c0_i32 : i32, i32
  }
  func.func @transform_1(%arg0: i32) -> (i32, i32) {
    %c0_i32 = arith.constant 0 : i32
    %c0_i32_0 = arith.constant 0 : i32
    %c0_i32_1 = arith.constant 0 : i32
    return %c0_i32, %c0_i32_0 : i32, i32
  }
  func.func @transform_2(%arg0: i32) -> (i32, i32) {
    %c0_i32 = arith.constant 0 : i32
    %c0_i32_0 = arith.constant 0 : i32
    %c0_i32_1 = arith.constant 0 : i32
    return %c0_i32, %c0_i32_0 : i32, i32
  }
  func.func @transform_3(%arg0: i32) -> (i32, i32) {
    %c0_i32 = arith.constant 0 : i32
    %c0_i32_0 = arith.constant 0 : i32
    %c0_i32_1 = arith.constant 0 : i32
    return %c0_i32, %c0_i32_0 : i32, i32
  }
  func.func @transform_4(%arg0: i32) -> (i32, i32) {
    %c0_i32 = arith.constant 0 : i32
    %c0_i32_0 = arith.constant 0 : i32
    return %arg0, %c0_i32 : i32, i32
  }
}

module attributes {stable_mosaic.version = 11 : i64} {
  func.func @_fused_matmul_kernel(%arg0: i32, %arg1: memref<16x576xbf16, #tpu.memory_space<vmem>>, %arg2: memref<576x128xbf16, #tpu.memory_space<vmem>>, %arg3: memref<1x128xf32, #tpu.memory_space<vmem>>, %arg4: memref<1x128xf32, #tpu.memory_space<vmem>>, %arg5: memref<16x128xbf16, #tpu.memory_space<vmem>>) attributes {dimension_semantics = [#tpu.dimension_semantics<parallel>], iteration_bounds = array<i64: 1>, scalar_prefetch = 0 : i64, scratch_operands = 0 : i64, tpu.core_type = #tpu.core_type<tc>, window_params = [{transform_indices = @transform_0, window_bounds = array<i64: 16, 576>}, {pipeline_mode = #tpu.pipeline_mode<synchronous>, transform_indices = @transform_1, window_bounds = array<i64: 576, 128>}, {pipeline_mode = #tpu.pipeline_mode<synchronous>, transform_indices = @transform_2, window_bounds = array<i64: 1, 128>}, {pipeline_mode = #tpu.pipeline_mode<synchronous>, transform_indices = @transform_3, window_bounds = array<i64: 1, 128>}, {transform_indices = @transform_4, window_bounds = array<i64: 16, 128>}]} {
    %c0 = arith.constant 0 : index
    %c0_0 = arith.constant 0 : index
    %0 = vector.load %arg1[%c0, %c0_0] : memref<16x576xbf16, #tpu.memory_space<vmem>>, vector<16x576xbf16>
    %c0_1 = arith.constant 0 : index
    %c0_2 = arith.constant 0 : index
    %1 = vector.load %arg2[%c0_1, %c0_2] : memref<576x128xbf16, #tpu.memory_space<vmem>>, vector<576x128xbf16>
    %cst = arith.constant dense<0.000000e+00> : vector<16x128xf32>
    %2 = tpu.matmul %0, %1, %cst {dimension_numbers = #tpu.dot_dimension_numbers<[1], [0], [0], [1], [0, 0, 1, 1], [], []>} : vector<16x576xbf16>, vector<576x128xbf16>, vector<16x128xf32> -> vector<16x128xf32>
    %c0_3 = arith.constant 0 : index
    %c0_4 = arith.constant 0 : index
    %3 = vector.load %arg3[%c0_3, %c0_4] : memref<1x128xf32, #tpu.memory_space<vmem>>, vector<1x128xf32>
    %4 = vector.broadcast %3 : vector<1x128xf32> to vector<16x128xf32>
    %5 = arith.addf %2, %4 : vector<16x128xf32>
    %cst_5 = arith.constant 0.000000e+00 : f32
    %6 = vector.broadcast %cst_5 : f32 to vector<16x128xf32>
    %7 = arith.cmpf oge, %5, %6 : vector<16x128xf32>
    %cst_6 = arith.constant 2.000000e-01 : f32
    %8 = vector.broadcast %cst_6 : f32 to vector<16x128xf32>
    %9 = arith.mulf %8, %5 : vector<16x128xf32>
    %10 = arith.select %7, %5, %9 : vector<16x128xi1>, vector<16x128xf32>
    %c0_7 = arith.constant 0 : index
    %c0_8 = arith.constant 0 : index
    %11 = vector.load %arg4[%c0_7, %c0_8] : memref<1x128xf32, #tpu.memory_space<vmem>>, vector<1x128xf32>
    %12 = vector.broadcast %11 : vector<1x128xf32> to vector<16x128xf32>
    %13 = arith.addf %10, %12 : vector<16x128xf32>
    %14 = arith.truncf %13 : vector<16x128xf32> to vector<16x128xbf16>
    %c0_9 = arith.constant 0 : index
    %c0_10 = arith.constant 0 : index
    %15 = vector.load %arg5[%c0_9, %c0_10] : memref<16x128xbf16, #tpu.memory_space<vmem>>, vector<16x128xbf16>
    tpu.vector_store %arg5[%c0_9, %c0_10], %14 {strides = array<i32>} : memref<16x128xbf16, #tpu.memory_space<vmem>>, vector<16x128xbf16>,
    return
  }
  func.func @transform_0(%arg0: i32) -> (i32, i32) {
    %c0_i32 = arith.constant 0 : i32
    %c0_i32_0 = arith.constant 0 : i32
    return %arg0, %c0_i32 : i32, i32
  }
  func.func @transform_1(%arg0: i32) -> (i32, i32) {
    %c0_i32 = arith.constant 0 : i32
    %c0_i32_0 = arith.constant 0 : i32
    %c0_i32_1 = arith.constant 0 : i32
    return %c0_i32, %c0_i32_0 : i32, i32
  }
  func.func @transform_2(%arg0: i32) -> (i32, i32) {
    %c0_i32 = arith.constant 0 : i32
    %c0_i32_0 = arith.constant 0 : i32
    %c0_i32_1 = arith.constant 0 : i32
    return %c0_i32, %c0_i32_0 : i32, i32
  }
  func.func @transform_3(%arg0: i32) -> (i32, i32) {
    %c0_i32 = arith.constant 0 : i32
    %c0_i32_0 = arith.constant 0 : i32
    %c0_i32_1 = arith.constant 0 : i32
    return %c0_i32, %c0_i32_0 : i32, i32
  }
  func.func @transform_4(%arg0: i32) -> (i32, i32) {
    %c0_i32 = arith.constant 0 : i32
    %c0_i32_0 = arith.constant 0 : i32
    return %arg0, %c0_i32 : i32, i32
  }
}

module attributes {stable_mosaic.version = 11 : i64} {
  func.func @_fused_matmul_kernel(%arg0: i32, %arg1: memref<16x512xbf16, #tpu.memory_space<vmem>>, %arg2: memref<512x300xbf16, #tpu.memory_space<vmem>>, %arg3: memref<1x300xf32, #tpu.memory_space<vmem>>, %arg4: memref<1x300xf32, #tpu.memory_space<vmem>>, %arg5: memref<16x300xf32, #tpu.memory_space<vmem>>) attributes {dimension_semantics = [#tpu.dimension_semantics<parallel>], iteration_bounds = array<i64: 1>, scalar_prefetch = 0 : i64, scratch_operands = 0 : i64, tpu.core_type = #tpu.core_type<tc>, window_params = [{transform_indices = @transform_0, window_bounds = array<i64: 16, 512>}, {pipeline_mode = #tpu.pipeline_mode<synchronous>, transform_indices = @transform_1, window_bounds = array<i64: 512, 300>}, {pipeline_mode = #tpu.pipeline_mode<synchronous>, transform_indices = @transform_2, window_bounds = array<i64: 1, 300>}, {pipeline_mode = #tpu.pipeline_mode<synchronous>, transform_indices = @transform_3, window_bounds = array<i64: 1, 300>}, {transform_indices = @transform_4, window_bounds = array<i64: 16, 300>}]} {
    %c0 = arith.constant 0 : index
    %c0_0 = arith.constant 0 : index
    %0 = vector.load %arg1[%c0, %c0_0] : memref<16x512xbf16, #tpu.memory_space<vmem>>, vector<16x512xbf16>
    %c0_1 = arith.constant 0 : index
    %c0_2 = arith.constant 0 : index
    %1 = vector.load %arg2[%c0_1, %c0_2] : memref<512x300xbf16, #tpu.memory_space<vmem>>, vector<512x300xbf16>
    %cst = arith.constant dense<0.000000e+00> : vector<16x300xf32>
    %2 = tpu.matmul %0, %1, %cst {dimension_numbers = #tpu.dot_dimension_numbers<[1], [0], [0], [1], [0, 0, 1, 1], [], []>} : vector<16x512xbf16>, vector<512x300xbf16>, vector<16x300xf32> -> vector<16x300xf32>
    %c0_3 = arith.constant 0 : index
    %c0_4 = arith.constant 0 : index
    %3 = vector.load %arg3[%c0_3, %c0_4] : memref<1x300xf32, #tpu.memory_space<vmem>>, vector<1x300xf32>
    %4 = vector.broadcast %3 : vector<1x300xf32> to vector<16x300xf32>
    %5 = arith.addf %2, %4 : vector<16x300xf32>
    %c0_5 = arith.constant 0 : index
    %c0_6 = arith.constant 0 : index
    %6 = vector.load %arg4[%c0_5, %c0_6] : memref<1x300xf32, #tpu.memory_space<vmem>>, vector<1x300xf32>
    %7 = vector.broadcast %6 : vector<1x300xf32> to vector<16x300xf32>
    %8 = arith.addf %5, %7 : vector<16x300xf32>
    %c0_7 = arith.constant 0 : index
    %c0_8 = arith.constant 0 : index
    %9 = vector.load %arg5[%c0_7, %c0_8] : memref<16x300xf32, #tpu.memory_space<vmem>>, vector<16x300xf32>
    tpu.vector_store %arg5[%c0_7, %c0_8], %8 {strides = array<i32>} : memref<16x300xf32, #tpu.memory_space<vmem>>, vector<16x300xf32>,
    return
  }
  func.func @transform_0(%arg0: i32) -> (i32, i32) {
    %c0_i32 = arith.constant 0 : i32
    %c0_i32_0 = arith.constant 0 : i32
    return %arg0, %c0_i32 : i32, i32
  }
  func.func @transform_1(%arg0: i32) -> (i32, i32) {
    %c0_i32 = arith.constant 0 : i32
    %c0_i32_0 = arith.constant 0 : i32
    %c0_i32_1 = arith.constant 0 : i32
    return %c0_i32, %c0_i32_0 : i32, i32
  }
  func.func @transform_2(%arg0: i32) -> (i32, i32) {
    %c0_i32 = arith.constant 0 : i32
    %c0_i32_0 = arith.constant 0 : i32
    %c0_i32_1 = arith.constant 0 : i32
    return %c0_i32, %c0_i32_0 : i32, i32
  }
  func.func @transform_3(%arg0: i32) -> (i32, i32) {
    %c0_i32 = arith.constant 0 : i32
    %c0_i32_0 = arith.constant 0 : i32
    %c0_i32_1 = arith.constant 0 : i32
    return %c0_i32, %c0_i32_0 : i32, i32
  }
  func.func @transform_4(%arg0: i32) -> (i32, i32) {
    %c0_i32 = arith.constant 0 : i32
    %c0_i32_0 = arith.constant 0 : i32
    return %arg0, %c0_i32 : i32, i32
  }
}

</mosaic_0001>

<llo_original>
// kernel: convnet_cifar10_forward.5
$region0: #{convnet_cifar10_forward.5}
  #allocation0 [shape = 'u32[]', space=smem, size = 0x4, offset = 0x4, fixed_abs, tag = 'smem constant byte address 0x4 - core index']
  #allocation1 [shape = 'u32[144,128]{1,0:T(1,128)}', space=vmem, size = 0x12000, scoped, tag = 'internal scratch']
  %s0 = inlined_call_operand.vmem [shape: bf16[512,27], index: 0, kind: input, shape index: {}]
  %s1 = inlined_call_operand.vmem [shape: bf16[27,16], index: 1, kind: input, shape index: {}]
  %s2 = inlined_call_operand.vmem [shape: f32[1,16], index: 2, kind: input, shape index: {}]
  %s3 = inlined_call_operand.vmem [shape: f32[1,16], index: 3, kind: input, shape index: {}]
  %s4 = inlined_call_operand.vmem [shape: bf16[512,16], index: 4, kind: output, shape index: {}]
  %s5 = sld [smem:[#allocation0]]
  $region26: #{convnet_cifar10_forward.5} parent=0
    _
  %s7 = ssub.s32 1, %s5
  %s8 = scalar_select 0, %s7, %s5
  // Predicated region
  $region2: #{convnet_cifar10_forward.5} parent=0 // pred_check
    _
  $region3: #{convnet_cifar10_forward.5} parent=0 // pred_check_branch
    %10 = sbr.rel (0) target = $region5
  $region4: #{convnet_cifar10_forward.5} parent=0 // pred_region
    _
  $region5: #{convnet_cifar10_forward.5} parent=0 // pred_fallthru
    _
  // Predicated region
  $region6: #{convnet_cifar10_forward.5} parent=0 // pred_check
    _
  $region7: #{convnet_cifar10_forward.5} parent=0 // pred_check_branch
    %12 = sbr.rel (0) target = $region9
  $region8: #{convnet_cifar10_forward.5} parent=0 // pred_region
    _
  $region9: #{convnet_cifar10_forward.5} parent=0 // pred_fallthru
    _
  // Predicated region
  $region10: #{convnet_cifar10_forward.5} parent=0 // pred_check
    _
  $region11: #{convnet_cifar10_forward.5} parent=0 // pred_check_branch
    %14 = sbr.rel (0) target = $region13
  $region12: #{convnet_cifar10_forward.5} parent=0 // pred_region
    _
  $region13: #{convnet_cifar10_forward.5} parent=0 // pred_fallthru
    _
  // Predicated region
  $region14: #{convnet_cifar10_forward.5} parent=0 // pred_check
    _
  $region15: #{convnet_cifar10_forward.5} parent=0 // pred_check_branch
    %16 = sbr.rel (0) target = $region17
  $region16: #{convnet_cifar10_forward.5} parent=0 // pred_region
    _
  $region17: #{convnet_cifar10_forward.5} parent=0 // pred_fallthru
    _
  %v18 = vld [vmem:[%s0] sm:$0xf]
  %v19 = vld [vmem:[%s0 + $0x4] sm:$0xf]
  %v20 = vld [vmem:[%s0 + $0x8] sm:$0xf]
  %v21 = vld [vmem:[%s0 + $0xc] sm:$0xf]
  %v22 = vld [vmem:[%s0 + $0x10] sm:$0xf]
  %v23 = vld [vmem:[%s0 + $0x14] sm:$0xf]
  %v24 = vld [vmem:[%s0 + $0x18] sm:$0xf]
  %v25 = vld [vmem:[%s0 + $0x1c] sm:$0xf]
  %v26 = vld [vmem:[%s0 + $0x20] sm:$0xf]
  %v27 = vld [vmem:[%s0 + $0x24] sm:$0xf]
  %v28 = vld [vmem:[%s0 + $0x28] sm:$0xf]
  %v29 = vld [vmem:[%s0 + $0x2c] sm:$0xf]
  %v30 = vld [vmem:[%s0 + $0x30] sm:$0xf]
  %v31 = vld [vmem:[%s0 + $0x34] sm:$0xf]
  %v32 = vld [vmem:[%s0 + $0x38] sm:$0xf]
  %v33 = vld [vmem:[%s0 + $0x3c] sm:$0xf]
  %v34 = vld [vmem:[%s0 + $0x40] sm:$0xf]
  %v35 = vld [vmem:[%s0 + $0x44] sm:$0xf]
  %v36 = vld [vmem:[%s0 + $0x48] sm:$0xf]
  %v37 = vld [vmem:[%s0 + $0x4c] sm:$0xf]
  %v38 = vld [vmem:[%s0 + $0x50] sm:$0xf]
  %v39 = vld [vmem:[%s0 + $0x54] sm:$0xf]
  %v40 = vld [vmem:[%s0 + $0x58] sm:$0xf]
  %v41 = vld [vmem:[%s0 + $0x5c] sm:$0xf]
  %v42 = vld [vmem:[%s0 + $0x60] sm:$0xf]
  %v43 = vld [vmem:[%s0 + $0x64] sm:$0xf]
  %v44 = vld [vmem:[%s0 + $0x68] sm:$0xf]
  %v45 = vld [vmem:[%s0 + $0x6c] sm:$0xf]
  %v46 = vld [vmem:[%s0 + $0x70] sm:$0xf]
  %v47 = vld [vmem:[%s0 + $0x74] sm:$0xf]
  %v48 = vld [vmem:[%s0 + $0x78] sm:$0xf]
  %v49 = vld [vmem:[%s0 + $0x7c] sm:$0xf]
  %v50 = vld [vmem:[%s0 + $0x80] sm:$0xf]
  %v51 = vld [vmem:[%s0 + $0x84] sm:$0xf]
  %v52 = vld [vmem:[%s0 + $0x88] sm:$0xf]
  %v53 = vld [vmem:[%s0 + $0x8c] sm:$0xf]
  %v54 = vld [vmem:[%s0 + $0x90] sm:$0xf]
  %v55 = vld [vmem:[%s0 + $0x94] sm:$0xf]
  %v56 = vld [vmem:[%s0 + $0x98] sm:$0xf]
  %v57 = vld [vmem:[%s0 + $0x9c] sm:$0xf]
  %v58 = vld [vmem:[%s0 + $0xa0] sm:$0xf]
  %v59 = vld [vmem:[%s0 + $0xa4] sm:$0xf]
  %v60 = vld [vmem:[%s0 + $0xa8] sm:$0xf]
  %v61 = vld [vmem:[%s0 + $0xac] sm:$0xf]
  %v62 = vld [vmem:[%s0 + $0xb0] sm:$0xf]
  %v63 = vld [vmem:[%s0 + $0xb4] sm:$0xf]
  %v64 = vld [vmem:[%s0 + $0xb8] sm:$0xf]
  %v65 = vld [vmem:[%s0 + $0xbc] sm:$0xf]
  %v66 = vld [vmem:[%s0 + $0xc0] sm:$0xf]
  %v67 = vld [vmem:[%s0 + $0xc4] sm:$0xf]
  %v68 = vld [vmem:[%s0 + $0xc8] sm:$0xf]
  %v69 = vld [vmem:[%s0 + $0xcc] sm:$0xf]
  %v70 = vld [vmem:[%s0 + $0xd0] sm:$0xf]
  %v71 = vld [vmem:[%s0 + $0xd4] sm:$0xf]
  %v72 = vld [vmem:[%s0 + $0xd8] sm:$0xf]
  %v73 = vld [vmem:[%s0 + $0xdc] sm:$0xf]
  %v74 = vld [vmem:[%s0 + $0xe0] sm:$0xf]
  %v75 = vld [vmem:[%s0 + $0xe4] sm:$0xf]
  %v76 = vld [vmem:[%s0 + $0xe8] sm:$0xf]
  %v77 = vld [vmem:[%s0 + $0xec] sm:$0xf]
  %v78 = vld [vmem:[%s0 + $0xf0] sm:$0xf]
  %v79 = vld [vmem:[%s0 + $0xf4] sm:$0xf]
  %v80 = vld [vmem:[%s0 + $0xf8] sm:$0xf]
  %v81 = vld [vmem:[%s0 + $0xfc] sm:$0xf]
  %v82 = vld [vmem:[%s1] sm:$0xf]
  %v83 = vld [vmem:[%s1 + $0x4] sm:$0xf]
  %v84 = vld [vmem:[%s1 + $0x8] sm:$0xf]
  %v85 = vld [vmem:[%s1 + $0xc] sm:$0x3]
  %v86 = vld [vmem:[%s2] sm:$0x1]
  %v88 = vlaneseq
  %v89 = vshrl.u32 %v88, 7
  %v90 = vsub.s32 0, %v89
  %v91 = vrot.slane %v86, %v90
  %v157 = vunpack.c.l.b16 %v18
  %v158 = vunpack.c.l.b16 %v19
  %v159 = vunpack.c.l.b16 %v20
  %v160 = vunpack.c.l.b16 %v21
  %v161 = vunpack.c.l.b16 %v22
  %v162 = vunpack.c.l.b16 %v23
  %v163 = vunpack.c.l.b16 %v24
  %v164 = vunpack.c.l.b16 %v25
  %v165 = vunpack.c.l.b16 %v26
  %v166 = vunpack.c.l.b16 %v27
  %v167 = vunpack.c.l.b16 %v28
  %v168 = vunpack.c.l.b16 %v29
  %v169 = vunpack.c.l.b16 %v30
  %v170 = vunpack.c.l.b16 %v31
  %v171 = vunpack.c.l.b16 %v32
  %v172 = vunpack.c.l.b16 %v33
  %v173 = vunpack.c.l.b16 %v34
  %v174 = vunpack.c.l.b16 %v35
  %v175 = vunpack.c.l.b16 %v36
  %v176 = vunpack.c.l.b16 %v37
  %v177 = vunpack.c.l.b16 %v38
  %v178 = vunpack.c.l.b16 %v39
  %v179 = vunpack.c.l.b16 %v40
  %v180 = vunpack.c.l.b16 %v41
  %v181 = vunpack.c.l.b16 %v42
  %v182 = vunpack.c.l.b16 %v43
  %v183 = vunpack.c.l.b16 %v44
  %v184 = vunpack.c.l.b16 %v45
  %v185 = vunpack.c.l.b16 %v46
  %v186 = vunpack.c.l.b16 %v47
  %v187 = vunpack.c.l.b16 %v48
  %v188 = vunpack.c.l.b16 %v49
  %v189 = vunpack.c.l.b16 %v50
  %v190 = vunpack.c.l.b16 %v51
  %v191 = vunpack.c.l.b16 %v52
  %v192 = vunpack.c.l.b16 %v53
  %v193 = vunpack.c.l.b16 %v54
  %v194 = vunpack.c.l.b16 %v55
  %v195 = vunpack.c.l.b16 %v56
  %v196 = vunpack.c.l.b16 %v57
  %v197 = vunpack.c.l.b16 %v58
  %v198 = vunpack.c.l.b16 %v59
  %v199 = vunpack.c.l.b16 %v60
  %v200 = vunpack.c.l.b16 %v61
  %v201 = vunpack.c.l.b16 %v62
  %v202 = vunpack.c.l.b16 %v63
  %v203 = vunpack.c.l.b16 %v64
  %v204 = vunpack.c.l.b16 %v65
  %v205 = vunpack.c.l.b16 %v66
  %v206 = vunpack.c.l.b16 %v67
  %v207 = vunpack.c.l.b16 %v68
  %v208 = vunpack.c.l.b16 %v69
  %v209 = vunpack.c.l.b16 %v70
  %v210 = vunpack.c.l.b16 %v71
  %v211 = vunpack.c.l.b16 %v72
  %v212 = vunpack.c.l.b16 %v73
  %v213 = vunpack.c.l.b16 %v74
  %v214 = vunpack.c.l.b16 %v75
  %v215 = vunpack.c.l.b16 %v76
  %v216 = vunpack.c.l.b16 %v77
  %v217 = vunpack.c.l.b16 %v78
  %v218 = vunpack.c.l.b16 %v79
  %v219 = vunpack.c.l.b16 %v80
  %v220 = vunpack.c.l.b16 %v81
  %v221 = vpack.c.b16 %v158, %v157
  %v222 = vpack.c.b16 %v160, %v159
  %v223 = vpack.c.b16 %v162, %v161
  %v224 = vpack.c.b16 %v164, %v163
  %v225 = vpack.c.b16 %v166, %v165
  %v226 = vpack.c.b16 %v168, %v167
  %v227 = vpack.c.b16 %v170, %v169
  %v228 = vpack.c.b16 %v172, %v171
  %v229 = vpack.c.b16 %v174, %v173
  %v230 = vpack.c.b16 %v176, %v175
  %v231 = vpack.c.b16 %v178, %v177
  %v232 = vpack.c.b16 %v180, %v179
  %v233 = vpack.c.b16 %v182, %v181
  %v234 = vpack.c.b16 %v184, %v183
  %v235 = vpack.c.b16 %v186, %v185
  %v236 = vpack.c.b16 %v188, %v187
  %v237 = vpack.c.b16 %v190, %v189
  %v238 = vpack.c.b16 %v192, %v191
  %v239 = vpack.c.b16 %v194, %v193
  %v240 = vpack.c.b16 %v196, %v195
  %v241 = vpack.c.b16 %v198, %v197
  %v242 = vpack.c.b16 %v200, %v199
  %v243 = vpack.c.b16 %v202, %v201
  %v244 = vpack.c.b16 %v204, %v203
  %v245 = vpack.c.b16 %v206, %v205
  %v246 = vpack.c.b16 %v208, %v207
  %v247 = vpack.c.b16 %v210, %v209
  %v248 = vpack.c.b16 %v212, %v211
  %v249 = vpack.c.b16 %v214, %v213
  %v250 = vpack.c.b16 %v216, %v215
  %v251 = vpack.c.b16 %v218, %v217
  %v252 = vpack.c.b16 %v220, %v219
  %v257 = vunpack.c.l.b16 %v82
  %v258 = vunpack.c.l.b16 %v83
  %v259 = vunpack.c.l.b16 %v84
  %v260 = vunpack.c.l.b16 %v85
  %v261 = vpack.c.b16 %v258, %v257
  %v262 = vpack.c.b16 %v260, %v259
  %vm264 = vcmask 220160
  %v266 = vsel %vm264, %v221, 0
  %v269 = vsel %vm264, %v222, 0
  %v272 = vsel %vm264, %v223, 0
  %v275 = vsel %vm264, %v224, 0
  %v278 = vsel %vm264, %v225, 0
  %v281 = vsel %vm264, %v226, 0
  %v284 = vsel %vm264, %v227, 0
  %v287 = vsel %vm264, %v228, 0
  %v290 = vsel %vm264, %v229, 0
  %v293 = vsel %vm264, %v230, 0
  %v296 = vsel %vm264, %v231, 0
  %v299 = vsel %vm264, %v232, 0
  %v302 = vsel %vm264, %v233, 0
  %v305 = vsel %vm264, %v234, 0
  %v308 = vsel %vm264, %v235, 0
  %v311 = vsel %vm264, %v236, 0
  %v314 = vsel %vm264, %v237, 0
  %v317 = vsel %vm264, %v238, 0
  %v320 = vsel %vm264, %v239, 0
  %v323 = vsel %vm264, %v240, 0
  %v326 = vsel %vm264, %v241, 0
  %v329 = vsel %vm264, %v242, 0
  %v332 = vsel %vm264, %v243, 0
  %v335 = vsel %vm264, %v244, 0
  %v338 = vsel %vm264, %v245, 0
  %v341 = vsel %vm264, %v246, 0
  %v344 = vsel %vm264, %v247, 0
  %v347 = vsel %vm264, %v248, 0
  %v350 = vsel %vm264, %v249, 0
  %v353 = vsel %vm264, %v250, 0
  %v356 = vsel %vm264, %v251, 0
  %v359 = vsel %vm264, %v252, 0
  %vm361 = vcmask 1044480
  %vm362 = vcmask 1045504
  %v363 = vsel %vm361, 4294967295, 65535
  %v364 = vsel %vm362, %v363, 0
  %v366 = vand.u32 %v262, %v364
  %368 = vmatprep.subr.bf16.mxu0 0
  %369 = vmatpush1.bf16.msra.mxu0 %v261
  %370 = vmatprep.subr.bf16.mxu0 0
  %371 = vmatpush1.bf16.msra.mxu0 %v366
  %372 = vmatprep.subr.bf16.mxu0 0
  %373 = vmatpush1.bf16.msra.mxu0 0
  %374 = vmatprep.subr.bf16.mxu0 0
  %375 = vmatpush1.bf16.msra.mxu0 0
  %376 = vmatprep.subr.bf16.mxu0 0
  %377 = vmatpush1.bf16.msra.mxu0 0
  %378 = vmatprep.subr.bf16.mxu0 0
  %379 = vmatpush1.bf16.msra.mxu0 0
  %380 = vmatprep.subr.bf16.mxu0 0
  %381 = vmatpush1.bf16.msra.mxu0 0
  %382 = vmatprep.subr.bf16.mxu0 0
  %383 = vmatpush1.bf16.msra.mxu0 0
  %384 = vmatprep.subr.bf16.mxu0 0
  %385 = vmatpush1.bf16.msra.mxu0 0
  %386 = vmatprep.subr.bf16.mxu0 0
  %387 = vmatpush1.bf16.msra.mxu0 0
  %388 = vmatprep.subr.bf16.mxu0 0
  %389 = vmatpush1.bf16.msra.mxu0 0
  %390 = vmatprep.subr.bf16.mxu0 0
  %391 = vmatpush1.bf16.msra.mxu0 0
  %392 = vmatprep.subr.bf16.mxu0 0
  %393 = vmatpush1.bf16.msra.mxu0 0
  %394 = vmatprep.subr.bf16.mxu0 0
  %395 = vmatpush1.bf16.msra.mxu0 0
  %396 = vmatprep.subr.bf16.mxu0 0
  %397 = vmatpush1.bf16.msra.mxu0 0
  %398 = vmatprep.subr.bf16.mxu0 0
  %399 = vmatpush1.bf16.msra.mxu0 0
  %400 = vmatprep.mubr.bf16.mxu0 0
  %401 = vmatmul.mubr.bf16.gmra.mrb[0].mxu0 %v266
  %v402 = vpop.f32.mrb[0].mxu0
  %v403 = vadd.f32 %v91, %v402
  %v404 = vpop.f32.mrb[0].mxu0
  %v405 = vpop.f32.mrb[0].mxu0
  %v406 = vadd.f32 %v91, %v405
  %v407 = vpop.f32.mrb[0].mxu0
  %408 = vmatprep.mubr.bf16.mxu0 0
  %409 = vmatmul.mubr.bf16.gmra.mrb[0].mxu0 %v269
  %v410 = vpop.f32.mrb[0].mxu0
  %v411 = vadd.f32 %v91, %v410
  %v412 = vpop.f32.mrb[0].mxu0
  %v413 = vpop.f32.mrb[0].mxu0
  %v414 = vadd.f32 %v91, %v413
  %v415 = vpop.f32.mrb[0].mxu0
  %416 = vmatprep.mubr.bf16.mxu0 0
  %417 = vmatmul.mubr.bf16.gmra.mrb[0].mxu0 %v272
  %v418 = vpop.f32.mrb[0].mxu0
  %v419 = vadd.f32 %v91, %v418
  %v420 = vpop.f32.mrb[0].mxu0
  %v421 = vpop.f32.mrb[0].mxu0
  %v422 = vadd.f32 %v91, %v421
  %v423 = vpop.f32.mrb[0].mxu0
  %424 = vmatprep.mubr.bf16.mxu0 0
  %425 = vmatmul.mubr.bf16.gmra.mrb[0].mxu0 %v275
  %v426 = vpop.f32.mrb[0].mxu0
  %v427 = vadd.f32 %v91, %v426
  %v428 = vpop.f32.mrb[0].mxu0
  %v429 = vpop.f32.mrb[0].mxu0
  %v430 = vadd.f32 %v91, %v429
  %v431 = vpop.f32.mrb[0].mxu0
  %432 = vmatprep.mubr.bf16.mxu0 0
  %433 = vmatmul.mubr.bf16.gmra.mrb[0].mxu0 %v278
  %v434 = vpop.f32.mrb[0].mxu0
  %v435 = vadd.f32 %v91, %v434
  %v436 = vpop.f32.mrb[0].mxu0
  %v437 = vpop.f32.mrb[0].mxu0
  %v438 = vadd.f32 %v91, %v437
  %v439 = vpop.f32.mrb[0].mxu0
  %440 = vmatprep.mubr.bf16.mxu0 0
  %441 = vmatmul.mubr.bf16.gmra.mrb[0].mxu0 %v281
  %v442 = vpop.f32.mrb[0].mxu0
  %v443 = vadd.f32 %v91, %v442
  %v444 = vpop.f32.mrb[0].mxu0
  %v445 = vpop.f32.mrb[0].mxu0
  %v446 = vadd.f32 %v91, %v445
  %v447 = vpop.f32.mrb[0].mxu0
  %448 = vmatprep.mubr.bf16.mxu0 0
  %449 = vmatmul.mubr.bf16.gmra.mrb[0].mxu0 %v284
  %v450 = vpop.f32.mrb[0].mxu0
  %v451 = vadd.f32 %v91, %v450
  %v452 = vpop.f32.mrb[0].mxu0
  %v453 = vpop.f32.mrb[0].mxu0
  %v454 = vadd.f32 %v91, %v453
  %v455 = vpop.f32.mrb[0].mxu0
  %456 = vmatprep.mubr.bf16.mxu0 0
  %457 = vmatmul.mubr.bf16.gmra.mrb[0].mxu0 %v287
  %v458 = vpop.f32.mrb[0].mxu0
  %v459 = vadd.f32 %v91, %v458
  %v460 = vpop.f32.mrb[0].mxu0
  %v461 = vpop.f32.mrb[0].mxu0
  %v462 = vadd.f32 %v91, %v461
  %v463 = vpop.f32.mrb[0].mxu0
  %464 = vmatprep.mubr.bf16.mxu0 0
  %465 = vmatmul.mubr.bf16.gmra.mrb[0].mxu0 %v290
  %v466 = vpop.f32.mrb[0].mxu0
  %v467 = vadd.f32 %v91, %v466
  %v468 = vpop.f32.mrb[0].mxu0
  %v469 = vpop.f32.mrb[0].mxu0
  %v470 = vadd.f32 %v91, %v469
  %v471 = vpop.f32.mrb[0].mxu0
  %472 = vmatprep.mubr.bf16.mxu0 0
  %473 = vmatmul.mubr.bf16.gmra.mrb[0].mxu0 %v293
  %v474 = vpop.f32.mrb[0].mxu0
  %v475 = vadd.f32 %v91, %v474
  %v476 = vpop.f32.mrb[0].mxu0
  %v477 = vpop.f32.mrb[0].mxu0
  %v478 = vadd.f32 %v91, %v477
  %v479 = vpop.f32.mrb[0].mxu0
  %480 = vmatprep.mubr.bf16.mxu0 0
  %481 = vmatmul.mubr.bf16.gmra.mrb[0].mxu0 %v296
  %v482 = vpop.f32.mrb[0].mxu0
  %v483 = vadd.f32 %v91, %v482
  %v484 = vpop.f32.mrb[0].mxu0
  %v485 = vpop.f32.mrb[0].mxu0
  %v486 = vadd.f32 %v91, %v485
  %v487 = vpop.f32.mrb[0].mxu0
  %488 = vmatprep.mubr.bf16.mxu0 0
  %489 = vmatmul.mubr.bf16.gmra.mrb[0].mxu0 %v299
  %v490 = vpop.f32.mrb[0].mxu0
  %v491 = vadd.f32 %v91, %v490
  %v492 = vpop.f32.mrb[0].mxu0
  %v493 = vpop.f32.mrb[0].mxu0
  %v494 = vadd.f32 %v91, %v493
  %v495 = vpop.f32.mrb[0].mxu0
  %496 = vmatprep.mubr.bf16.mxu0 0
  %497 = vmatmul.mubr.bf16.gmra.mrb[0].mxu0 %v302
  %v498 = vpop.f32.mrb[0].mxu0
  %v499 = vadd.f32 %v91, %v498
  %v500 = vpop.f32.mrb[0].mxu0
  %v501 = vpop.f32.mrb[0].mxu0
  %v502 = vadd.f32 %v91, %v501
  %v503 = vpop.f32.mrb[0].mxu0
  %504 = vmatprep.mubr.bf16.mxu0 0
  %505 = vmatmul.mubr.bf16.gmra.mrb[0].mxu0 %v305
  %v506 = vpop.f32.mrb[0].mxu0
  %v507 = vadd.f32 %v91, %v506
  %v508 = vpop.f32.mrb[0].mxu0
  %v509 = vpop.f32.mrb[0].mxu0
  %v510 = vadd.f32 %v91, %v509
  %v511 = vpop.f32.mrb[0].mxu0
  %512 = vmatprep.mubr.bf16.mxu0 0
  %513 = vmatmul.mubr.bf16.gmra.mrb[0].mxu0 %v308
  %v514 = vpop.f32.mrb[0].mxu0
  %v515 = vadd.f32 %v91, %v514
  %v516 = vpop.f32.mrb[0].mxu0
  %v517 = vpop.f32.mrb[0].mxu0
  %v518 = vadd.f32 %v91, %v517
  %v519 = vpop.f32.mrb[0].mxu0
  %520 = vmatprep.mubr.bf16.mxu0 0
  %521 = vmatmul.mubr.bf16.gmra.mrb[0].mxu0 %v311
  %v522 = vpop.f32.mrb[0].mxu0
  %v523 = vadd.f32 %v91, %v522
  %v524 = vpop.f32.mrb[0].mxu0
  %v525 = vpop.f32.mrb[0].mxu0
  %v526 = vadd.f32 %v91, %v525
  %v527 = vpop.f32.mrb[0].mxu0
  %528 = vmatprep.mubr.bf16.mxu0 0
  %529 = vmatmul.mubr.bf16.gmra.mrb[0].mxu0 %v314
  %v530 = vpop.f32.mrb[0].mxu0
  %v531 = vadd.f32 %v91, %v530
  %v532 = vpop.f32.mrb[0].mxu0
  %v533 = vpop.f32.mrb[0].mxu0
  %v534 = vadd.f32 %v91, %v533
  %v535 = vpop.f32.mrb[0].mxu0
  %536 = vmatprep.mubr.bf16.mxu0 0
  %537 = vmatmul.mubr.bf16.gmra.mrb[0].mxu0 %v317
  %v538 = vpop.f32.mrb[0].mxu0
  %v539 = vadd.f32 %v91, %v538
  %v540 = vpop.f32.mrb[0].mxu0
  %v541 = vpop.f32.mrb[0].mxu0
  %v542 = vadd.f32 %v91, %v541
  %v543 = vpop.f32.mrb[0].mxu0
  %544 = vmatprep.mubr.bf16.mxu0 0
  %545 = vmatmul.mubr.bf16.gmra.mrb[0].mxu0 %v320
  %v546 = vpop.f32.mrb[0].mxu0
  %v547 = vadd.f32 %v91, %v546
  %v548 = vpop.f32.mrb[0].mxu0
  %v549 = vpop.f32.mrb[0].mxu0
  %v550 = vadd.f32 %v91, %v549
  %v551 = vpop.f32.mrb[0].mxu0
  %552 = vmatprep.mubr.bf16.mxu0 0
  %553 = vmatmul.mubr.bf16.gmra.mrb[0].mxu0 %v323
  %v554 = vpop.f32.mrb[0].mxu0
  %v555 = vadd.f32 %v91, %v554
  %v556 = vpop.f32.mrb[0].mxu0
  %v557 = vpop.f32.mrb[0].mxu0
  %v558 = vadd.f32 %v91, %v557
  %v559 = vpop.f32.mrb[0].mxu0
  %560 = vmatprep.mubr.bf16.mxu0 0
  %561 = vmatmul.mubr.bf16.gmra.mrb[0].mxu0 %v326
  %v562 = vpop.f32.mrb[0].mxu0
  %v563 = vadd.f32 %v91, %v562
  %v564 = vpop.f32.mrb[0].mxu0
  %v565 = vpop.f32.mrb[0].mxu0
  %v566 = vadd.f32 %v91, %v565
  %v567 = vpop.f32.mrb[0].mxu0
  %568 = vmatprep.mubr.bf16.mxu0 0
  %569 = vmatmul.mubr.bf16.gmra.mrb[0].mxu0 %v329
  %v570 = vpop.f32.mrb[0].mxu0
  %v571 = vadd.f32 %v91, %v570
  %v572 = vpop.f32.mrb[0].mxu0
  %v573 = vpop.f32.mrb[0].mxu0
  %v574 = vadd.f32 %v91, %v573
  %v575 = vpop.f32.mrb[0].mxu0
  %576 = vmatprep.mubr.bf16.mxu0 0
  %577 = vmatmul.mubr.bf16.gmra.mrb[0].mxu0 %v332
  %v578 = vpop.f32.mrb[0].mxu0
  %v579 = vadd.f32 %v91, %v578
  %v580 = vpop.f32.mrb[0].mxu0
  %v581 = vpop.f32.mrb[0].mxu0
  %v582 = vadd.f32 %v91, %v581
  %v583 = vpop.f32.mrb[0].mxu0
  %584 = vmatprep.mubr.bf16.mxu0 0
  %585 = vmatmul.mubr.bf16.gmra.mrb[0].mxu0 %v335
  %v586 = vpop.f32.mrb[0].mxu0
  %v587 = vadd.f32 %v91, %v586
  %v588 = vpop.f32.mrb[0].mxu0
  %v589 = vpop.f32.mrb[0].mxu0
  %v590 = vadd.f32 %v91, %v589
  %v591 = vpop.f32.mrb[0].mxu0
  %592 = vmatprep.mubr.bf16.mxu0 0
  %593 = vmatmul.mubr.bf16.gmra.mrb[0].mxu0 %v338
  %v594 = vpop.f32.mrb[0].mxu0
  %v595 = vadd.f32 %v91, %v594
  %v596 = vpop.f32.mrb[0].mxu0
  %v597 = vpop.f32.mrb[0].mxu0
  %v598 = vadd.f32 %v91, %v597
  %v599 = vpop.f32.mrb[0].mxu0
  %600 = vmatprep.mubr.bf16.mxu0 0
  %601 = vmatmul.mubr.bf16.gmra.mrb[0].mxu0 %v341
  %v602 = vpop.f32.mrb[0].mxu0
  %v603 = vadd.f32 %v91, %v602
  %v604 = vpop.f32.mrb[0].mxu0
  %v605 = vpop.f32.mrb[0].mxu0
  %v606 = vadd.f32 %v91, %v605
  %v607 = vpop.f32.mrb[0].mxu0
  %608 = vmatprep.mubr.bf16.mxu0 0
  %609 = vmatmul.mubr.bf16.gmra.mrb[0].mxu0 %v344
  %v610 = vpop.f32.mrb[0].mxu0
  %v611 = vadd.f32 %v91, %v610
  %v612 = vpop.f32.mrb[0].mxu0
  %v613 = vpop.f32.mrb[0].mxu0
  %v614 = vadd.f32 %v91, %v613
  %v615 = vpop.f32.mrb[0].mxu0
  %616 = vmatprep.mubr.bf16.mxu0 0
  %617 = vmatmul.mubr.bf16.gmra.mrb[0].mxu0 %v347
  %v618 = vpop.f32.mrb[0].mxu0
  %v619 = vadd.f32 %v91, %v618
  %v620 = vpop.f32.mrb[0].mxu0
  %v621 = vpop.f32.mrb[0].mxu0
  %v622 = vadd.f32 %v91, %v621
  %v623 = vpop.f32.mrb[0].mxu0
  %624 = vmatprep.mubr.bf16.mxu0 0
  %625 = vmatmul.mubr.bf16.gmra.mrb[0].mxu0 %v350
  %v626 = vpop.f32.mrb[0].mxu0
  %v627 = vadd.f32 %v91, %v626
  %v628 = vpop.f32.mrb[0].mxu0
  %v629 = vpop.f32.mrb[0].mxu0
  %v630 = vadd.f32 %v91, %v629
  %v631 = vpop.f32.mrb[0].mxu0
  %632 = vmatprep.mubr.bf16.mxu0 0
  %633 = vmatmul.mubr.bf16.gmra.mrb[0].mxu0 %v353
  %v634 = vpop.f32.mrb[0].mxu0
  %v635 = vadd.f32 %v91, %v634
  %v636 = vpop.f32.mrb[0].mxu0
  %v637 = vpop.f32.mrb[0].mxu0
  %v638 = vadd.f32 %v91, %v637
  %v639 = vpop.f32.mrb[0].mxu0
  %640 = vmatprep.mubr.bf16.mxu0 0
  %641 = vmatmul.mubr.bf16.gmra.mrb[0].mxu0 %v356
  %v642 = vpop.f32.mrb[0].mxu0
  %v643 = vadd.f32 %v91, %v642
  %v644 = vpop.f32.mrb[0].mxu0
  %v645 = vpop.f32.mrb[0].mxu0
  %v646 = vadd.f32 %v91, %v645
  %v647 = vpop.f32.mrb[0].mxu0
  %648 = vmatprep.mubr.bf16.mxu0 0
  %649 = vmatmul.mubr.bf16.gmra.mrb[0].mxu0 %v359
  %v650 = vpop.f32.mrb[0].mxu0
  %v651 = vadd.f32 %v91, %v650
  %v652 = vpop.f32.mrb[0].mxu0
  %v653 = vpop.f32.mrb[0].mxu0
  %v654 = vadd.f32 %v91, %v653
  %v655 = vpop.f32.mrb[0].mxu0
  %656 = vdwg.mxu0
  %vm657 = vcmp.ge.f32.partialorder %v403, 0.0
  %vm658 = vcmp.ge.f32.partialorder %v406, 0.0
  %vm659 = vcmp.ge.f32.partialorder %v411, 0.0
  %vm660 = vcmp.ge.f32.partialorder %v414, 0.0
  %vm661 = vcmp.ge.f32.partialorder %v419, 0.0
  %vm662 = vcmp.ge.f32.partialorder %v422, 0.0
  %vm663 = vcmp.ge.f32.partialorder %v427, 0.0
  %vm664 = vcmp.ge.f32.partialorder %v430, 0.0
  %vm665 = vcmp.ge.f32.partialorder %v435, 0.0
  %vm666 = vcmp.ge.f32.partialorder %v438, 0.0
  %vm667 = vcmp.ge.f32.partialorder %v443, 0.0
  %vm668 = vcmp.ge.f32.partialorder %v446, 0.0
  %vm669 = vcmp.ge.f32.partialorder %v451, 0.0
  %vm670 = vcmp.ge.f32.partialorder %v454, 0.0
  %vm671 = vcmp.ge.f32.partialorder %v459, 0.0
  %vm672 = vcmp.ge.f32.partialorder %v462, 0.0
  %vm673 = vcmp.ge.f32.partialorder %v467, 0.0
  %vm674 = vcmp.ge.f32.partialorder %v470, 0.0
  %vm675 = vcmp.ge.f32.partialorder %v475, 0.0
  %vm676 = vcmp.ge.f32.partialorder %v478, 0.0
  %vm677 = vcmp.ge.f32.partialorder %v483, 0.0
  %vm678 = vcmp.ge.f32.partialorder %v486, 0.0
  %vm679 = vcmp.ge.f32.partialorder %v491, 0.0
  %vm680 = vcmp.ge.f32.partialorder %v494, 0.0
  %vm681 = vcmp.ge.f32.partialorder %v499, 0.0
  %vm682 = vcmp.ge.f32.partialorder %v502, 0.0
  %vm683 = vcmp.ge.f32.partialorder %v507, 0.0
  %vm684 = vcmp.ge.f32.partialorder %v510, 0.0
  %vm685 = vcmp.ge.f32.partialorder %v515, 0.0
  %vm686 = vcmp.ge.f32.partialorder %v518, 0.0
  %vm687 = vcmp.ge.f32.partialorder %v523, 0.0
  %vm688 = vcmp.ge.f32.partialorder %v526, 0.0
  %vm689 = vcmp.ge.f32.partialorder %v531, 0.0
  %vm690 = vcmp.ge.f32.partialorder %v534, 0.0
  %vm691 = vcmp.ge.f32.partialorder %v539, 0.0
  %vm692 = vcmp.ge.f32.partialorder %v542, 0.0
  %vm693 = vcmp.ge.f32.partialorder %v547, 0.0
  %vm694 = vcmp.ge.f32.partialorder %v550, 0.0
  %vm695 = vcmp.ge.f32.partialorder %v555, 0.0
  %vm696 = vcmp.ge.f32.partialorder %v558, 0.0
  %vm697 = vcmp.ge.f32.partialorder %v563, 0.0
  %vm698 = vcmp.ge.f32.partialorder %v566, 0.0
  %vm699 = vcmp.ge.f32.partialorder %v571, 0.0
  %vm700 = vcmp.ge.f32.partialorder %v574, 0.0
  %vm701 = vcmp.ge.f32.partialorder %v579, 0.0
  %vm702 = vcmp.ge.f32.partialorder %v582, 0.0
  %vm703 = vcmp.ge.f32.partialorder %v587, 0.0
  %vm704 = vcmp.ge.f32.partialorder %v590, 0.0
  %vm705 = vcmp.ge.f32.partialorder %v595, 0.0
  %vm706 = vcmp.ge.f32.partialorder %v598, 0.0
  %vm707 = vcmp.ge.f32.partialorder %v603, 0.0
  %vm708 = vcmp.ge.f32.partialorder %v606, 0.0
  %vm709 = vcmp.ge.f32.partialorder %v611, 0.0
  %vm710 = vcmp.ge.f32.partialorder %v614, 0.0
  %vm711 = vcmp.ge.f32.partialorder %v619, 0.0
  %vm712 = vcmp.ge.f32.partialorder %v622, 0.0
  %vm713 = vcmp.ge.f32.partialorder %v627, 0.0
  %vm714 = vcmp.ge.f32.partialorder %v630, 0.0
  %vm715 = vcmp.ge.f32.partialorder %v635, 0.0
  %vm716 = vcmp.ge.f32.partialorder %v638, 0.0
  %vm717 = vcmp.ge.f32.partialorder %v643, 0.0
  %vm718 = vcmp.ge.f32.partialorder %v646, 0.0
  %vm719 = vcmp.ge.f32.partialorder %v651, 0.0
  %vm720 = vcmp.ge.f32.partialorder %v654, 0.0
  %v721 = vmul.f32 %v403, 0.2
  %v722 = vmul.f32 %v406, 0.2
  %v723 = vmul.f32 %v411, 0.2
  %v724 = vmul.f32 %v414, 0.2
  %v725 = vmul.f32 %v419, 0.2
  %v726 = vmul.f32 %v422, 0.2
  %v727 = vmul.f32 %v427, 0.2
  %v728 = vmul.f32 %v430, 0.2
  %v729 = vmul.f32 %v435, 0.2
  %v730 = vmul.f32 %v438, 0.2
  %v731 = vmul.f32 %v443, 0.2
  %v732 = vmul.f32 %v446, 0.2
  %v733 = vmul.f32 %v451, 0.2
  %v734 = vmul.f32 %v454, 0.2
  %v735 = vmul.f32 %v459, 0.2
  %v736 = vmul.f32 %v462, 0.2
  %v737 = vmul.f32 %v467, 0.2
  %v738 = vmul.f32 %v470, 0.2
  %v739 = vmul.f32 %v475, 0.2
  %v740 = vmul.f32 %v478, 0.2
  %v741 = vmul.f32 %v483, 0.2
  %v742 = vmul.f32 %v486, 0.2
  %v743 = vmul.f32 %v491, 0.2
  %v744 = vmul.f32 %v494, 0.2
  %v745 = vmul.f32 %v499, 0.2
  %v746 = vmul.f32 %v502, 0.2
  %v747 = vmul.f32 %v507, 0.2
  %v748 = vmul.f32 %v510, 0.2
  %v749 = vmul.f32 %v515, 0.2
  %v750 = vmul.f32 %v518, 0.2
  %v751 = vmul.f32 %v523, 0.2
  %v752 = vmul.f32 %v526, 0.2
  %v753 = vmul.f32 %v531, 0.2
  %v754 = vmul.f32 %v534, 0.2
  %v755 = vmul.f32 %v539, 0.2
  %v756 = vmul.f32 %v542, 0.2
  %v757 = vmul.f32 %v547, 0.2
  %v758 = vmul.f32 %v550, 0.2
  %v759 = vmul.f32 %v555, 0.2
  %v760 = vmul.f32 %v558, 0.2
  %v761 = vmul.f32 %v563, 0.2
  %v762 = vmul.f32 %v566, 0.2
  %v763 = vmul.f32 %v571, 0.2
  %v764 = vmul.f32 %v574, 0.2
  %v765 = vmul.f32 %v579, 0.2
  %v766 = vmul.f32 %v582, 0.2
  %v767 = vmul.f32 %v587, 0.2
  %v768 = vmul.f32 %v590, 0.2
  %v769 = vmul.f32 %v595, 0.2
  %v770 = vmul.f32 %v598, 0.2
  %v771 = vmul.f32 %v603, 0.2
  %v772 = vmul.f32 %v606, 0.2
  %v773 = vmul.f32 %v611, 0.2
  %v774 = vmul.f32 %v614, 0.2
  %v775 = vmul.f32 %v619, 0.2
  %v776 = vmul.f32 %v622, 0.2
  %v777 = vmul.f32 %v627, 0.2
  %v778 = vmul.f32 %v630, 0.2
  %v779 = vmul.f32 %v635, 0.2
  %v780 = vmul.f32 %v638, 0.2
  %v781 = vmul.f32 %v643, 0.2
  %v782 = vmul.f32 %v646, 0.2
  %v783 = vmul.f32 %v651, 0.2
  %v784 = vmul.f32 %v654, 0.2
  %v785 = vsel %vm657, %v403, %v721
  %v786 = vsel %vm658, %v406, %v722
  %v787 = vsel %vm659, %v411, %v723
  %v788 = vsel %vm660, %v414, %v724
  %v789 = vsel %vm661, %v419, %v725
  %v790 = vsel %vm662, %v422, %v726
  %v791 = vsel %vm663, %v427, %v727
  %v792 = vsel %vm664, %v430, %v728
  %v793 = vsel %vm665, %v435, %v729
  %v794 = vsel %vm666, %v438, %v730
  %v795 = vsel %vm667, %v443, %v731
  %v796 = vsel %vm668, %v446, %v732
  %v797 = vsel %vm669, %v451, %v733
  %v798 = vsel %vm670, %v454, %v734
  %v799 = vsel %vm671, %v459, %v735
  %v800 = vsel %vm672, %v462, %v736
  %v801 = vsel %vm673, %v467, %v737
  %v802 = vsel %vm674, %v470, %v738
  %v803 = vsel %vm675, %v475, %v739
  %v804 = vsel %vm676, %v478, %v740
  %v805 = vsel %vm677, %v483, %v741
  %v806 = vsel %vm678, %v486, %v742
  %v807 = vsel %vm679, %v491, %v743
  %v808 = vsel %vm680, %v494, %v744
  %v809 = vsel %vm681, %v499, %v745
  %v810 = vsel %vm682, %v502, %v746
  %v811 = vsel %vm683, %v507, %v747
  %v812 = vsel %vm684, %v510, %v748
  %v813 = vsel %vm685, %v515, %v749
  %v814 = vsel %vm686, %v518, %v750
  %v815 = vsel %vm687, %v523, %v751
  %v816 = vsel %vm688, %v526, %v752
  %v817 = vsel %vm689, %v531, %v753
  %v818 = vsel %vm690, %v534, %v754
  %v819 = vsel %vm691, %v539, %v755
  %v820 = vsel %vm692, %v542, %v756
  %v821 = vsel %vm693, %v547, %v757
  %v822 = vsel %vm694, %v550, %v758
  %v823 = vsel %vm695, %v555, %v759
  %v824 = vsel %vm696, %v558, %v760
  %v825 = vsel %vm697, %v563, %v761
  %v826 = vsel %vm698, %v566, %v762
  %v827 = vsel %vm699, %v571, %v763
  %v828 = vsel %vm700, %v574, %v764
  %v829 = vsel %vm701, %v579, %v765
  %v830 = vsel %vm702, %v582, %v766
  %v831 = vsel %vm703, %v587, %v767
  %v832 = vsel %vm704, %v590, %v768
  %v833 = vsel %vm705, %v595, %v769
  %v834 = vsel %vm706, %v598, %v770
  %v835 = vsel %vm707, %v603, %v771
  %v836 = vsel %vm708, %v606, %v772
  %v837 = vsel %vm709, %v611, %v773
  %v838 = vsel %vm710, %v614, %v774
  %v839 = vsel %vm711, %v619, %v775
  %v840 = vsel %vm712, %v622, %v776
  %v841 = vsel %vm713, %v627, %v777
  %v842 = vsel %vm714, %v630, %v778
  %v843 = vsel %vm715, %v635, %v779
  %v844 = vsel %vm716, %v638, %v780
  %v845 = vsel %vm717, %v643, %v781
  %v846 = vsel %vm718, %v646, %v782
  %v847 = vsel %vm719, %v651, %v783
  %v848 = vsel %vm720, %v654, %v784
  %v849 = vld [vmem:[%s3] sm:$0x1]
  %v851 = vlaneseq
  %v852 = vshrl.u32 %v851, 7
  %v853 = vsub.s32 0, %v852
  %v854 = vrot.slane %v849, %v853
  %v856 = vadd.f32 %v785, %v854
  %v857 = vadd.f32 %v786, %v854
  %v858 = vadd.f32 %v787, %v854
  %v859 = vadd.f32 %v788, %v854
  %v860 = vadd.f32 %v789, %v854
  %v861 = vadd.f32 %v790, %v854
  %v862 = vadd.f32 %v791, %v854
  %v863 = vadd.f32 %v792, %v854
  %v864 = vadd.f32 %v793, %v854
  %v865 = vadd.f32 %v794, %v854
  %v866 = vadd.f32 %v795, %v854
  %v867 = vadd.f32 %v796, %v854
  %v868 = vadd.f32 %v797, %v854
  %v869 = vadd.f32 %v798, %v854
  %v870 = vadd.f32 %v799, %v854
  %v871 = vadd.f32 %v800, %v854
  %v872 = vadd.f32 %v801, %v854
  %v873 = vadd.f32 %v802, %v854
  %v874 = vadd.f32 %v803, %v854
  %v875 = vadd.f32 %v804, %v854
  %v876 = vadd.f32 %v805, %v854
  %v877 = vadd.f32 %v806, %v854
  %v878 = vadd.f32 %v807, %v854
  %v879 = vadd.f32 %v808, %v854
  %v880 = vadd.f32 %v809, %v854
  %v881 = vadd.f32 %v810, %v854
  %v882 = vadd.f32 %v811, %v854
  %v883 = vadd.f32 %v812, %v854
  %v884 = vadd.f32 %v813, %v854
  %v885 = vadd.f32 %v814, %v854
  %v886 = vadd.f32 %v815, %v854
  %v887 = vadd.f32 %v816, %v854
  %v888 = vadd.f32 %v817, %v854
  %v889 = vadd.f32 %v818, %v854
  %v890 = vadd.f32 %v819, %v854
  %v891 = vadd.f32 %v820, %v854
  %v892 = vadd.f32 %v821, %v854
  %v893 = vadd.f32 %v822, %v854
  %v894 = vadd.f32 %v823, %v854
  %v895 = vadd.f32 %v824, %v854
  %v896 = vadd.f32 %v825, %v854
  %v897 = vadd.f32 %v826, %v854
  %v898 = vadd.f32 %v827, %v854
  %v899 = vadd.f32 %v828, %v854
  %v900 = vadd.f32 %v829, %v854
  %v901 = vadd.f32 %v830, %v854
  %v902 = vadd.f32 %v831, %v854
  %v903 = vadd.f32 %v832, %v854
  %v904 = vadd.f32 %v833, %v854
  %v905 = vadd.f32 %v834, %v854
  %v906 = vadd.f32 %v835, %v854
  %v907 = vadd.f32 %v836, %v854
  %v908 = vadd.f32 %v837, %v854
  %v909 = vadd.f32 %v838, %v854
  %v910 = vadd.f32 %v839, %v854
  %v911 = vadd.f32 %v840, %v854
  %v912 = vadd.f32 %v841, %v854
  %v913 = vadd.f32 %v842, %v854
  %v914 = vadd.f32 %v843, %v854
  %v915 = vadd.f32 %v844, %v854
  %v916 = vadd.f32 %v845, %v854
  %v917 = vadd.f32 %v846, %v854
  %v918 = vadd.f32 %v847, %v854
  %v919 = vadd.f32 %v848, %v854
  %v920 = vpack.c.bf16 %v857, %v856
  %v921 = vpack.c.bf16 %v859, %v858
  %v922 = vpack.c.bf16 %v861, %v860
  %v923 = vpack.c.bf16 %v863, %v862
  %v924 = vpack.c.bf16 %v865, %v864
  %v925 = vpack.c.bf16 %v867, %v866
  %v926 = vpack.c.bf16 %v869, %v868
  %v927 = vpack.c.bf16 %v871, %v870
  %v928 = vpack.c.bf16 %v873, %v872
  %v929 = vpack.c.bf16 %v875, %v874
  %v930 = vpack.c.bf16 %v877, %v876
  %v931 = vpack.c.bf16 %v879, %v878
  %v932 = vpack.c.bf16 %v881, %v880
  %v933 = vpack.c.bf16 %v883, %v882
  %v934 = vpack.c.bf16 %v885, %v884
  %v935 = vpack.c.bf16 %v887, %v886
  %v936 = vpack.c.bf16 %v889, %v888
  %v937 = vpack.c.bf16 %v891, %v890
  %v938 = vpack.c.bf16 %v893, %v892
  %v939 = vpack.c.bf16 %v895, %v894
  %v940 = vpack.c.bf16 %v897, %v896
  %v941 = vpack.c.bf16 %v899, %v898
  %v942 = vpack.c.bf16 %v901, %v900
  %v943 = vpack.c.bf16 %v903, %v902
  %v944 = vpack.c.bf16 %v905, %v904
  %v945 = vpack.c.bf16 %v907, %v906
  %v946 = vpack.c.bf16 %v909, %v908
  %v947 = vpack.c.bf16 %v911, %v910
  %v948 = vpack.c.bf16 %v913, %v912
  %v949 = vpack.c.bf16 %v915, %v914
  %v950 = vpack.c.bf16 %v917, %v916
  %v951 = vpack.c.bf16 %v919, %v918
  %v984 = vunpack.c.l.b16 %v920
  %v985 = vunpack.c.h.b16 %v920
  %v986 = vunpack.c.l.b16 %v921
  %v987 = vunpack.c.h.b16 %v921
  %v988 = vunpack.c.l.b16 %v922
  %v989 = vunpack.c.h.b16 %v922
  %v990 = vunpack.c.l.b16 %v923
  %v991 = vunpack.c.h.b16 %v923
  %v992 = vunpack.c.l.b16 %v924
  %v993 = vunpack.c.h.b16 %v924
  %v994 = vunpack.c.l.b16 %v925
  %v995 = vunpack.c.h.b16 %v925
  %v996 = vunpack.c.l.b16 %v926
  %v997 = vunpack.c.h.b16 %v926
  %v998 = vunpack.c.l.b16 %v927
  %v999 = vunpack.c.h.b16 %v927
  %v1000 = vunpack.c.l.b16 %v928
  %v1001 = vunpack.c.h.b16 %v928
  %v1002 = vunpack.c.l.b16 %v929
  %v1003 = vunpack.c.h.b16 %v929
  %v1004 = vunpack.c.l.b16 %v930
  %v1005 = vunpack.c.h.b16 %v930
  %v1006 = vunpack.c.l.b16 %v931
  %v1007 = vunpack.c.h.b16 %v931
  %v1008 = vunpack.c.l.b16 %v932
  %v1009 = vunpack.c.h.b16 %v932
  %v1010 = vunpack.c.l.b16 %v933
  %v1011 = vunpack.c.h.b16 %v933
  %v1012 = vunpack.c.l.b16 %v934
  %v1013 = vunpack.c.h.b16 %v934
  %v1014 = vunpack.c.l.b16 %v935
  %v1015 = vunpack.c.h.b16 %v935
  %v1016 = vunpack.c.l.b16 %v936
  %v1017 = vunpack.c.h.b16 %v936
  %v1018 = vunpack.c.l.b16 %v937
  %v1019 = vunpack.c.h.b16 %v937
  %v1020 = vunpack.c.l.b16 %v938
  %v1021 = vunpack.c.h.b16 %v938
  %v1022 = vunpack.c.l.b16 %v939
  %v1023 = vunpack.c.h.b16 %v939
  %v1024 = vunpack.c.l.b16 %v940
  %v1025 = vunpack.c.h.b16 %v940
  %v1026 = vunpack.c.l.b16 %v941
  %v1027 = vunpack.c.h.b16 %v941
  %v1028 = vunpack.c.l.b16 %v942
  %v1029 = vunpack.c.h.b16 %v942
  %v1030 = vunpack.c.l.b16 %v943
  %v1031 = vunpack.c.h.b16 %v943
  %v1032 = vunpack.c.l.b16 %v944
  %v1033 = vunpack.c.h.b16 %v944
  %v1034 = vunpack.c.l.b16 %v945
  %v1035 = vunpack.c.h.b16 %v945
  %v1036 = vunpack.c.l.b16 %v946
  %v1037 = vunpack.c.h.b16 %v946
  %v1038 = vunpack.c.l.b16 %v947
  %v1039 = vunpack.c.h.b16 %v947
  %v1040 = vunpack.c.l.b16 %v948
  %v1041 = vunpack.c.h.b16 %v948
  %v1042 = vunpack.c.l.b16 %v949
  %v1043 = vunpack.c.h.b16 %v949
  %v1044 = vunpack.c.l.b16 %v950
  %v1045 = vunpack.c.h.b16 %v950
  %v1046 = vunpack.c.l.b16 %v951
  %v1047 = vunpack.c.h.b16 %v951
  %v1048 = vpack.c.b16 %v984, %v984
  %v1049 = vpack.c.b16 %v985, %v985
  %v1050 = vpack.c.b16 %v986, %v986
  %v1051 = vpack.c.b16 %v987, %v987
  %v1052 = vpack.c.b16 %v988, %v988
  %v1053 = vpack.c.b16 %v989, %v989
  %v1054 = vpack.c.b16 %v990, %v990
  %v1055 = vpack.c.b16 %v991, %v991
  %v1056 = vpack.c.b16 %v992, %v992
  %v1057 = vpack.c.b16 %v993, %v993
  %v1058 = vpack.c.b16 %v994, %v994
  %v1059 = vpack.c.b16 %v995, %v995
  %v1060 = vpack.c.b16 %v996, %v996
  %v1061 = vpack.c.b16 %v997, %v997
  %v1062 = vpack.c.b16 %v998, %v998
  %v1063 = vpack.c.b16 %v999, %v999
  %v1064 = vpack.c.b16 %v1000, %v1000
  %v1065 = vpack.c.b16 %v1001, %v1001
  %v1066 = vpack.c.b16 %v1002, %v1002
  %v1067 = vpack.c.b16 %v1003, %v1003
  %v1068 = vpack.c.b16 %v1004, %v1004
  %v1069 = vpack.c.b16 %v1005, %v1005
  %v1070 = vpack.c.b16 %v1006, %v1006
  %v1071 = vpack.c.b16 %v1007, %v1007
  %v1072 = vpack.c.b16 %v1008, %v1008
  %v1073 = vpack.c.b16 %v1009, %v1009
  %v1074 = vpack.c.b16 %v1010, %v1010
  %v1075 = vpack.c.b16 %v1011, %v1011
  %v1076 = vpack.c.b16 %v1012, %v1012
  %v1077 = vpack.c.b16 %v1013, %v1013
  %v1078 = vpack.c.b16 %v1014, %v1014
  %v1079 = vpack.c.b16 %v1015, %v1015
  %v1080 = vpack.c.b16 %v1016, %v1016
  %v1081 = vpack.c.b16 %v1017, %v1017
  %v1082 = vpack.c.b16 %v1018, %v1018
  %v1083 = vpack.c.b16 %v1019, %v1019
  %v1084 = vpack.c.b16 %v1020, %v1020
  %v1085 = vpack.c.b16 %v1021, %v1021
  %v1086 = vpack.c.b16 %v1022, %v1022
  %v1087 = vpack.c.b16 %v1023, %v1023
  %v1088 = vpack.c.b16 %v1024, %v1024
  %v1089 = vpack.c.b16 %v1025, %v1025
  %v1090 = vpack.c.b16 %v1026, %v1026
  %v1091 = vpack.c.b16 %v1027, %v1027
  %v1092 = vpack.c.b16 %v1028, %v1028
  %v1093 = vpack.c.b16 %v1029, %v1029
  %v1094 = vpack.c.b16 %v1030, %v1030
  %v1095 = vpack.c.b16 %v1031, %v1031
  %v1096 = vpack.c.b16 %v1032, %v1032
  %v1097 = vpack.c.b16 %v1033, %v1033
  %v1098 = vpack.c.b16 %v1034, %v1034
  %v1099 = vpack.c.b16 %v1035, %v1035
  %v1100 = vpack.c.b16 %v1036, %v1036
  %v1101 = vpack.c.b16 %v1037, %v1037
  %v1102 = vpack.c.b16 %v1038, %v1038
  %v1103 = vpack.c.b16 %v1039, %v1039
  %v1104 = vpack.c.b16 %v1040, %v1040
  %v1105 = vpack.c.b16 %v1041, %v1041
  %v1106 = vpack.c.b16 %v1042, %v1042
  %v1107 = vpack.c.b16 %v1043, %v1043
  %v1108 = vpack.c.b16 %v1044, %v1044
  %v1109 = vpack.c.b16 %v1045, %v1045
  %v1110 = vpack.c.b16 %v1046, %v1046
  %v1111 = vpack.c.b16 %v1047, %v1047
  %vm1176 = vcmask 125952
  %1177 = vst.msk [vmem:[%s4] sm:$0xf] %vm1176, %v1048
  %1178 = vst.msk [vmem:[%s4 + $0x4] sm:$0xf] %vm1176, %v1049
  %1179 = vst.msk [vmem:[%s4 + $0x8] sm:$0xf] %vm1176, %v1050
  %1180 = vst.msk [vmem:[%s4 + $0xc] sm:$0xf] %vm1176, %v1051
  %1181 = vst.msk [vmem:[%s4 + $0x10] sm:$0xf] %vm1176, %v1052
  %1182 = vst.msk [vmem:[%s4 + $0x14] sm:$0xf] %vm1176, %v1053
  %1183 = vst.msk [vmem:[%s4 + $0x18] sm:$0xf] %vm1176, %v1054
  %1184 = vst.msk [vmem:[%s4 + $0x1c] sm:$0xf] %vm1176, %v1055
  %1185 = vst.msk [vmem:[%s4 + $0x20] sm:$0xf] %vm1176, %v1056
  %1186 = vst.msk [vmem:[%s4 + $0x24] sm:$0xf] %vm1176, %v1057
  %1187 = vst.msk [vmem:[%s4 + $0x28] sm:$0xf] %vm1176, %v1058
  %1188 = vst.msk [vmem:[%s4 + $0x2c] sm:$0xf] %vm1176, %v1059
  %1189 = vst.msk [vmem:[%s4 + $0x30] sm:$0xf] %vm1176, %v1060
  %1190 = vst.msk [vmem:[%s4 + $0x34] sm:$0xf] %vm1176, %v1061
  %1191 = vst.msk [vmem:[%s4 + $0x38] sm:$0xf] %vm1176, %v1062
  %1192 = vst.msk [vmem:[%s4 + $0x3c] sm:$0xf] %vm1176, %v1063
  %1193 = vst.msk [vmem:[%s4 + $0x40] sm:$0xf] %vm1176, %v1064
  %1194 = vst.msk [vmem:[%s4 + $0x44] sm:$0xf] %vm1176, %v1065
  %1195 = vst.msk [vmem:[%s4 + $0x48] sm:$0xf] %vm1176, %v1066
  %1196 = vst.msk [vmem:[%s4 + $0x4c] sm:$0xf] %vm1176, %v1067
  %1197 = vst.msk [vmem:[%s4 + $0x50] sm:$0xf] %vm1176, %v1068
  %1198 = vst.msk [vmem:[%s4 + $0x54] sm:$0xf] %vm1176, %v1069
  %1199 = vst.msk [vmem:[%s4 + $0x58] sm:$0xf] %vm1176, %v1070
  %1200 = vst.msk [vmem:[%s4 + $0x5c] sm:$0xf] %vm1176, %v1071
  %1201 = vst.msk [vmem:[%s4 + $0x60] sm:$0xf] %vm1176, %v1072
  %1202 = vst.msk [vmem:[%s4 + $0x64] sm:$0xf] %vm1176, %v1073
  %1203 = vst.msk [vmem:[%s4 + $0x68] sm:$0xf] %vm1176, %v1074
  %1204 = vst.msk [vmem:[%s4 + $0x6c] sm:$0xf] %vm1176, %v1075
  %1205 = vst.msk [vmem:[%s4 + $0x70] sm:$0xf] %vm1176, %v1076
  %1206 = vst.msk [vmem:[%s4 + $0x74] sm:$0xf] %vm1176, %v1077
  %1207 = vst.msk [vmem:[%s4 + $0x78] sm:$0xf] %vm1176, %v1078
  %1208 = vst.msk [vmem:[%s4 + $0x7c] sm:$0xf] %vm1176, %v1079
  %1209 = vst.msk [vmem:[%s4 + $0x80] sm:$0xf] %vm1176, %v1080
  %1210 = vst.msk [vmem:[%s4 + $0x84] sm:$0xf] %vm1176, %v1081
  %1211 = vst.msk [vmem:[%s4 + $0x88] sm:$0xf] %vm1176, %v1082
  %1212 = vst.msk [vmem:[%s4 + $0x8c] sm:$0xf] %vm1176, %v1083
  %1213 = vst.msk [vmem:[%s4 + $0x90] sm:$0xf] %vm1176, %v1084
  %1214 = vst.msk [vmem:[%s4 + $0x94] sm:$0xf] %vm1176, %v1085
  %1215 = vst.msk [vmem:[%s4 + $0x98] sm:$0xf] %vm1176, %v1086
  %1216 = vst.msk [vmem:[%s4 + $0x9c] sm:$0xf] %vm1176, %v1087
  %1217 = vst.msk [vmem:[%s4 + $0xa0] sm:$0xf] %vm1176, %v1088
  %1218 = vst.msk [vmem:[%s4 + $0xa4] sm:$0xf] %vm1176, %v1089
  %1219 = vst.msk [vmem:[%s4 + $0xa8] sm:$0xf] %vm1176, %v1090
  %1220 = vst.msk [vmem:[%s4 + $0xac] sm:$0xf] %vm1176, %v1091
  %1221 = vst.msk [vmem:[%s4 + $0xb0] sm:$0xf] %vm1176, %v1092
  %1222 = vst.msk [vmem:[%s4 + $0xb4] sm:$0xf] %vm1176, %v1093
  %1223 = vst.msk [vmem:[%s4 + $0xb8] sm:$0xf] %vm1176, %v1094
  %1224 = vst.msk [vmem:[%s4 + $0xbc] sm:$0xf] %vm1176, %v1095
  %1225 = vst.msk [vmem:[%s4 + $0xc0] sm:$0xf] %vm1176, %v1096
  %1226 = vst.msk [vmem:[%s4 + $0xc4] sm:$0xf] %vm1176, %v1097
  %1227 = vst.msk [vmem:[%s4 + $0xc8] sm:$0xf] %vm1176, %v1098
  %1228 = vst.msk [vmem:[%s4 + $0xcc] sm:$0xf] %vm1176, %v1099
  %1229 = vst.msk [vmem:[%s4 + $0xd0] sm:$0xf] %vm1176, %v1100
  %1230 = vst.msk [vmem:[%s4 + $0xd4] sm:$0xf] %vm1176, %v1101
  %1231 = vst.msk [vmem:[%s4 + $0xd8] sm:$0xf] %vm1176, %v1102
  %1232 = vst.msk [vmem:[%s4 + $0xdc] sm:$0xf] %vm1176, %v1103
  %1233 = vst.msk [vmem:[%s4 + $0xe0] sm:$0xf] %vm1176, %v1104
  %1234 = vst.msk [vmem:[%s4 + $0xe4] sm:$0xf] %vm1176, %v1105
  %1235 = vst.msk [vmem:[%s4 + $0xe8] sm:$0xf] %vm1176, %v1106
  %1236 = vst.msk [vmem:[%s4 + $0xec] sm:$0xf] %vm1176, %v1107
  %1237 = vst.msk [vmem:[%s4 + $0xf0] sm:$0xf] %vm1176, %v1108
  %1238 = vst.msk [vmem:[%s4 + $0xf4] sm:$0xf] %vm1176, %v1109
  %1239 = vst.msk [vmem:[%s4 + $0xf8] sm:$0xf] %vm1176, %v1110
  %1240 = vst.msk [vmem:[%s4 + $0xfc] sm:$0xf] %vm1176, %v1111
  // Predicated region
  $region18: #{convnet_cifar10_forward.5} parent=0 // pred_check
    _
  $region19: #{convnet_cifar10_forward.5} parent=0 // pred_check_branch
    %1242 = sbr.rel (0) target = $region21
  $region20: #{convnet_cifar10_forward.5} parent=0 // pred_region
    _
  $region21: #{convnet_cifar10_forward.5} parent=0 // pred_fallthru
    _
  // Predicated region
  $region22: #{convnet_cifar10_forward.5} parent=0 // pred_check
    _
  $region23: #{convnet_cifar10_forward.5} parent=0 // pred_check_branch
    %1244 = sbr.rel (0) target = $region25
  $region24: #{convnet_cifar10_forward.5} parent=0 // pred_region
    _
  $region25: #{convnet_cifar10_forward.5} parent=0 // pred_fallthru
    _

// kernel: convnet_cifar10_forward.6
$region0: #{convnet_cifar10_forward.6}
  #allocation0 [shape = 'u32[]', space=smem, size = 0x4, offset = 0x4, fixed_abs, tag = 'smem constant byte address 0x4 - core index']
  #allocation1 [shape = 'u32[144,128]{1,0:T(1,128)}', space=vmem, size = 0x12000, scoped, tag = 'internal scratch']
  %s0 = inlined_call_operand.vmem [shape: bf16[128,144], index: 0, kind: input, shape index: {}]
  %s1 = inlined_call_operand.vmem [shape: bf16[144,32], index: 1, kind: input, shape index: {}]
  %s2 = inlined_call_operand.vmem [shape: f32[1,32], index: 2, kind: input, shape index: {}]
  %s3 = inlined_call_operand.vmem [shape: f32[1,32], index: 3, kind: input, shape index: {}]
  %s4 = inlined_call_operand.vmem [shape: bf16[128,32], index: 4, kind: output, shape index: {}]
  %s5 = sld [smem:[#allocation0]]
  $region26: #{convnet_cifar10_forward.6} parent=0
    _
  %s7 = ssub.s32 1, %s5
  %s8 = scalar_select 0, %s7, %s5
  // Predicated region
  $region2: #{convnet_cifar10_forward.6} parent=0 // pred_check
    _
  $region3: #{convnet_cifar10_forward.6} parent=0 // pred_check_branch
    %10 = sbr.rel (0) target = $region5
  $region4: #{convnet_cifar10_forward.6} parent=0 // pred_region
    _
  $region5: #{convnet_cifar10_forward.6} parent=0 // pred_fallthru
    _
  // Predicated region
  $region6: #{convnet_cifar10_forward.6} parent=0 // pred_check
    _
  $region7: #{convnet_cifar10_forward.6} parent=0 // pred_check_branch
    %12 = sbr.rel (0) target = $region9
  $region8: #{convnet_cifar10_forward.6} parent=0 // pred_region
    _
  $region9: #{convnet_cifar10_forward.6} parent=0 // pred_fallthru
    _
  // Predicated region
  $region10: #{convnet_cifar10_forward.6} parent=0 // pred_check
    _
  $region11: #{convnet_cifar10_forward.6} parent=0 // pred_check_branch
    %14 = sbr.rel (0) target = $region13
  $region12: #{convnet_cifar10_forward.6} parent=0 // pred_region
    _
  $region13: #{convnet_cifar10_forward.6} parent=0 // pred_fallthru
    _
  // Predicated region
  $region14: #{convnet_cifar10_forward.6} parent=0 // pred_check
    _
  $region15: #{convnet_cifar10_forward.6} parent=0 // pred_check_branch
    %16 = sbr.rel (0) target = $region17
  $region16: #{convnet_cifar10_forward.6} parent=0 // pred_region
    _
  $region17: #{convnet_cifar10_forward.6} parent=0 // pred_fallthru
    _
  %v18 = vld [vmem:[%s0] sm:$0xff]
  %v19 = vld [vmem:[%s0 + $0x8] sm:$0xff]
  %v20 = vld [vmem:[%s0 + $0x10] sm:$0xff]
  %v21 = vld [vmem:[%s0 + $0x18] sm:$0xff]
  %v22 = vld [vmem:[%s0 + $0x20] sm:$0xff]
  %v23 = vld [vmem:[%s0 + $0x28] sm:$0xff]
  %v24 = vld [vmem:[%s0 + $0x30] sm:$0xff]
  %v25 = vld [vmem:[%s0 + $0x38] sm:$0xff]
  %v26 = vld [vmem:[%s0 + $0x40] sm:$0xff]
  %v27 = vld [vmem:[%s0 + $0x48] sm:$0xff]
  %v28 = vld [vmem:[%s0 + $0x50] sm:$0xff]
  %v29 = vld [vmem:[%s0 + $0x58] sm:$0xff]
  %v30 = vld [vmem:[%s0 + $0x60] sm:$0xff]
  %v31 = vld [vmem:[%s0 + $0x68] sm:$0xff]
  %v32 = vld [vmem:[%s0 + $0x70] sm:$0xff]
  %v33 = vld [vmem:[%s0 + $0x78] sm:$0xff]
  %v34 = vld [vmem:[%s1] sm:$0xf]
  %v35 = vld [vmem:[%s1 + $0x4] sm:$0xf]
  %v36 = vld [vmem:[%s1 + $0x8] sm:$0xf]
  %v37 = vld [vmem:[%s1 + $0xc] sm:$0xf]
  %v38 = vld [vmem:[%s1 + $0x10] sm:$0xf]
  %v39 = vld [vmem:[%s1 + $0x14] sm:$0xf]
  %v40 = vld [vmem:[%s1 + $0x18] sm:$0xf]
  %v41 = vld [vmem:[%s1 + $0x1c] sm:$0xf]
  %v42 = vld [vmem:[%s1 + $0x20] sm:$0xf]
  %v43 = vld [vmem:[%s1 + $0x24] sm:$0xf]
  %v44 = vld [vmem:[%s1 + $0x28] sm:$0xf]
  %v45 = vld [vmem:[%s1 + $0x2c] sm:$0xf]
  %v46 = vld [vmem:[%s1 + $0x30] sm:$0xf]
  %v47 = vld [vmem:[%s1 + $0x34] sm:$0xf]
  %v48 = vld [vmem:[%s1 + $0x38] sm:$0xf]
  %v49 = vld [vmem:[%s1 + $0x3c] sm:$0xf]
  %v50 = vld [vmem:[%s1 + $0x40] sm:$0xf]
  %v51 = vld [vmem:[%s1 + $0x44] sm:$0xf]
  %v52 = vld [vmem:[%s2] sm:$0x1]
  %v54 = vlaneseq
  %v55 = vshrl.u32 %v54, 7
  %v56 = vsub.s32 0, %v55
  %v57 = vrot.slane %v52, %v56
  %v75 = vunpack.c.l.b16 %v18
  %v76 = vunpack.c.h.b16 %v18
  %v77 = vunpack.c.l.b16 %v19
  %v78 = vunpack.c.h.b16 %v19
  %v79 = vunpack.c.l.b16 %v20
  %v80 = vunpack.c.h.b16 %v20
  %v81 = vunpack.c.l.b16 %v21
  %v82 = vunpack.c.h.b16 %v21
  %v83 = vunpack.c.l.b16 %v22
  %v84 = vunpack.c.h.b16 %v22
  %v85 = vunpack.c.l.b16 %v23
  %v86 = vunpack.c.h.b16 %v23
  %v87 = vunpack.c.l.b16 %v24
  %v88 = vunpack.c.h.b16 %v24
  %v89 = vunpack.c.l.b16 %v25
  %v90 = vunpack.c.h.b16 %v25
  %v91 = vunpack.c.l.b16 %v26
  %v92 = vunpack.c.h.b16 %v26
  %v93 = vunpack.c.l.b16 %v27
  %v94 = vunpack.c.h.b16 %v27
  %v95 = vunpack.c.l.b16 %v28
  %v96 = vunpack.c.h.b16 %v28
  %v97 = vunpack.c.l.b16 %v29
  %v98 = vunpack.c.h.b16 %v29
  %v99 = vunpack.c.l.b16 %v30
  %v100 = vunpack.c.h.b16 %v30
  %v101 = vunpack.c.l.b16 %v31
  %v102 = vunpack.c.h.b16 %v31
  %v103 = vunpack.c.l.b16 %v32
  %v104 = vunpack.c.h.b16 %v32
  %v105 = vunpack.c.l.b16 %v33
  %v106 = vunpack.c.h.b16 %v33
  %v107 = vpack.c.b16 %v77, %v75
  %v108 = vpack.c.b16 %v78, %v76
  %v109 = vpack.c.b16 %v81, %v79
  %v110 = vpack.c.b16 %v82, %v80
  %v111 = vpack.c.b16 %v85, %v83
  %v112 = vpack.c.b16 %v86, %v84
  %v113 = vpack.c.b16 %v89, %v87
  %v114 = vpack.c.b16 %v90, %v88
  %v115 = vpack.c.b16 %v93, %v91
  %v116 = vpack.c.b16 %v94, %v92
  %v117 = vpack.c.b16 %v97, %v95
  %v118 = vpack.c.b16 %v98, %v96
  %v119 = vpack.c.b16 %v101, %v99
  %v120 = vpack.c.b16 %v102, %v100
  %v121 = vpack.c.b16 %v105, %v103
  %v122 = vpack.c.b16 %v106, %v104
  %v149 = vunpack.c.l.b16 %v34
  %v150 = vunpack.c.l.b16 %v35
  %v151 = vunpack.c.l.b16 %v36
  %v152 = vunpack.c.l.b16 %v37
  %v153 = vunpack.c.l.b16 %v38
  %v154 = vunpack.c.l.b16 %v39
  %v155 = vunpack.c.l.b16 %v40
  %v156 = vunpack.c.l.b16 %v41
  %v157 = vunpack.c.l.b16 %v42
  %v158 = vunpack.c.l.b16 %v43
  %v159 = vunpack.c.l.b16 %v44
  %v160 = vunpack.c.l.b16 %v45
  %v161 = vunpack.c.l.b16 %v46
  %v162 = vunpack.c.l.b16 %v47
  %v163 = vunpack.c.l.b16 %v48
  %v164 = vunpack.c.l.b16 %v49
  %v165 = vunpack.c.l.b16 %v50
  %v166 = vunpack.c.l.b16 %v51
  %v167 = vpack.c.b16 %v150, %v149
  %v168 = vpack.c.b16 %v152, %v151
  %v169 = vpack.c.b16 %v154, %v153
  %v170 = vpack.c.b16 %v156, %v155
  %v171 = vpack.c.b16 %v158, %v157
  %v172 = vpack.c.b16 %v160, %v159
  %v173 = vpack.c.b16 %v162, %v161
  %v174 = vpack.c.b16 %v164, %v163
  %v175 = vpack.c.b16 %v166, %v165
  %vm185 = vcmask 130048
  %v187 = vsel %vm185, %v108, 0
  %v190 = vsel %vm185, %v110, 0
  %v193 = vsel %vm185, %v112, 0
  %v196 = vsel %vm185, %v114, 0
  %v199 = vsel %vm185, %v116, 0
  %v202 = vsel %vm185, %v118, 0
  %v205 = vsel %vm185, %v120, 0
  %v208 = vsel %vm185, %v122, 0
  %210 = vmatprep.subr.bf16.mxu0 0
  %211 = vmatpush1.bf16.msra.mxu0 %v167
  %212 = vmatprep.subr.bf16.mxu0 0
  %213 = vmatpush1.bf16.msra.mxu0 %v168
  %214 = vmatprep.subr.bf16.mxu0 0
  %215 = vmatpush1.bf16.msra.mxu0 %v169
  %216 = vmatprep.subr.bf16.mxu0 0
  %217 = vmatpush1.bf16.msra.mxu0 %v170
  %218 = vmatprep.subr.bf16.mxu0 0
  %219 = vmatpush1.bf16.msra.mxu0 %v171
  %220 = vmatprep.subr.bf16.mxu0 0
  %221 = vmatpush1.bf16.msra.mxu0 %v172
  %222 = vmatprep.subr.bf16.mxu0 0
  %223 = vmatpush1.bf16.msra.mxu0 %v173
  %224 = vmatprep.subr.bf16.mxu0 0
  %225 = vmatpush1.bf16.msra.mxu0 %v174
  %226 = vmatprep.subr.bf16.mxu0 0
  %227 = vmatpush1.bf16.msra.mxu0 %v175
  %228 = vmatprep.subr.bf16.mxu0 0
  %229 = vmatpush1.bf16.msra.mxu0 0
  %230 = vmatprep.subr.bf16.mxu0 0
  %231 = vmatpush1.bf16.msra.mxu0 0
  %232 = vmatprep.subr.bf16.mxu0 0
  %233 = vmatpush1.bf16.msra.mxu0 0
  %234 = vmatprep.subr.bf16.mxu0 0
  %235 = vmatpush1.bf16.msra.mxu0 0
  %236 = vmatprep.subr.bf16.mxu0 0
  %237 = vmatpush1.bf16.msra.mxu0 0
  %238 = vmatprep.subr.bf16.mxu0 0
  %239 = vmatpush1.bf16.msra.mxu0 0
  %240 = vmatprep.subr.bf16.mxu0 0
  %241 = vmatpush1.bf16.msra.mxu0 0
  %242 = vmatprep.mubr.bf16.mxu0 %v187
  %243 = vmatmul.mubr.bf16.gmra.mrb[0].mxu0 %v107
  %v244 = vpop.f32.mrb[0].mxu0
  %v245 = vadd.f32 %v57, %v244
  %v246 = vpop.f32.mrb[0].mxu0
  %v247 = vpop.f32.mrb[0].mxu0
  %v248 = vadd.f32 %v57, %v247
  %v249 = vpop.f32.mrb[0].mxu0
  %250 = vmatprep.mubr.bf16.mxu0 %v190
  %251 = vmatmul.mubr.bf16.gmra.mrb[0].mxu0 %v109
  %v252 = vpop.f32.mrb[0].mxu0
  %v253 = vadd.f32 %v57, %v252
  %v254 = vpop.f32.mrb[0].mxu0
  %v255 = vpop.f32.mrb[0].mxu0
  %v256 = vadd.f32 %v57, %v255
  %v257 = vpop.f32.mrb[0].mxu0
  %258 = vmatprep.mubr.bf16.mxu0 %v193
  %259 = vmatmul.mubr.bf16.gmra.mrb[0].mxu0 %v111
  %v260 = vpop.f32.mrb[0].mxu0
  %v261 = vadd.f32 %v57, %v260
  %v262 = vpop.f32.mrb[0].mxu0
  %v263 = vpop.f32.mrb[0].mxu0
  %v264 = vadd.f32 %v57, %v263
  %v265 = vpop.f32.mrb[0].mxu0
  %266 = vmatprep.mubr.bf16.mxu0 %v196
  %267 = vmatmul.mubr.bf16.gmra.mrb[0].mxu0 %v113
  %v268 = vpop.f32.mrb[0].mxu0
  %v269 = vadd.f32 %v57, %v268
  %v270 = vpop.f32.mrb[0].mxu0
  %v271 = vpop.f32.mrb[0].mxu0
  %v272 = vadd.f32 %v57, %v271
  %v273 = vpop.f32.mrb[0].mxu0
  %274 = vmatprep.mubr.bf16.mxu0 %v199
  %275 = vmatmul.mubr.bf16.gmra.mrb[0].mxu0 %v115
  %v276 = vpop.f32.mrb[0].mxu0
  %v277 = vadd.f32 %v57, %v276
  %v278 = vpop.f32.mrb[0].mxu0
  %v279 = vpop.f32.mrb[0].mxu0
  %v280 = vadd.f32 %v57, %v279
  %v281 = vpop.f32.mrb[0].mxu0
  %282 = vmatprep.mubr.bf16.mxu0 %v202
  %283 = vmatmul.mubr.bf16.gmra.mrb[0].mxu0 %v117
  %v284 = vpop.f32.mrb[0].mxu0
  %v285 = vadd.f32 %v57, %v284
  %v286 = vpop.f32.mrb[0].mxu0
  %v287 = vpop.f32.mrb[0].mxu0
  %v288 = vadd.f32 %v57, %v287
  %v289 = vpop.f32.mrb[0].mxu0
  %290 = vmatprep.mubr.bf16.mxu0 %v205
  %291 = vmatmul.mubr.bf16.gmra.mrb[0].mxu0 %v119
  %v292 = vpop.f32.mrb[0].mxu0
  %v293 = vadd.f32 %v57, %v292
  %v294 = vpop.f32.mrb[0].mxu0
  %v295 = vpop.f32.mrb[0].mxu0
  %v296 = vadd.f32 %v57, %v295
  %v297 = vpop.f32.mrb[0].mxu0
  %298 = vmatprep.mubr.bf16.mxu0 %v208
  %299 = vmatmul.mubr.bf16.gmra.mrb[0].mxu0 %v121
  %v300 = vpop.f32.mrb[0].mxu0
  %v301 = vadd.f32 %v57, %v300
  %v302 = vpop.f32.mrb[0].mxu0
  %v303 = vpop.f32.mrb[0].mxu0
  %v304 = vadd.f32 %v57, %v303
  %v305 = vpop.f32.mrb[0].mxu0
  %306 = vdwg.mxu0
  %vm307 = vcmp.ge.f32.partialorder %v245, 0.0
  %vm308 = vcmp.ge.f32.partialorder %v248, 0.0
  %vm309 = vcmp.ge.f32.partialorder %v253, 0.0
  %vm310 = vcmp.ge.f32.partialorder %v256, 0.0
  %vm311 = vcmp.ge.f32.partialorder %v261, 0.0
  %vm312 = vcmp.ge.f32.partialorder %v264, 0.0
  %vm313 = vcmp.ge.f32.partialorder %v269, 0.0
  %vm314 = vcmp.ge.f32.partialorder %v272, 0.0
  %vm315 = vcmp.ge.f32.partialorder %v277, 0.0
  %vm316 = vcmp.ge.f32.partialorder %v280, 0.0
  %vm317 = vcmp.ge.f32.partialorder %v285, 0.0
  %vm318 = vcmp.ge.f32.partialorder %v288, 0.0
  %vm319 = vcmp.ge.f32.partialorder %v293, 0.0
  %vm320 = vcmp.ge.f32.partialorder %v296, 0.0
  %vm321 = vcmp.ge.f32.partialorder %v301, 0.0
  %vm322 = vcmp.ge.f32.partialorder %v304, 0.0
  %v323 = vmul.f32 %v245, 0.2
  %v324 = vmul.f32 %v248, 0.2
  %v325 = vmul.f32 %v253, 0.2
  %v326 = vmul.f32 %v256, 0.2
  %v327 = vmul.f32 %v261, 0.2
  %v328 = vmul.f32 %v264, 0.2
  %v329 = vmul.f32 %v269, 0.2
  %v330 = vmul.f32 %v272, 0.2
  %v331 = vmul.f32 %v277, 0.2
  %v332 = vmul.f32 %v280, 0.2
  %v333 = vmul.f32 %v285, 0.2
  %v334 = vmul.f32 %v288, 0.2
  %v335 = vmul.f32 %v293, 0.2
  %v336 = vmul.f32 %v296, 0.2
  %v337 = vmul.f32 %v301, 0.2
  %v338 = vmul.f32 %v304, 0.2
  %v339 = vsel %vm307, %v245, %v323
  %v340 = vsel %vm308, %v248, %v324
  %v341 = vsel %vm309, %v253, %v325
  %v342 = vsel %vm310, %v256, %v326
  %v343 = vsel %vm311, %v261, %v327
  %v344 = vsel %vm312, %v264, %v328
  %v345 = vsel %vm313, %v269, %v329
  %v346 = vsel %vm314, %v272, %v330
  %v347 = vsel %vm315, %v277, %v331
  %v348 = vsel %vm316, %v280, %v332
  %v349 = vsel %vm317, %v285, %v333
  %v350 = vsel %vm318, %v288, %v334
  %v351 = vsel %vm319, %v293, %v335
  %v352 = vsel %vm320, %v296, %v336
  %v353 = vsel %vm321, %v301, %v337
  %v354 = vsel %vm322, %v304, %v338
  %v355 = vld [vmem:[%s3] sm:$0x1]
  %v357 = vlaneseq
  %v358 = vshrl.u32 %v357, 7
  %v359 = vsub.s32 0, %v358
  %v360 = vrot.slane %v355, %v359
  %v362 = vadd.f32 %v339, %v360
  %v363 = vadd.f32 %v340, %v360
  %v364 = vadd.f32 %v341, %v360
  %v365 = vadd.f32 %v342, %v360
  %v366 = vadd.f32 %v343, %v360
  %v367 = vadd.f32 %v344, %v360
  %v368 = vadd.f32 %v345, %v360
  %v369 = vadd.f32 %v346, %v360
  %v370 = vadd.f32 %v347, %v360
  %v371 = vadd.f32 %v348, %v360
  %v372 = vadd.f32 %v349, %v360
  %v373 = vadd.f32 %v350, %v360
  %v374 = vadd.f32 %v351, %v360
  %v375 = vadd.f32 %v352, %v360
  %v376 = vadd.f32 %v353, %v360
  %v377 = vadd.f32 %v354, %v360
  %v378 = vpack.c.bf16 %v363, %v362
  %v379 = vpack.c.bf16 %v365, %v364
  %v380 = vpack.c.bf16 %v367, %v366
  %v381 = vpack.c.bf16 %v369, %v368
  %v382 = vpack.c.bf16 %v371, %v370
  %v383 = vpack.c.bf16 %v373, %v372
  %v384 = vpack.c.bf16 %v375, %v374
  %v385 = vpack.c.bf16 %v377, %v376
  %v394 = vunpack.c.l.b16 %v378
  %v395 = vunpack.c.h.b16 %v378
  %v396 = vunpack.c.l.b16 %v379
  %v397 = vunpack.c.h.b16 %v379
  %v398 = vunpack.c.l.b16 %v380
  %v399 = vunpack.c.h.b16 %v380
  %v400 = vunpack.c.l.b16 %v381
  %v401 = vunpack.c.h.b16 %v381
  %v402 = vunpack.c.l.b16 %v382
  %v403 = vunpack.c.h.b16 %v382
  %v404 = vunpack.c.l.b16 %v383
  %v405 = vunpack.c.h.b16 %v383
  %v406 = vunpack.c.l.b16 %v384
  %v407 = vunpack.c.h.b16 %v384
  %v408 = vunpack.c.l.b16 %v385
  %v409 = vunpack.c.h.b16 %v385
  %v410 = vpack.c.b16 %v394, %v394
  %v411 = vpack.c.b16 %v395, %v395
  %v412 = vpack.c.b16 %v396, %v396
  %v413 = vpack.c.b16 %v397, %v397
  %v414 = vpack.c.b16 %v398, %v398
  %v415 = vpack.c.b16 %v399, %v399
  %v416 = vpack.c.b16 %v400, %v400
  %v417 = vpack.c.b16 %v401, %v401
  %v418 = vpack.c.b16 %v402, %v402
  %v419 = vpack.c.b16 %v403, %v403
  %v420 = vpack.c.b16 %v404, %v404
  %v421 = vpack.c.b16 %v405, %v405
  %v422 = vpack.c.b16 %v406, %v406
  %v423 = vpack.c.b16 %v407, %v407
  %v424 = vpack.c.b16 %v408, %v408
  %v425 = vpack.c.b16 %v409, %v409
  %vm442 = vcmask 257024
  %443 = vst.msk [vmem:[%s4] sm:$0xf] %vm442, %v410
  %444 = vst.msk [vmem:[%s4 + $0x4] sm:$0xf] %vm442, %v411
  %445 = vst.msk [vmem:[%s4 + $0x8] sm:$0xf] %vm442, %v412
  %446 = vst.msk [vmem:[%s4 + $0xc] sm:$0xf] %vm442, %v413
  %447 = vst.msk [vmem:[%s4 + $0x10] sm:$0xf] %vm442, %v414
  %448 = vst.msk [vmem:[%s4 + $0x14] sm:$0xf] %vm442, %v415
  %449 = vst.msk [vmem:[%s4 + $0x18] sm:$0xf] %vm442, %v416
  %450 = vst.msk [vmem:[%s4 + $0x1c] sm:$0xf] %vm442, %v417
  %451 = vst.msk [vmem:[%s4 + $0x20] sm:$0xf] %vm442, %v418
  %452 = vst.msk [vmem:[%s4 + $0x24] sm:$0xf] %vm442, %v419
  %453 = vst.msk [vmem:[%s4 + $0x28] sm:$0xf] %vm442, %v420
  %454 = vst.msk [vmem:[%s4 + $0x2c] sm:$0xf] %vm442, %v421
  %455 = vst.msk [vmem:[%s4 + $0x30] sm:$0xf] %vm442, %v422
  %456 = vst.msk [vmem:[%s4 + $0x34] sm:$0xf] %vm442, %v423
  %457 = vst.msk [vmem:[%s4 + $0x38] sm:$0xf] %vm442, %v424
  %458 = vst.msk [vmem:[%s4 + $0x3c] sm:$0xf] %vm442, %v425
  // Predicated region
  $region18: #{convnet_cifar10_forward.6} parent=0 // pred_check
    _
  $region19: #{convnet_cifar10_forward.6} parent=0 // pred_check_branch
    %460 = sbr.rel (0) target = $region21
  $region20: #{convnet_cifar10_forward.6} parent=0 // pred_region
    _
  $region21: #{convnet_cifar10_forward.6} parent=0 // pred_fallthru
    _
  // Predicated region
  $region22: #{convnet_cifar10_forward.6} parent=0 // pred_check
    _
  $region23: #{convnet_cifar10_forward.6} parent=0 // pred_check_branch
    %462 = sbr.rel (0) target = $region25
  $region24: #{convnet_cifar10_forward.6} parent=0 // pred_region
    _
  $region25: #{convnet_cifar10_forward.6} parent=0 // pred_fallthru
    _

// kernel: convnet_cifar10_forward.7
$region0: #{convnet_cifar10_forward.7}
  #allocation0 [shape = 'u32[]', space=smem, size = 0x4, offset = 0x4, fixed_abs, tag = 'smem constant byte address 0x4 - core index']
  #allocation1 [shape = 'u32[144,128]{1,0:T(1,128)}', space=vmem, size = 0x12000, scoped, tag = 'internal scratch']
  %s0 = inlined_call_operand.vmem [shape: bf16[32,288], index: 0, kind: input, shape index: {}]
  %s1 = inlined_call_operand.vmem [shape: bf16[288,64], index: 1, kind: input, shape index: {}]
  %s2 = inlined_call_operand.vmem [shape: f32[1,64], index: 2, kind: input, shape index: {}]
  %s3 = inlined_call_operand.vmem [shape: f32[1,64], index: 3, kind: input, shape index: {}]
  %s4 = inlined_call_operand.vmem [shape: bf16[32,64], index: 4, kind: output, shape index: {}]
  %s5 = sld [smem:[#allocation0]]
  $region26: #{convnet_cifar10_forward.7} parent=0
    _
  %s7 = ssub.s32 1, %s5
  %s8 = scalar_select 0, %s7, %s5
  // Predicated region
  $region2: #{convnet_cifar10_forward.7} parent=0 // pred_check
    _
  $region3: #{convnet_cifar10_forward.7} parent=0 // pred_check_branch
    %10 = sbr.rel (0) target = $region5
  $region4: #{convnet_cifar10_forward.7} parent=0 // pred_region
    _
  $region5: #{convnet_cifar10_forward.7} parent=0 // pred_fallthru
    _
  // Predicated region
  $region6: #{convnet_cifar10_forward.7} parent=0 // pred_check
    _
  $region7: #{convnet_cifar10_forward.7} parent=0 // pred_check_branch
    %12 = sbr.rel (0) target = $region9
  $region8: #{convnet_cifar10_forward.7} parent=0 // pred_region
    _
  $region9: #{convnet_cifar10_forward.7} parent=0 // pred_fallthru
    _
  // Predicated region
  $region10: #{convnet_cifar10_forward.7} parent=0 // pred_check
    _
  $region11: #{convnet_cifar10_forward.7} parent=0 // pred_check_branch
    %14 = sbr.rel (0) target = $region13
  $region12: #{convnet_cifar10_forward.7} parent=0 // pred_region
    _
  $region13: #{convnet_cifar10_forward.7} parent=0 // pred_fallthru
    _
  // Predicated region
  $region14: #{convnet_cifar10_forward.7} parent=0 // pred_check
    _
  $region15: #{convnet_cifar10_forward.7} parent=0 // pred_check_branch
    %16 = sbr.rel (0) target = $region17
  $region16: #{convnet_cifar10_forward.7} parent=0 // pred_region
    _
  $region17: #{convnet_cifar10_forward.7} parent=0 // pred_fallthru
    _
  %v18 = vld [vmem:[%s0] sm:$0xff]
  %v19 = vld [vmem:[%s0 + $0x8] sm:$0xf]
  %v20 = vld [vmem:[%s0 + $0xc] sm:$0xff]
  %v21 = vld [vmem:[%s0 + $0x14] sm:$0xf]
  %v22 = vld [vmem:[%s0 + $0x18] sm:$0xff]
  %v23 = vld [vmem:[%s0 + $0x20] sm:$0xf]
  %v24 = vld [vmem:[%s0 + $0x24] sm:$0xff]
  %v25 = vld [vmem:[%s0 + $0x2c] sm:$0xf]
  %v26 = vld [vmem:[%s1] sm:$0xf]
  %v27 = vld [vmem:[%s1 + $0x4] sm:$0xf]
  %v28 = vld [vmem:[%s1 + $0x8] sm:$0xf]
  %v29 = vld [vmem:[%s1 + $0xc] sm:$0xf]
  %v30 = vld [vmem:[%s1 + $0x10] sm:$0xf]
  %v31 = vld [vmem:[%s1 + $0x14] sm:$0xf]
  %v32 = vld [vmem:[%s1 + $0x18] sm:$0xf]
  %v33 = vld [vmem:[%s1 + $0x1c] sm:$0xf]
  %v34 = vld [vmem:[%s1 + $0x20] sm:$0xf]
  %v35 = vld [vmem:[%s1 + $0x24] sm:$0xf]
  %v36 = vld [vmem:[%s1 + $0x28] sm:$0xf]
  %v37 = vld [vmem:[%s1 + $0x2c] sm:$0xf]
  %v38 = vld [vmem:[%s1 + $0x30] sm:$0xf]
  %v39 = vld [vmem:[%s1 + $0x34] sm:$0xf]
  %v40 = vld [vmem:[%s1 + $0x38] sm:$0xf]
  %v41 = vld [vmem:[%s1 + $0x3c] sm:$0xf]
  %v42 = vld [vmem:[%s1 + $0x40] sm:$0xf]
  %v43 = vld [vmem:[%s1 + $0x44] sm:$0xf]
  %v44 = vld [vmem:[%s1 + $0x48] sm:$0xf]
  %v45 = vld [vmem:[%s1 + $0x4c] sm:$0xf]
  %v46 = vld [vmem:[%s1 + $0x50] sm:$0xf]
  %v47 = vld [vmem:[%s1 + $0x54] sm:$0xf]
  %v48 = vld [vmem:[%s1 + $0x58] sm:$0xf]
  %v49 = vld [vmem:[%s1 + $0x5c] sm:$0xf]
  %v50 = vld [vmem:[%s1 + $0x60] sm:$0xf]
  %v51 = vld [vmem:[%s1 + $0x64] sm:$0xf]
  %v52 = vld [vmem:[%s1 + $0x68] sm:$0xf]
  %v53 = vld [vmem:[%s1 + $0x6c] sm:$0xf]
  %v54 = vld [vmem:[%s1 + $0x70] sm:$0xf]
  %v55 = vld [vmem:[%s1 + $0x74] sm:$0xf]
  %v56 = vld [vmem:[%s1 + $0x78] sm:$0xf]
  %v57 = vld [vmem:[%s1 + $0x7c] sm:$0xf]
  %v58 = vld [vmem:[%s1 + $0x80] sm:$0xf]
  %v59 = vld [vmem:[%s1 + $0x84] sm:$0xf]
  %v60 = vld [vmem:[%s1 + $0x88] sm:$0xf]
  %v61 = vld [vmem:[%s1 + $0x8c] sm:$0xf]
  %v62 = vld [vmem:[%s2] sm:$0x1]
  %v64 = vlaneseq
  %v65 = vshrl.u32 %v64, 7
  %v66 = vsub.s32 0, %v65
  %v67 = vrot.slane %v62, %v66
  %v77 = vunpack.c.l.b16 %v18
  %v78 = vunpack.c.h.b16 %v18
  %v79 = vunpack.c.l.b16 %v19
  %v80 = vunpack.c.l.b16 %v20
  %v81 = vunpack.c.h.b16 %v20
  %v82 = vunpack.c.l.b16 %v21
  %v83 = vunpack.c.l.b16 %v22
  %v84 = vunpack.c.h.b16 %v22
  %v85 = vunpack.c.l.b16 %v23
  %v86 = vunpack.c.l.b16 %v24
  %v87 = vunpack.c.h.b16 %v24
  %v88 = vunpack.c.l.b16 %v25
  %v89 = vpack.c.b16 %v80, %v77
  %v90 = vpack.c.b16 %v81, %v78
  %v91 = vpack.c.b16 %v82, %v79
  %v92 = vpack.c.b16 %v86, %v83
  %v93 = vpack.c.b16 %v87, %v84
  %v94 = vpack.c.b16 %v88, %v85
  %v135 = vunpack.c.l.b16 %v26
  %v136 = vunpack.c.l.b16 %v27
  %v137 = vunpack.c.l.b16 %v28
  %v138 = vunpack.c.l.b16 %v29
  %v139 = vunpack.c.l.b16 %v30
  %v140 = vunpack.c.l.b16 %v31
  %v141 = vunpack.c.l.b16 %v32
  %v142 = vunpack.c.l.b16 %v33
  %v143 = vunpack.c.l.b16 %v34
  %v144 = vunpack.c.l.b16 %v35
  %v145 = vunpack.c.l.b16 %v36
  %v146 = vunpack.c.l.b16 %v37
  %v147 = vunpack.c.l.b16 %v38
  %v148 = vunpack.c.l.b16 %v39
  %v149 = vunpack.c.l.b16 %v40
  %v150 = vunpack.c.l.b16 %v41
  %v151 = vunpack.c.l.b16 %v42
  %v152 = vunpack.c.l.b16 %v43
  %v153 = vunpack.c.l.b16 %v44
  %v154 = vunpack.c.l.b16 %v45
  %v155 = vunpack.c.l.b16 %v46
  %v156 = vunpack.c.l.b16 %v47
  %v157 = vunpack.c.l.b16 %v48
  %v158 = vunpack.c.l.b16 %v49
  %v159 = vunpack.c.l.b16 %v50
  %v160 = vunpack.c.l.b16 %v51
  %v161 = vunpack.c.l.b16 %v52
  %v162 = vunpack.c.l.b16 %v53
  %v163 = vunpack.c.l.b16 %v54
  %v164 = vunpack.c.l.b16 %v55
  %v165 = vunpack.c.l.b16 %v56
  %v166 = vunpack.c.l.b16 %v57
  %v167 = vunpack.c.l.b16 %v58
  %v168 = vunpack.c.l.b16 %v59
  %v169 = vunpack.c.l.b16 %v60
  %v170 = vunpack.c.l.b16 %v61
  %v171 = vpack.c.b16 %v136, %v135
  %v172 = vpack.c.b16 %v138, %v137
  %v173 = vpack.c.b16 %v140, %v139
  %v174 = vpack.c.b16 %v142, %v141
  %v175 = vpack.c.b16 %v144, %v143
  %v176 = vpack.c.b16 %v146, %v145
  %v177 = vpack.c.b16 %v148, %v147
  %v178 = vpack.c.b16 %v150, %v149
  %v179 = vpack.c.b16 %v152, %v151
  %v180 = vpack.c.b16 %v154, %v153
  %v181 = vpack.c.b16 %v156, %v155
  %v182 = vpack.c.b16 %v158, %v157
  %v183 = vpack.c.b16 %v160, %v159
  %v184 = vpack.c.b16 %v162, %v161
  %v185 = vpack.c.b16 %v164, %v163
  %v186 = vpack.c.b16 %v166, %v165
  %v187 = vpack.c.b16 %v168, %v167
  %v188 = vpack.c.b16 %v170, %v169
  %vm207 = vcmask 261120
  %v209 = vsel %vm207, %v91, 0
  %v212 = vsel %vm207, %v94, 0
  %214 = vmatprep.subr.bf16.mxu0 0
  %215 = vmatpush1.bf16.msra.mxu0 %v171
  %216 = vmatprep.subr.bf16.mxu0 0
  %217 = vmatpush1.bf16.msra.mxu0 %v172
  %218 = vmatprep.subr.bf16.mxu0 0
  %219 = vmatpush1.bf16.msra.mxu0 %v173
  %220 = vmatprep.subr.bf16.mxu0 0
  %221 = vmatpush1.bf16.msra.mxu0 %v174
  %222 = vmatprep.subr.bf16.mxu0 0
  %223 = vmatpush1.bf16.msra.mxu0 %v175
  %224 = vmatprep.subr.bf16.mxu0 0
  %225 = vmatpush1.bf16.msra.mxu0 %v176
  %226 = vmatprep.subr.bf16.mxu0 0
  %227 = vmatpush1.bf16.msra.mxu0 %v177
  %228 = vmatprep.subr.bf16.mxu0 0
  %229 = vmatpush1.bf16.msra.mxu0 %v178
  %230 = vmatprep.subr.bf16.mxu0 0
  %231 = vmatpush1.bf16.msra.mxu0 %v179
  %232 = vmatprep.subr.bf16.mxu0 0
  %233 = vmatpush1.bf16.msra.mxu0 %v180
  %234 = vmatprep.subr.bf16.mxu0 0
  %235 = vmatpush1.bf16.msra.mxu0 %v181
  %236 = vmatprep.subr.bf16.mxu0 0
  %237 = vmatpush1.bf16.msra.mxu0 %v182
  %238 = vmatprep.subr.bf16.mxu0 0
  %239 = vmatpush1.bf16.msra.mxu0 %v183
  %240 = vmatprep.subr.bf16.mxu0 0
  %241 = vmatpush1.bf16.msra.mxu0 %v184
  %242 = vmatprep.subr.bf16.mxu0 0
  %243 = vmatpush1.bf16.msra.mxu0 %v185
  %244 = vmatprep.subr.bf16.mxu0 0
  %245 = vmatpush1.bf16.msra.mxu0 %v186
  %246 = vmatprep.mubr.bf16.mxu0 %v90
  %247 = vmatmul.mubr.bf16.gmra.mrb[0].mxu0 %v89
  %v248 = vpop.f32.mrb[0].mxu0
  %v249 = vadd.f32 %v67, %v248
  %v250 = vpop.f32.mrb[0].mxu0
  %v251 = vpop.f32.mrb[0].mxu0
  %v252 = vadd.f32 %v67, %v251
  %v253 = vpop.f32.mrb[0].mxu0
  %254 = vmatprep.mubr.bf16.mxu0 %v93
  %255 = vmatmul.mubr.bf16.gmra.mrb[0].mxu0 %v92
  %v256 = vpop.f32.mrb[0].mxu0
  %v257 = vadd.f32 %v67, %v256
  %v258 = vpop.f32.mrb[0].mxu0
  %v259 = vpop.f32.mrb[0].mxu0
  %v260 = vadd.f32 %v67, %v259
  %v261 = vpop.f32.mrb[0].mxu0
  %262 = vdwg.mxu0
  %263 = vmatprep.subr.bf16.mxu0 0
  %264 = vmatpush1.bf16.msra.mxu0 %v187
  %265 = vmatprep.subr.bf16.mxu0 0
  %266 = vmatpush1.bf16.msra.mxu0 %v188
  %267 = vmatprep.subr.bf16.mxu0 0
  %268 = vmatpush1.bf16.msra.mxu0 0
  %269 = vmatprep.subr.bf16.mxu0 0
  %270 = vmatpush1.bf16.msra.mxu0 0
  %271 = vmatprep.subr.bf16.mxu0 0
  %272 = vmatpush1.bf16.msra.mxu0 0
  %273 = vmatprep.subr.bf16.mxu0 0
  %274 = vmatpush1.bf16.msra.mxu0 0
  %275 = vmatprep.subr.bf16.mxu0 0
  %276 = vmatpush1.bf16.msra.mxu0 0
  %277 = vmatprep.subr.bf16.mxu0 0
  %278 = vmatpush1.bf16.msra.mxu0 0
  %279 = vmatprep.subr.bf16.mxu0 0
  %280 = vmatpush1.bf16.msra.mxu0 0
  %281 = vmatprep.subr.bf16.mxu0 0
  %282 = vmatpush1.bf16.msra.mxu0 0
  %283 = vmatprep.subr.bf16.mxu0 0
  %284 = vmatpush1.bf16.msra.mxu0 0
  %285 = vmatprep.subr.bf16.mxu0 0
  %286 = vmatpush1.bf16.msra.mxu0 0
  %287 = vmatprep.subr.bf16.mxu0 0
  %288 = vmatpush1.bf16.msra.mxu0 0
  %289 = vmatprep.subr.bf16.mxu0 0
  %290 = vmatpush1.bf16.msra.mxu0 0
  %291 = vmatprep.subr.bf16.mxu0 0
  %292 = vmatpush1.bf16.msra.mxu0 0
  %293 = vmatprep.subr.bf16.mxu0 0
  %294 = vmatpush1.bf16.msra.mxu0 0
  %295 = vmatprep.mubr.bf16.mxu0 0
  %296 = vmatmul.mubr.bf16.gmra.mrb[0].mxu0 %v209
  %v297 = vpop.f32.mrb[0].mxu0
  %v298 = vadd.f32 %v249, %v297
  %v299 = vpop.f32.mrb[0].mxu0
  %v300 = vpop.f32.mrb[0].mxu0
  %v301 = vadd.f32 %v252, %v300
  %v302 = vpop.f32.mrb[0].mxu0
  %303 = vmatprep.mubr.bf16.mxu0 0
  %304 = vmatmul.mubr.bf16.gmra.mrb[0].mxu0 %v212
  %v305 = vpop.f32.mrb[0].mxu0
  %v306 = vadd.f32 %v257, %v305
  %v307 = vpop.f32.mrb[0].mxu0
  %v308 = vpop.f32.mrb[0].mxu0
  %v309 = vadd.f32 %v260, %v308
  %v310 = vpop.f32.mrb[0].mxu0
  %311 = vdwg.mxu0
  %vm312 = vcmp.ge.f32.partialorder %v298, 0.0
  %vm313 = vcmp.ge.f32.partialorder %v301, 0.0
  %vm314 = vcmp.ge.f32.partialorder %v306, 0.0
  %vm315 = vcmp.ge.f32.partialorder %v309, 0.0
  %v316 = vmul.f32 %v298, 0.2
  %v317 = vmul.f32 %v301, 0.2
  %v318 = vmul.f32 %v306, 0.2
  %v319 = vmul.f32 %v309, 0.2
  %v320 = vsel %vm312, %v298, %v316
  %v321 = vsel %vm313, %v301, %v317
  %v322 = vsel %vm314, %v306, %v318
  %v323 = vsel %vm315, %v309, %v319
  %v324 = vld [vmem:[%s3] sm:$0x1]
  %v326 = vlaneseq
  %v327 = vshrl.u32 %v326, 7
  %v328 = vsub.s32 0, %v327
  %v329 = vrot.slane %v324, %v328
  %v331 = vadd.f32 %v320, %v329
  %v332 = vadd.f32 %v321, %v329
  %v333 = vadd.f32 %v322, %v329
  %v334 = vadd.f32 %v323, %v329
  %v335 = vpack.c.bf16 %v332, %v331
  %v336 = vpack.c.bf16 %v334, %v333
  %v339 = vunpack.c.l.b16 %v335
  %v340 = vunpack.c.h.b16 %v335
  %v341 = vunpack.c.l.b16 %v336
  %v342 = vunpack.c.h.b16 %v336
  %v343 = vpack.c.b16 %v339, %v339
  %v344 = vpack.c.b16 %v340, %v340
  %v345 = vpack.c.b16 %v341, %v341
  %v346 = vpack.c.b16 %v342, %v342
  %vm351 = vcmask 519168
  %352 = vst.msk [vmem:[%s4] sm:$0xf] %vm351, %v343
  %353 = vst.msk [vmem:[%s4 + $0x4] sm:$0xf] %vm351, %v344
  %354 = vst.msk [vmem:[%s4 + $0x8] sm:$0xf] %vm351, %v345
  %355 = vst.msk [vmem:[%s4 + $0xc] sm:$0xf] %vm351, %v346
  // Predicated region
  $region18: #{convnet_cifar10_forward.7} parent=0 // pred_check
    _
  $region19: #{convnet_cifar10_forward.7} parent=0 // pred_check_branch
    %357 = sbr.rel (0) target = $region21
  $region20: #{convnet_cifar10_forward.7} parent=0 // pred_region
    _
  $region21: #{convnet_cifar10_forward.7} parent=0 // pred_fallthru
    _
  // Predicated region
  $region22: #{convnet_cifar10_forward.7} parent=0 // pred_check
    _
  $region23: #{convnet_cifar10_forward.7} parent=0 // pred_check_branch
    %359 = sbr.rel (0) target = $region25
  $region24: #{convnet_cifar10_forward.7} parent=0 // pred_region
    _
  $region25: #{convnet_cifar10_forward.7} parent=0 // pred_fallthru
    _

// kernel: convnet_cifar10_forward.8
$region0: #{convnet_cifar10_forward.8}
  #allocation0 [shape = 'u32[]', space=smem, size = 0x4, offset = 0x4, fixed_abs, tag = 'smem constant byte address 0x4 - core index']
  #allocation1 [shape = 'u32[144,128]{1,0:T(1,128)}', space=vmem, size = 0x12000, scoped, tag = 'internal scratch']
  %s0 = inlined_call_operand.vmem [shape: bf16[16,576], index: 0, kind: input, shape index: {}]
  %s1 = inlined_call_operand.vmem [shape: bf16[576,128], index: 1, kind: input, shape index: {}]
  %s2 = inlined_call_operand.vmem [shape: f32[1,128], index: 2, kind: input, shape index: {}]
  %s3 = inlined_call_operand.vmem [shape: f32[1,128], index: 3, kind: input, shape index: {}]
  %s4 = inlined_call_operand.vmem [shape: bf16[16,128], index: 4, kind: output, shape index: {}]
  %s5 = sld [smem:[#allocation0]]
  $region26: #{convnet_cifar10_forward.8} parent=0
    _
  %s7 = ssub.s32 1, %s5
  %s8 = scalar_select 0, %s7, %s5
  // Predicated region
  $region2: #{convnet_cifar10_forward.8} parent=0 // pred_check
    _
  $region3: #{convnet_cifar10_forward.8} parent=0 // pred_check_branch
    %10 = sbr.rel (0) target = $region5
  $region4: #{convnet_cifar10_forward.8} parent=0 // pred_region
    _
  $region5: #{convnet_cifar10_forward.8} parent=0 // pred_fallthru
    _
  // Predicated region
  $region6: #{convnet_cifar10_forward.8} parent=0 // pred_check
    _
  $region7: #{convnet_cifar10_forward.8} parent=0 // pred_check_branch
    %12 = sbr.rel (0) target = $region9
  $region8: #{convnet_cifar10_forward.8} parent=0 // pred_region
    _
  $region9: #{convnet_cifar10_forward.8} parent=0 // pred_fallthru
    _
  // Predicated region
  $region10: #{convnet_cifar10_forward.8} parent=0 // pred_check
    _
  $region11: #{convnet_cifar10_forward.8} parent=0 // pred_check_branch
    %14 = sbr.rel (0) target = $region13
  $region12: #{convnet_cifar10_forward.8} parent=0 // pred_region
    _
  $region13: #{convnet_cifar10_forward.8} parent=0 // pred_fallthru
    _
  // Predicated region
  $region14: #{convnet_cifar10_forward.8} parent=0 // pred_check
    _
  $region15: #{convnet_cifar10_forward.8} parent=0 // pred_check_branch
    %16 = sbr.rel (0) target = $region17
  $region16: #{convnet_cifar10_forward.8} parent=0 // pred_region
    _
  $region17: #{convnet_cifar10_forward.8} parent=0 // pred_fallthru
    _
  %v18 = vld [vmem:[%s0] sm:$0xff]
  %v19 = vld [vmem:[%s0 + $0x8] sm:$0xff]
  %v20 = vld [vmem:[%s0 + $0x10] sm:$0xf]
  %v21 = vld [vmem:[%s0 + $0x14] sm:$0xff]
  %v22 = vld [vmem:[%s0 + $0x1c] sm:$0xff]
  %v23 = vld [vmem:[%s0 + $0x24] sm:$0xf]
  %v24 = vld [vmem:[%s1] sm:$0xf]
  %v25 = vld [vmem:[%s1 + $0x4] sm:$0xf]
  %v26 = vld [vmem:[%s1 + $0x8] sm:$0xf]
  %v27 = vld [vmem:[%s1 + $0xc] sm:$0xf]
  %v28 = vld [vmem:[%s1 + $0x10] sm:$0xf]
  %v29 = vld [vmem:[%s1 + $0x14] sm:$0xf]
  %v30 = vld [vmem:[%s1 + $0x18] sm:$0xf]
  %v31 = vld [vmem:[%s1 + $0x1c] sm:$0xf]
  %v32 = vld [vmem:[%s1 + $0x20] sm:$0xf]
  %v33 = vld [vmem:[%s1 + $0x24] sm:$0xf]
  %v34 = vld [vmem:[%s1 + $0x28] sm:$0xf]
  %v35 = vld [vmem:[%s1 + $0x2c] sm:$0xf]
  %v36 = vld [vmem:[%s1 + $0x30] sm:$0xf]
  %v37 = vld [vmem:[%s1 + $0x34] sm:$0xf]
  %v38 = vld [vmem:[%s1 + $0x38] sm:$0xf]
  %v39 = vld [vmem:[%s1 + $0x3c] sm:$0xf]
  %v40 = vld [vmem:[%s1 + $0x40] sm:$0xf]
  %v41 = vld [vmem:[%s1 + $0x44] sm:$0xf]
  %v42 = vld [vmem:[%s1 + $0x48] sm:$0xf]
  %v43 = vld [vmem:[%s1 + $0x4c] sm:$0xf]
  %v44 = vld [vmem:[%s1 + $0x50] sm:$0xf]
  %v45 = vld [vmem:[%s1 + $0x54] sm:$0xf]
  %v46 = vld [vmem:[%s1 + $0x58] sm:$0xf]
  %v47 = vld [vmem:[%s1 + $0x5c] sm:$0xf]
  %v48 = vld [vmem:[%s1 + $0x60] sm:$0xf]
  %v49 = vld [vmem:[%s1 + $0x64] sm:$0xf]
  %v50 = vld [vmem:[%s1 + $0x68] sm:$0xf]
  %v51 = vld [vmem:[%s1 + $0x6c] sm:$0xf]
  %v52 = vld [vmem:[%s1 + $0x70] sm:$0xf]
  %v53 = vld [vmem:[%s1 + $0x74] sm:$0xf]
  %v54 = vld [vmem:[%s1 + $0x78] sm:$0xf]
  %v55 = vld [vmem:[%s1 + $0x7c] sm:$0xf]
  %v56 = vld [vmem:[%s1 + $0x80] sm:$0xf]
  %v57 = vld [vmem:[%s1 + $0x84] sm:$0xf]
  %v58 = vld [vmem:[%s1 + $0x88] sm:$0xf]
  %v59 = vld [vmem:[%s1 + $0x8c] sm:$0xf]
  %v60 = vld [vmem:[%s1 + $0x90] sm:$0xf]
  %v61 = vld [vmem:[%s1 + $0x94] sm:$0xf]
  %v62 = vld [vmem:[%s1 + $0x98] sm:$0xf]
  %v63 = vld [vmem:[%s1 + $0x9c] sm:$0xf]
  %v64 = vld [vmem:[%s1 + $0xa0] sm:$0xf]
  %v65 = vld [vmem:[%s1 + $0xa4] sm:$0xf]
  %v66 = vld [vmem:[%s1 + $0xa8] sm:$0xf]
  %v67 = vld [vmem:[%s1 + $0xac] sm:$0xf]
  %v68 = vld [vmem:[%s1 + $0xb0] sm:$0xf]
  %v69 = vld [vmem:[%s1 + $0xb4] sm:$0xf]
  %v70 = vld [vmem:[%s1 + $0xb8] sm:$0xf]
  %v71 = vld [vmem:[%s1 + $0xbc] sm:$0xf]
  %v72 = vld [vmem:[%s1 + $0xc0] sm:$0xf]
  %v73 = vld [vmem:[%s1 + $0xc4] sm:$0xf]
  %v74 = vld [vmem:[%s1 + $0xc8] sm:$0xf]
  %v75 = vld [vmem:[%s1 + $0xcc] sm:$0xf]
  %v76 = vld [vmem:[%s1 + $0xd0] sm:$0xf]
  %v77 = vld [vmem:[%s1 + $0xd4] sm:$0xf]
  %v78 = vld [vmem:[%s1 + $0xd8] sm:$0xf]
  %v79 = vld [vmem:[%s1 + $0xdc] sm:$0xf]
  %v80 = vld [vmem:[%s1 + $0xe0] sm:$0xf]
  %v81 = vld [vmem:[%s1 + $0xe4] sm:$0xf]
  %v82 = vld [vmem:[%s1 + $0xe8] sm:$0xf]
  %v83 = vld [vmem:[%s1 + $0xec] sm:$0xf]
  %v84 = vld [vmem:[%s1 + $0xf0] sm:$0xf]
  %v85 = vld [vmem:[%s1 + $0xf4] sm:$0xf]
  %v86 = vld [vmem:[%s1 + $0xf8] sm:$0xf]
  %v87 = vld [vmem:[%s1 + $0xfc] sm:$0xf]
  %v88 = vld [vmem:[%s1 + $0x100] sm:$0xf]
  %v89 = vld [vmem:[%s1 + $0x104] sm:$0xf]
  %v90 = vld [vmem:[%s1 + $0x108] sm:$0xf]
  %v91 = vld [vmem:[%s1 + $0x10c] sm:$0xf]
  %v92 = vld [vmem:[%s1 + $0x110] sm:$0xf]
  %v93 = vld [vmem:[%s1 + $0x114] sm:$0xf]
  %v94 = vld [vmem:[%s1 + $0x118] sm:$0xf]
  %v95 = vld [vmem:[%s1 + $0x11c] sm:$0xf]
  %v96 = vld [vmem:[%s2] sm:$0x1]
  %v98 = vlaneseq
  %v99 = vshrl.u32 %v98, 7
  %v100 = vsub.s32 0, %v99
  %v101 = vrot.slane %v96, %v100
  %v109 = vunpack.c.l.b16 %v18
  %v110 = vunpack.c.h.b16 %v18
  %v111 = vunpack.c.l.b16 %v19
  %v112 = vunpack.c.h.b16 %v19
  %v113 = vunpack.c.l.b16 %v20
  %v114 = vunpack.c.l.b16 %v21
  %v115 = vunpack.c.h.b16 %v21
  %v116 = vunpack.c.l.b16 %v22
  %v117 = vunpack.c.h.b16 %v22
  %v118 = vunpack.c.l.b16 %v23
  %v119 = vpack.c.b16 %v114, %v109
  %v120 = vpack.c.b16 %v115, %v110
  %v121 = vpack.c.b16 %v116, %v111
  %v122 = vpack.c.b16 %v117, %v112
  %v123 = vpack.c.b16 %v118, %v113
  %v200 = vunpack.c.l.b16 %v24
  %v201 = vunpack.c.l.b16 %v25
  %v202 = vunpack.c.l.b16 %v26
  %v203 = vunpack.c.l.b16 %v27
  %v204 = vunpack.c.l.b16 %v28
  %v205 = vunpack.c.l.b16 %v29
  %v206 = vunpack.c.l.b16 %v30
  %v207 = vunpack.c.l.b16 %v31
  %v208 = vunpack.c.l.b16 %v32
  %v209 = vunpack.c.l.b16 %v33
  %v210 = vunpack.c.l.b16 %v34
  %v211 = vunpack.c.l.b16 %v35
  %v212 = vunpack.c.l.b16 %v36
  %v213 = vunpack.c.l.b16 %v37
  %v214 = vunpack.c.l.b16 %v38
  %v215 = vunpack.c.l.b16 %v39
  %v216 = vunpack.c.l.b16 %v40
  %v217 = vunpack.c.l.b16 %v41
  %v218 = vunpack.c.l.b16 %v42
  %v219 = vunpack.c.l.b16 %v43
  %v220 = vunpack.c.l.b16 %v44
  %v221 = vunpack.c.l.b16 %v45
  %v222 = vunpack.c.l.b16 %v46
  %v223 = vunpack.c.l.b16 %v47
  %v224 = vunpack.c.l.b16 %v48
  %v225 = vunpack.c.l.b16 %v49
  %v226 = vunpack.c.l.b16 %v50
  %v227 = vunpack.c.l.b16 %v51
  %v228 = vunpack.c.l.b16 %v52
  %v229 = vunpack.c.l.b16 %v53
  %v230 = vunpack.c.l.b16 %v54
  %v231 = vunpack.c.l.b16 %v55
  %v232 = vunpack.c.l.b16 %v56
  %v233 = vunpack.c.l.b16 %v57
  %v234 = vunpack.c.l.b16 %v58
  %v235 = vunpack.c.l.b16 %v59
  %v236 = vunpack.c.l.b16 %v60
  %v237 = vunpack.c.l.b16 %v61
  %v238 = vunpack.c.l.b16 %v62
  %v239 = vunpack.c.l.b16 %v63
  %v240 = vunpack.c.l.b16 %v64
  %v241 = vunpack.c.l.b16 %v65
  %v242 = vunpack.c.l.b16 %v66
  %v243 = vunpack.c.l.b16 %v67
  %v244 = vunpack.c.l.b16 %v68
  %v245 = vunpack.c.l.b16 %v69
  %v246 = vunpack.c.l.b16 %v70
  %v247 = vunpack.c.l.b16 %v71
  %v248 = vunpack.c.l.b16 %v72
  %v249 = vunpack.c.l.b16 %v73
  %v250 = vunpack.c.l.b16 %v74
  %v251 = vunpack.c.l.b16 %v75
  %v252 = vunpack.c.l.b16 %v76
  %v253 = vunpack.c.l.b16 %v77
  %v254 = vunpack.c.l.b16 %v78
  %v255 = vunpack.c.l.b16 %v79
  %v256 = vunpack.c.l.b16 %v80
  %v257 = vunpack.c.l.b16 %v81
  %v258 = vunpack.c.l.b16 %v82
  %v259 = vunpack.c.l.b16 %v83
  %v260 = vunpack.c.l.b16 %v84
  %v261 = vunpack.c.l.b16 %v85
  %v262 = vunpack.c.l.b16 %v86
  %v263 = vunpack.c.l.b16 %v87
  %v264 = vunpack.c.l.b16 %v88
  %v265 = vunpack.c.l.b16 %v89
  %v266 = vunpack.c.l.b16 %v90
  %v267 = vunpack.c.l.b16 %v91
  %v268 = vunpack.c.l.b16 %v92
  %v269 = vunpack.c.l.b16 %v93
  %v270 = vunpack.c.l.b16 %v94
  %v271 = vunpack.c.l.b16 %v95
  %v272 = vpack.c.b16 %v201, %v200
  %v273 = vpack.c.b16 %v203, %v202
  %v274 = vpack.c.b16 %v205, %v204
  %v275 = vpack.c.b16 %v207, %v206
  %v276 = vpack.c.b16 %v209, %v208
  %v277 = vpack.c.b16 %v211, %v210
  %v278 = vpack.c.b16 %v213, %v212
  %v279 = vpack.c.b16 %v215, %v214
  %v280 = vpack.c.b16 %v217, %v216
  %v281 = vpack.c.b16 %v219, %v218
  %v282 = vpack.c.b16 %v221, %v220
  %v283 = vpack.c.b16 %v223, %v222
  %v284 = vpack.c.b16 %v225, %v224
  %v285 = vpack.c.b16 %v227, %v226
  %v286 = vpack.c.b16 %v229, %v228
  %v287 = vpack.c.b16 %v231, %v230
  %v288 = vpack.c.b16 %v233, %v232
  %v289 = vpack.c.b16 %v235, %v234
  %v290 = vpack.c.b16 %v237, %v236
  %v291 = vpack.c.b16 %v239, %v238
  %v292 = vpack.c.b16 %v241, %v240
  %v293 = vpack.c.b16 %v243, %v242
  %v294 = vpack.c.b16 %v245, %v244
  %v295 = vpack.c.b16 %v247, %v246
  %v296 = vpack.c.b16 %v249, %v248
  %v297 = vpack.c.b16 %v251, %v250
  %v298 = vpack.c.b16 %v253, %v252
  %v299 = vpack.c.b16 %v255, %v254
  %v300 = vpack.c.b16 %v257, %v256
  %v301 = vpack.c.b16 %v259, %v258
  %v302 = vpack.c.b16 %v261, %v260
  %v303 = vpack.c.b16 %v263, %v262
  %v304 = vpack.c.b16 %v265, %v264
  %v305 = vpack.c.b16 %v267, %v266
  %v306 = vpack.c.b16 %v269, %v268
  %v307 = vpack.c.b16 %v271, %v270
  %vm344 = vcmask 523264
  %v346 = vsel %vm344, %v123, 0
  %348 = vmatprep.subr.bf16.mxu0 0
  %349 = vmatpush1.bf16.msra.mxu0 %v272
  %350 = vmatprep.subr.bf16.mxu0 0
  %351 = vmatpush1.bf16.msra.mxu0 %v273
  %352 = vmatprep.subr.bf16.mxu0 0
  %353 = vmatpush1.bf16.msra.mxu0 %v274
  %354 = vmatprep.subr.bf16.mxu0 0
  %355 = vmatpush1.bf16.msra.mxu0 %v275
  %356 = vmatprep.subr.bf16.mxu0 0
  %357 = vmatpush1.bf16.msra.mxu0 %v276
  %358 = vmatprep.subr.bf16.mxu0 0
  %359 = vmatpush1.bf16.msra.mxu0 %v277
  %360 = vmatprep.subr.bf16.mxu0 0
  %361 = vmatpush1.bf16.msra.mxu0 %v278
  %362 = vmatprep.subr.bf16.mxu0 0
  %363 = vmatpush1.bf16.msra.mxu0 %v279
  %364 = vmatprep.subr.bf16.mxu0 0
  %365 = vmatpush1.bf16.msra.mxu0 %v280
  %366 = vmatprep.subr.bf16.mxu0 0
  %367 = vmatpush1.bf16.msra.mxu0 %v281
  %368 = vmatprep.subr.bf16.mxu0 0
  %369 = vmatpush1.bf16.msra.mxu0 %v282
  %370 = vmatprep.subr.bf16.mxu0 0
  %371 = vmatpush1.bf16.msra.mxu0 %v283
  %372 = vmatprep.subr.bf16.mxu0 0
  %373 = vmatpush1.bf16.msra.mxu0 %v284
  %374 = vmatprep.subr.bf16.mxu0 0
  %375 = vmatpush1.bf16.msra.mxu0 %v285
  %376 = vmatprep.subr.bf16.mxu0 0
  %377 = vmatpush1.bf16.msra.mxu0 %v286
  %378 = vmatprep.subr.bf16.mxu0 0
  %379 = vmatpush1.bf16.msra.mxu0 %v287
  %380 = vmatprep.mubr.bf16.mxu0 %v120
  %381 = vmatmul.mubr.bf16.gmra.mrb[0].mxu0 %v119
  %v382 = vpop.f32.mrb[0].mxu0
  %v383 = vadd.f32 %v101, %v382
  %v384 = vpop.f32.mrb[0].mxu0
  %v385 = vpop.f32.mrb[0].mxu0
  %v386 = vadd.f32 %v101, %v385
  %v387 = vpop.f32.mrb[0].mxu0
  %388 = vdwg.mxu0
  %389 = vmatprep.subr.bf16.mxu0 0
  %390 = vmatpush1.bf16.msra.mxu0 %v288
  %391 = vmatprep.subr.bf16.mxu0 0
  %392 = vmatpush1.bf16.msra.mxu0 %v289
  %393 = vmatprep.subr.bf16.mxu0 0
  %394 = vmatpush1.bf16.msra.mxu0 %v290
  %395 = vmatprep.subr.bf16.mxu0 0
  %396 = vmatpush1.bf16.msra.mxu0 %v291
  %397 = vmatprep.subr.bf16.mxu0 0
  %398 = vmatpush1.bf16.msra.mxu0 %v292
  %399 = vmatprep.subr.bf16.mxu0 0
  %400 = vmatpush1.bf16.msra.mxu0 %v293
  %401 = vmatprep.subr.bf16.mxu0 0
  %402 = vmatpush1.bf16.msra.mxu0 %v294
  %403 = vmatprep.subr.bf16.mxu0 0
  %404 = vmatpush1.bf16.msra.mxu0 %v295
  %405 = vmatprep.subr.bf16.mxu0 0
  %406 = vmatpush1.bf16.msra.mxu0 %v296
  %407 = vmatprep.subr.bf16.mxu0 0
  %408 = vmatpush1.bf16.msra.mxu0 %v297
  %409 = vmatprep.subr.bf16.mxu0 0
  %410 = vmatpush1.bf16.msra.mxu0 %v298
  %411 = vmatprep.subr.bf16.mxu0 0
  %412 = vmatpush1.bf16.msra.mxu0 %v299
  %413 = vmatprep.subr.bf16.mxu0 0
  %414 = vmatpush1.bf16.msra.mxu0 %v300
  %415 = vmatprep.subr.bf16.mxu0 0
  %416 = vmatpush1.bf16.msra.mxu0 %v301
  %417 = vmatprep.subr.bf16.mxu0 0
  %418 = vmatpush1.bf16.msra.mxu0 %v302
  %419 = vmatprep.subr.bf16.mxu0 0
  %420 = vmatpush1.bf16.msra.mxu0 %v303
  %421 = vmatprep.mubr.bf16.mxu0 %v122
  %422 = vmatmul.mubr.bf16.gmra.mrb[0].mxu0 %v121
  %v423 = vpop.f32.mrb[0].mxu0
  %v424 = vadd.f32 %v383, %v423
  %v425 = vpop.f32.mrb[0].mxu0
  %v426 = vpop.f32.mrb[0].mxu0
  %v427 = vadd.f32 %v386, %v426
  %v428 = vpop.f32.mrb[0].mxu0
  %429 = vdwg.mxu0
  %430 = vmatprep.subr.bf16.mxu0 0
  %431 = vmatpush1.bf16.msra.mxu0 %v304
  %432 = vmatprep.subr.bf16.mxu0 0
  %433 = vmatpush1.bf16.msra.mxu0 %v305
  %434 = vmatprep.subr.bf16.mxu0 0
  %435 = vmatpush1.bf16.msra.mxu0 %v306
  %436 = vmatprep.subr.bf16.mxu0 0
  %437 = vmatpush1.bf16.msra.mxu0 %v307
  %438 = vmatprep.subr.bf16.mxu0 0
  %439 = vmatpush1.bf16.msra.mxu0 0
  %440 = vmatprep.subr.bf16.mxu0 0
  %441 = vmatpush1.bf16.msra.mxu0 0
  %442 = vmatprep.subr.bf16.mxu0 0
  %443 = vmatpush1.bf16.msra.mxu0 0
  %444 = vmatprep.subr.bf16.mxu0 0
  %445 = vmatpush1.bf16.msra.mxu0 0
  %446 = vmatprep.subr.bf16.mxu0 0
  %447 = vmatpush1.bf16.msra.mxu0 0
  %448 = vmatprep.subr.bf16.mxu0 0
  %449 = vmatpush1.bf16.msra.mxu0 0
  %450 = vmatprep.subr.bf16.mxu0 0
  %451 = vmatpush1.bf16.msra.mxu0 0
  %452 = vmatprep.subr.bf16.mxu0 0
  %453 = vmatpush1.bf16.msra.mxu0 0
  %454 = vmatprep.subr.bf16.mxu0 0
  %455 = vmatpush1.bf16.msra.mxu0 0
  %456 = vmatprep.subr.bf16.mxu0 0
  %457 = vmatpush1.bf16.msra.mxu0 0
  %458 = vmatprep.subr.bf16.mxu0 0
  %459 = vmatpush1.bf16.msra.mxu0 0
  %460 = vmatprep.subr.bf16.mxu0 0
  %461 = vmatpush1.bf16.msra.mxu0 0
  %462 = vmatprep.mubr.bf16.mxu0 0
  %463 = vmatmul.mubr.bf16.gmra.mrb[0].mxu0 %v346
  %v464 = vpop.f32.mrb[0].mxu0
  %v465 = vadd.f32 %v424, %v464
  %v466 = vpop.f32.mrb[0].mxu0
  %v467 = vpop.f32.mrb[0].mxu0
  %v468 = vadd.f32 %v427, %v467
  %v469 = vpop.f32.mrb[0].mxu0
  %470 = vdwg.mxu0
  %vm471 = vcmp.ge.f32.partialorder %v465, 0.0
  %vm472 = vcmp.ge.f32.partialorder %v468, 0.0
  %v473 = vmul.f32 %v465, 0.2
  %v474 = vmul.f32 %v468, 0.2
  %v475 = vsel %vm471, %v465, %v473
  %v476 = vsel %vm472, %v468, %v474
  %v477 = vld [vmem:[%s3] sm:$0x1]
  %v479 = vlaneseq
  %v480 = vshrl.u32 %v479, 7
  %v481 = vsub.s32 0, %v480
  %v482 = vrot.slane %v477, %v481
  %v484 = vadd.f32 %v475, %v482
  %v485 = vadd.f32 %v476, %v482
  %v486 = vpack.c.bf16 %v485, %v484
  %v488 = vunpack.c.l.b16 %v486
  %v489 = vunpack.c.h.b16 %v486
  %v490 = vpack.c.b16 %v488, %v488
  %v491 = vpack.c.b16 %v489, %v489
  %494 = vst [vmem:[%s4] sm:$0xf] %v490
  %495 = vst [vmem:[%s4 + $0x4] sm:$0xf] %v491
  // Predicated region
  $region18: #{convnet_cifar10_forward.8} parent=0 // pred_check
    _
  $region19: #{convnet_cifar10_forward.8} parent=0 // pred_check_branch
    %497 = sbr.rel (0) target = $region21
  $region20: #{convnet_cifar10_forward.8} parent=0 // pred_region
    _
  $region21: #{convnet_cifar10_forward.8} parent=0 // pred_fallthru
    _
  // Predicated region
  $region22: #{convnet_cifar10_forward.8} parent=0 // pred_check
    _
  $region23: #{convnet_cifar10_forward.8} parent=0 // pred_check_branch
    %499 = sbr.rel (0) target = $region25
  $region24: #{convnet_cifar10_forward.8} parent=0 // pred_region
    _
  $region25: #{convnet_cifar10_forward.8} parent=0 // pred_fallthru
    _

// kernel: convnet_cifar10_forward.9
$region0: #{convnet_cifar10_forward.9}
  #allocation0 [shape = 'u32[]', space=smem, size = 0x4, offset = 0x4, fixed_abs, tag = 'smem constant byte address 0x4 - core index']
  #allocation1 [shape = 'u32[144,128]{1,0:T(1,128)}', space=vmem, size = 0x12000, scoped, tag = 'internal scratch']
  %s0 = inlined_call_operand.vmem [shape: bf16[16,512], index: 0, kind: input, shape index: {}]
  %s1 = inlined_call_operand.vmem [shape: bf16[512,300], index: 1, kind: input, shape index: {}]
  %s2 = inlined_call_operand.vmem [shape: f32[1,300], index: 2, kind: input, shape index: {}]
  %s3 = inlined_call_operand.vmem [shape: f32[1,300], index: 3, kind: input, shape index: {}]
  %s4 = inlined_call_operand.vmem [shape: f32[16,300], index: 4, kind: output, shape index: {}]
  %s5 = sld [smem:[#allocation0]]
  $region26: #{convnet_cifar10_forward.9} parent=0
    _
  %s7 = ssub.s32 1, %s5
  %s8 = scalar_select 0, %s7, %s5
  // Predicated region
  $region2: #{convnet_cifar10_forward.9} parent=0 // pred_check
    _
  $region3: #{convnet_cifar10_forward.9} parent=0 // pred_check_branch
    %10 = sbr.rel (0) target = $region5
  $region4: #{convnet_cifar10_forward.9} parent=0 // pred_region
    _
  $region5: #{convnet_cifar10_forward.9} parent=0 // pred_fallthru
    _
  // Predicated region
  $region6: #{convnet_cifar10_forward.9} parent=0 // pred_check
    _
  $region7: #{convnet_cifar10_forward.9} parent=0 // pred_check_branch
    %12 = sbr.rel (0) target = $region9
  $region8: #{convnet_cifar10_forward.9} parent=0 // pred_region
    _
  $region9: #{convnet_cifar10_forward.9} parent=0 // pred_fallthru
    _
  // Predicated region
  $region10: #{convnet_cifar10_forward.9} parent=0 // pred_check
    _
  $region11: #{convnet_cifar10_forward.9} parent=0 // pred_check_branch
    %14 = sbr.rel (0) target = $region13
  $region12: #{convnet_cifar10_forward.9} parent=0 // pred_region
    _
  $region13: #{convnet_cifar10_forward.9} parent=0 // pred_fallthru
    _
  // Predicated region
  $region14: #{convnet_cifar10_forward.9} parent=0 // pred_check
    _
  $region15: #{convnet_cifar10_forward.9} parent=0 // pred_check_branch
    %16 = sbr.rel (0) target = $region17
  $region16: #{convnet_cifar10_forward.9} parent=0 // pred_region
    _
  $region17: #{convnet_cifar10_forward.9} parent=0 // pred_fallthru
    _
  %v18 = vld [vmem:[%s0] sm:$0xff]
  %v19 = vld [vmem:[%s0 + $0x8] sm:$0xff]
  %v20 = vld [vmem:[%s0 + $0x10] sm:$0xff]
  %v21 = vld [vmem:[%s0 + $0x18] sm:$0xff]
  %v22 = vld [vmem:[%s1] sm:$0xff]
  %v23 = vld [vmem:[%s1 + $0x8] sm:$0xf]
  %v24 = vld [vmem:[%s1 + $0xc] sm:$0xff]
  %v25 = vld [vmem:[%s1 + $0x14] sm:$0xf]
  %v26 = vld [vmem:[%s1 + $0x18] sm:$0xff]
  %v27 = vld [vmem:[%s1 + $0x20] sm:$0xf]
  %v28 = vld [vmem:[%s1 + $0x24] sm:$0xff]
  %v29 = vld [vmem:[%s1 + $0x2c] sm:$0xf]
  %v30 = vld [vmem:[%s1 + $0x30] sm:$0xff]
  %v31 = vld [vmem:[%s1 + $0x38] sm:$0xf]
  %v32 = vld [vmem:[%s1 + $0x3c] sm:$0xff]
  %v33 = vld [vmem:[%s1 + $0x44] sm:$0xf]
  %v34 = vld [vmem:[%s1 + $0x48] sm:$0xff]
  %v35 = vld [vmem:[%s1 + $0x50] sm:$0xf]
  %v36 = vld [vmem:[%s1 + $0x54] sm:$0xff]
  %v37 = vld [vmem:[%s1 + $0x5c] sm:$0xf]
  %v38 = vld [vmem:[%s1 + $0x60] sm:$0xff]
  %v39 = vld [vmem:[%s1 + $0x68] sm:$0xf]
  %v40 = vld [vmem:[%s1 + $0x6c] sm:$0xff]
  %v41 = vld [vmem:[%s1 + $0x74] sm:$0xf]
  %v42 = vld [vmem:[%s1 + $0x78] sm:$0xff]
  %v43 = vld [vmem:[%s1 + $0x80] sm:$0xf]
  %v44 = vld [vmem:[%s1 + $0x84] sm:$0xff]
  %v45 = vld [vmem:[%s1 + $0x8c] sm:$0xf]
  %v46 = vld [vmem:[%s1 + $0x90] sm:$0xff]
  %v47 = vld [vmem:[%s1 + $0x98] sm:$0xf]
  %v48 = vld [vmem:[%s1 + $0x9c] sm:$0xff]
  %v49 = vld [vmem:[%s1 + $0xa4] sm:$0xf]
  %v50 = vld [vmem:[%s1 + $0xa8] sm:$0xff]
  %v51 = vld [vmem:[%s1 + $0xb0] sm:$0xf]
  %v52 = vld [vmem:[%s1 + $0xb4] sm:$0xff]
  %v53 = vld [vmem:[%s1 + $0xbc] sm:$0xf]
  %v54 = vld [vmem:[%s1 + $0xc0] sm:$0xff]
  %v55 = vld [vmem:[%s1 + $0xc8] sm:$0xf]
  %v56 = vld [vmem:[%s1 + $0xcc] sm:$0xff]
  %v57 = vld [vmem:[%s1 + $0xd4] sm:$0xf]
  %v58 = vld [vmem:[%s1 + $0xd8] sm:$0xff]
  %v59 = vld [vmem:[%s1 + $0xe0] sm:$0xf]
  %v60 = vld [vmem:[%s1 + $0xe4] sm:$0xff]
  %v61 = vld [vmem:[%s1 + $0xec] sm:$0xf]
  %v62 = vld [vmem:[%s1 + $0xf0] sm:$0xff]
  %v63 = vld [vmem:[%s1 + $0xf8] sm:$0xf]
  %v64 = vld [vmem:[%s1 + $0xfc] sm:$0xff]
  %v65 = vld [vmem:[%s1 + $0x104] sm:$0xf]
  %v66 = vld [vmem:[%s1 + $0x108] sm:$0xff]
  %v67 = vld [vmem:[%s1 + $0x110] sm:$0xf]
  %v68 = vld [vmem:[%s1 + $0x114] sm:$0xff]
  %v69 = vld [vmem:[%s1 + $0x11c] sm:$0xf]
  %v70 = vld [vmem:[%s1 + $0x120] sm:$0xff]
  %v71 = vld [vmem:[%s1 + $0x128] sm:$0xf]
  %v72 = vld [vmem:[%s1 + $0x12c] sm:$0xff]
  %v73 = vld [vmem:[%s1 + $0x134] sm:$0xf]
  %v74 = vld [vmem:[%s1 + $0x138] sm:$0xff]
  %v75 = vld [vmem:[%s1 + $0x140] sm:$0xf]
  %v76 = vld [vmem:[%s1 + $0x144] sm:$0xff]
  %v77 = vld [vmem:[%s1 + $0x14c] sm:$0xf]
  %v78 = vld [vmem:[%s1 + $0x150] sm:$0xff]
  %v79 = vld [vmem:[%s1 + $0x158] sm:$0xf]
  %v80 = vld [vmem:[%s1 + $0x15c] sm:$0xff]
  %v81 = vld [vmem:[%s1 + $0x164] sm:$0xf]
  %v82 = vld [vmem:[%s1 + $0x168] sm:$0xff]
  %v83 = vld [vmem:[%s1 + $0x170] sm:$0xf]
  %v84 = vld [vmem:[%s1 + $0x174] sm:$0xff]
  %v85 = vld [vmem:[%s1 + $0x17c] sm:$0xf]
  %v86 = vld [vmem:[%s1 + $0x180] sm:$0xff]
  %v87 = vld [vmem:[%s1 + $0x188] sm:$0xf]
  %v88 = vld [vmem:[%s1 + $0x18c] sm:$0xff]
  %v89 = vld [vmem:[%s1 + $0x194] sm:$0xf]
  %v90 = vld [vmem:[%s1 + $0x198] sm:$0xff]
  %v91 = vld [vmem:[%s1 + $0x1a0] sm:$0xf]
  %v92 = vld [vmem:[%s1 + $0x1a4] sm:$0xff]
  %v93 = vld [vmem:[%s1 + $0x1ac] sm:$0xf]
  %v94 = vld [vmem:[%s1 + $0x1b0] sm:$0xff]
  %v95 = vld [vmem:[%s1 + $0x1b8] sm:$0xf]
  %v96 = vld [vmem:[%s1 + $0x1bc] sm:$0xff]
  %v97 = vld [vmem:[%s1 + $0x1c4] sm:$0xf]
  %v98 = vld [vmem:[%s1 + $0x1c8] sm:$0xff]
  %v99 = vld [vmem:[%s1 + $0x1d0] sm:$0xf]
  %v100 = vld [vmem:[%s1 + $0x1d4] sm:$0xff]
  %v101 = vld [vmem:[%s1 + $0x1dc] sm:$0xf]
  %v102 = vld [vmem:[%s1 + $0x1e0] sm:$0xff]
  %v103 = vld [vmem:[%s1 + $0x1e8] sm:$0xf]
  %v104 = vld [vmem:[%s1 + $0x1ec] sm:$0xff]
  %v105 = vld [vmem:[%s1 + $0x1f4] sm:$0xf]
  %v106 = vld [vmem:[%s1 + $0x1f8] sm:$0xff]
  %v107 = vld [vmem:[%s1 + $0x200] sm:$0xf]
  %v108 = vld [vmem:[%s1 + $0x204] sm:$0xff]
  %v109 = vld [vmem:[%s1 + $0x20c] sm:$0xf]
  %v110 = vld [vmem:[%s1 + $0x210] sm:$0xff]
  %v111 = vld [vmem:[%s1 + $0x218] sm:$0xf]
  %v112 = vld [vmem:[%s1 + $0x21c] sm:$0xff]
  %v113 = vld [vmem:[%s1 + $0x224] sm:$0xf]
  %v114 = vld [vmem:[%s1 + $0x228] sm:$0xff]
  %v115 = vld [vmem:[%s1 + $0x230] sm:$0xf]
  %v116 = vld [vmem:[%s1 + $0x234] sm:$0xff]
  %v117 = vld [vmem:[%s1 + $0x23c] sm:$0xf]
  %v118 = vld [vmem:[%s1 + $0x240] sm:$0xff]
  %v119 = vld [vmem:[%s1 + $0x248] sm:$0xf]
  %v120 = vld [vmem:[%s1 + $0x24c] sm:$0xff]
  %v121 = vld [vmem:[%s1 + $0x254] sm:$0xf]
  %v122 = vld [vmem:[%s1 + $0x258] sm:$0xff]
  %v123 = vld [vmem:[%s1 + $0x260] sm:$0xf]
  %v124 = vld [vmem:[%s1 + $0x264] sm:$0xff]
  %v125 = vld [vmem:[%s1 + $0x26c] sm:$0xf]
  %v126 = vld [vmem:[%s1 + $0x270] sm:$0xff]
  %v127 = vld [vmem:[%s1 + $0x278] sm:$0xf]
  %v128 = vld [vmem:[%s1 + $0x27c] sm:$0xff]
  %v129 = vld [vmem:[%s1 + $0x284] sm:$0xf]
  %v130 = vld [vmem:[%s1 + $0x288] sm:$0xff]
  %v131 = vld [vmem:[%s1 + $0x290] sm:$0xf]
  %v132 = vld [vmem:[%s1 + $0x294] sm:$0xff]
  %v133 = vld [vmem:[%s1 + $0x29c] sm:$0xf]
  %v134 = vld [vmem:[%s1 + $0x2a0] sm:$0xff]
  %v135 = vld [vmem:[%s1 + $0x2a8] sm:$0xf]
  %v136 = vld [vmem:[%s1 + $0x2ac] sm:$0xff]
  %v137 = vld [vmem:[%s1 + $0x2b4] sm:$0xf]
  %v138 = vld [vmem:[%s1 + $0x2b8] sm:$0xff]
  %v139 = vld [vmem:[%s1 + $0x2c0] sm:$0xf]
  %v140 = vld [vmem:[%s1 + $0x2c4] sm:$0xff]
  %v141 = vld [vmem:[%s1 + $0x2cc] sm:$0xf]
  %v142 = vld [vmem:[%s1 + $0x2d0] sm:$0xff]
  %v143 = vld [vmem:[%s1 + $0x2d8] sm:$0xf]
  %v144 = vld [vmem:[%s1 + $0x2dc] sm:$0xff]
  %v145 = vld [vmem:[%s1 + $0x2e4] sm:$0xf]
  %v146 = vld [vmem:[%s1 + $0x2e8] sm:$0xff]
  %v147 = vld [vmem:[%s1 + $0x2f0] sm:$0xf]
  %v148 = vld [vmem:[%s1 + $0x2f4] sm:$0xff]
  %v149 = vld [vmem:[%s1 + $0x2fc] sm:$0xf]
  %v150 = vld [vmem:[%s2] sm:$0x7]
  %v152 = vlaneseq
  %v153 = vshrl.u32 %v152, 7
  %v154 = vsub.s32 0, %v153
  %v155 = vrot.slane %v150, %v154
  %v156 = vlaneseq
  %v157 = vshrl.u32 %v156, 7
  %v158 = vsub.s32 1, %v157
  %v159 = vrot.slane %v150, %v158
  %v160 = vlaneseq
  %v161 = vshrl.u32 %v160, 7
  %v162 = vsub.s32 2, %v161
  %v163 = vrot.slane %v150, %v162
  %v171 = vunpack.c.l.b16 %v18
  %v172 = vunpack.c.h.b16 %v18
  %v173 = vunpack.c.l.b16 %v19
  %v174 = vunpack.c.h.b16 %v19
  %v175 = vunpack.c.l.b16 %v20
  %v176 = vunpack.c.h.b16 %v20
  %v177 = vunpack.c.l.b16 %v21
  %v178 = vunpack.c.h.b16 %v21
  %v179 = vpack.c.b16 %v175, %v171
  %v180 = vpack.c.b16 %v176, %v172
  %v181 = vpack.c.b16 %v177, %v173
  %v182 = vpack.c.b16 %v178, %v174
  %v315 = vunpack.c.l.b16 %v22
  %v316 = vunpack.c.h.b16 %v22
  %v317 = vunpack.c.l.b16 %v23
  %v318 = vunpack.c.l.b16 %v24
  %v319 = vunpack.c.h.b16 %v24
  %v320 = vunpack.c.l.b16 %v25
  %v321 = vunpack.c.l.b16 %v26
  %v322 = vunpack.c.h.b16 %v26
  %v323 = vunpack.c.l.b16 %v27
  %v324 = vunpack.c.l.b16 %v28
  %v325 = vunpack.c.h.b16 %v28
  %v326 = vunpack.c.l.b16 %v29
  %v327 = vunpack.c.l.b16 %v30
  %v328 = vunpack.c.h.b16 %v30
  %v329 = vunpack.c.l.b16 %v31
  %v330 = vunpack.c.l.b16 %v32
  %v331 = vunpack.c.h.b16 %v32
  %v332 = vunpack.c.l.b16 %v33
  %v333 = vunpack.c.l.b16 %v34
  %v334 = vunpack.c.h.b16 %v34
  %v335 = vunpack.c.l.b16 %v35
  %v336 = vunpack.c.l.b16 %v36
  %v337 = vunpack.c.h.b16 %v36
  %v338 = vunpack.c.l.b16 %v37
  %v339 = vunpack.c.l.b16 %v38
  %v340 = vunpack.c.h.b16 %v38
  %v341 = vunpack.c.l.b16 %v39
  %v342 = vunpack.c.l.b16 %v40
  %v343 = vunpack.c.h.b16 %v40
  %v344 = vunpack.c.l.b16 %v41
  %v345 = vunpack.c.l.b16 %v42
  %v346 = vunpack.c.h.b16 %v42
  %v347 = vunpack.c.l.b16 %v43
  %v348 = vunpack.c.l.b16 %v44
  %v349 = vunpack.c.h.b16 %v44
  %v350 = vunpack.c.l.b16 %v45
  %v351 = vunpack.c.l.b16 %v46
  %v352 = vunpack.c.h.b16 %v46
  %v353 = vunpack.c.l.b16 %v47
  %v354 = vunpack.c.l.b16 %v48
  %v355 = vunpack.c.h.b16 %v48
  %v356 = vunpack.c.l.b16 %v49
  %v357 = vunpack.c.l.b16 %v50
  %v358 = vunpack.c.h.b16 %v50
  %v359 = vunpack.c.l.b16 %v51
  %v360 = vunpack.c.l.b16 %v52
  %v361 = vunpack.c.h.b16 %v52
  %v362 = vunpack.c.l.b16 %v53
  %v363 = vunpack.c.l.b16 %v54
  %v364 = vunpack.c.h.b16 %v54
  %v365 = vunpack.c.l.b16 %v55
  %v366 = vunpack.c.l.b16 %v56
  %v367 = vunpack.c.h.b16 %v56
  %v368 = vunpack.c.l.b16 %v57
  %v369 = vunpack.c.l.b16 %v58
  %v370 = vunpack.c.h.b16 %v58
  %v371 = vunpack.c.l.b16 %v59
  %v372 = vunpack.c.l.b16 %v60
  %v373 = vunpack.c.h.b16 %v60
  %v374 = vunpack.c.l.b16 %v61
  %v375 = vunpack.c.l.b16 %v62
  %v376 = vunpack.c.h.b16 %v62
  %v377 = vunpack.c.l.b16 %v63
  %v378 = vunpack.c.l.b16 %v64
  %v379 = vunpack.c.h.b16 %v64
  %v380 = vunpack.c.l.b16 %v65
  %v381 = vunpack.c.l.b16 %v66
  %v382 = vunpack.c.h.b16 %v66
  %v383 = vunpack.c.l.b16 %v67
  %v384 = vunpack.c.l.b16 %v68
  %v385 = vunpack.c.h.b16 %v68
  %v386 = vunpack.c.l.b16 %v69
  %v387 = vunpack.c.l.b16 %v70
  %v388 = vunpack.c.h.b16 %v70
  %v389 = vunpack.c.l.b16 %v71
  %v390 = vunpack.c.l.b16 %v72
  %v391 = vunpack.c.h.b16 %v72
  %v392 = vunpack.c.l.b16 %v73
  %v393 = vunpack.c.l.b16 %v74
  %v394 = vunpack.c.h.b16 %v74
  %v395 = vunpack.c.l.b16 %v75
  %v396 = vunpack.c.l.b16 %v76
  %v397 = vunpack.c.h.b16 %v76
  %v398 = vunpack.c.l.b16 %v77
  %v399 = vunpack.c.l.b16 %v78
  %v400 = vunpack.c.h.b16 %v78
  %v401 = vunpack.c.l.b16 %v79
  %v402 = vunpack.c.l.b16 %v80
  %v403 = vunpack.c.h.b16 %v80
  %v404 = vunpack.c.l.b16 %v81
  %v405 = vunpack.c.l.b16 %v82
  %v406 = vunpack.c.h.b16 %v82
  %v407 = vunpack.c.l.b16 %v83
  %v408 = vunpack.c.l.b16 %v84
  %v409 = vunpack.c.h.b16 %v84
  %v410 = vunpack.c.l.b16 %v85
  %v411 = vunpack.c.l.b16 %v86
  %v412 = vunpack.c.h.b16 %v86
  %v413 = vunpack.c.l.b16 %v87
  %v414 = vunpack.c.l.b16 %v88
  %v415 = vunpack.c.h.b16 %v88
  %v416 = vunpack.c.l.b16 %v89
  %v417 = vunpack.c.l.b16 %v90
  %v418 = vunpack.c.h.b16 %v90
  %v419 = vunpack.c.l.b16 %v91
  %v420 = vunpack.c.l.b16 %v92
  %v421 = vunpack.c.h.b16 %v92
  %v422 = vunpack.c.l.b16 %v93
  %v423 = vunpack.c.l.b16 %v94
  %v424 = vunpack.c.h.b16 %v94
  %v425 = vunpack.c.l.b16 %v95
  %v426 = vunpack.c.l.b16 %v96
  %v427 = vunpack.c.h.b16 %v96
  %v428 = vunpack.c.l.b16 %v97
  %v429 = vunpack.c.l.b16 %v98
  %v430 = vunpack.c.h.b16 %v98
  %v431 = vunpack.c.l.b16 %v99
  %v432 = vunpack.c.l.b16 %v100
  %v433 = vunpack.c.h.b16 %v100
  %v434 = vunpack.c.l.b16 %v101
  %v435 = vunpack.c.l.b16 %v102
  %v436 = vunpack.c.h.b16 %v102
  %v437 = vunpack.c.l.b16 %v103
  %v438 = vunpack.c.l.b16 %v104
  %v439 = vunpack.c.h.b16 %v104
  %v440 = vunpack.c.l.b16 %v105
  %v441 = vunpack.c.l.b16 %v106
  %v442 = vunpack.c.h.b16 %v106
  %v443 = vunpack.c.l.b16 %v107
  %v444 = vunpack.c.l.b16 %v108
  %v445 = vunpack.c.h.b16 %v108
  %v446 = vunpack.c.l.b16 %v109
  %v447 = vunpack.c.l.b16 %v110
  %v448 = vunpack.c.h.b16 %v110
  %v449 = vunpack.c.l.b16 %v111
  %v450 = vunpack.c.l.b16 %v112
  %v451 = vunpack.c.h.b16 %v112
  %v452 = vunpack.c.l.b16 %v113
  %v453 = vunpack.c.l.b16 %v114
  %v454 = vunpack.c.h.b16 %v114
  %v455 = vunpack.c.l.b16 %v115
  %v456 = vunpack.c.l.b16 %v116
  %v457 = vunpack.c.h.b16 %v116
  %v458 = vunpack.c.l.b16 %v117
  %v459 = vunpack.c.l.b16 %v118
  %v460 = vunpack.c.h.b16 %v118
  %v461 = vunpack.c.l.b16 %v119
  %v462 = vunpack.c.l.b16 %v120
  %v463 = vunpack.c.h.b16 %v120
  %v464 = vunpack.c.l.b16 %v121
  %v465 = vunpack.c.l.b16 %v122
  %v466 = vunpack.c.h.b16 %v122
  %v467 = vunpack.c.l.b16 %v123
  %v468 = vunpack.c.l.b16 %v124
  %v469 = vunpack.c.h.b16 %v124
  %v470 = vunpack.c.l.b16 %v125
  %v471 = vunpack.c.l.b16 %v126
  %v472 = vunpack.c.h.b16 %v126
  %v473 = vunpack.c.l.b16 %v127
  %v474 = vunpack.c.l.b16 %v128
  %v475 = vunpack.c.h.b16 %v128
  %v476 = vunpack.c.l.b16 %v129
  %v477 = vunpack.c.l.b16 %v130
  %v478 = vunpack.c.h.b16 %v130
  %v479 = vunpack.c.l.b16 %v131
  %v480 = vunpack.c.l.b16 %v132
  %v481 = vunpack.c.h.b16 %v132
  %v482 = vunpack.c.l.b16 %v133
  %v483 = vunpack.c.l.b16 %v134
  %v484 = vunpack.c.h.b16 %v134
  %v485 = vunpack.c.l.b16 %v135
  %v486 = vunpack.c.l.b16 %v136
  %v487 = vunpack.c.h.b16 %v136
  %v488 = vunpack.c.l.b16 %v137
  %v489 = vunpack.c.l.b16 %v138
  %v490 = vunpack.c.h.b16 %v138
  %v491 = vunpack.c.l.b16 %v139
  %v492 = vunpack.c.l.b16 %v140
  %v493 = vunpack.c.h.b16 %v140
  %v494 = vunpack.c.l.b16 %v141
  %v495 = vunpack.c.l.b16 %v142
  %v496 = vunpack.c.h.b16 %v142
  %v497 = vunpack.c.l.b16 %v143
  %v498 = vunpack.c.l.b16 %v144
  %v499 = vunpack.c.h.b16 %v144
  %v500 = vunpack.c.l.b16 %v145
  %v501 = vunpack.c.l.b16 %v146
  %v502 = vunpack.c.h.b16 %v146
  %v503 = vunpack.c.l.b16 %v147
  %v504 = vunpack.c.l.b16 %v148
  %v505 = vunpack.c.h.b16 %v148
  %v506 = vunpack.c.l.b16 %v149
  %v507 = vpack.c.b16 %v318, %v315
  %v508 = vpack.c.b16 %v319, %v316
  %v509 = vpack.c.b16 %v320, %v317
  %v510 = vpack.c.b16 %v324, %v321
  %v511 = vpack.c.b16 %v325, %v322
  %v512 = vpack.c.b16 %v326, %v323
  %v513 = vpack.c.b16 %v330, %v327
  %v514 = vpack.c.b16 %v331, %v328
  %v515 = vpack.c.b16 %v332, %v329
  %v516 = vpack.c.b16 %v336, %v333
  %v517 = vpack.c.b16 %v337, %v334
  %v518 = vpack.c.b16 %v338, %v335
  %v519 = vpack.c.b16 %v342, %v339
  %v520 = vpack.c.b16 %v343, %v340
  %v521 = vpack.c.b16 %v344, %v341
  %v522 = vpack.c.b16 %v348, %v345
  %v523 = vpack.c.b16 %v349, %v346
  %v524 = vpack.c.b16 %v350, %v347
  %v525 = vpack.c.b16 %v354, %v351
  %v526 = vpack.c.b16 %v355, %v352
  %v527 = vpack.c.b16 %v356, %v353
  %v528 = vpack.c.b16 %v360, %v357
  %v529 = vpack.c.b16 %v361, %v358
  %v530 = vpack.c.b16 %v362, %v359
  %v531 = vpack.c.b16 %v366, %v363
  %v532 = vpack.c.b16 %v367, %v364
  %v533 = vpack.c.b16 %v368, %v365
  %v534 = vpack.c.b16 %v372, %v369
  %v535 = vpack.c.b16 %v373, %v370
  %v536 = vpack.c.b16 %v374, %v371
  %v537 = vpack.c.b16 %v378, %v375
  %v538 = vpack.c.b16 %v379, %v376
  %v539 = vpack.c.b16 %v380, %v377
  %v540 = vpack.c.b16 %v384, %v381
  %v541 = vpack.c.b16 %v385, %v382
  %v542 = vpack.c.b16 %v386, %v383
  %v543 = vpack.c.b16 %v390, %v387
  %v544 = vpack.c.b16 %v391, %v388
  %v545 = vpack.c.b16 %v392, %v389
  %v546 = vpack.c.b16 %v396, %v393
  %v547 = vpack.c.b16 %v397, %v394
  %v548 = vpack.c.b16 %v398, %v395
  %v549 = vpack.c.b16 %v402, %v399
  %v550 = vpack.c.b16 %v403, %v400
  %v551 = vpack.c.b16 %v404, %v401
  %v552 = vpack.c.b16 %v408, %v405
  %v553 = vpack.c.b16 %v409, %v406
  %v554 = vpack.c.b16 %v410, %v407
  %v555 = vpack.c.b16 %v414, %v411
  %v556 = vpack.c.b16 %v415, %v412
  %v557 = vpack.c.b16 %v416, %v413
  %v558 = vpack.c.b16 %v420, %v417
  %v559 = vpack.c.b16 %v421, %v418
  %v560 = vpack.c.b16 %v422, %v419
  %v561 = vpack.c.b16 %v426, %v423
  %v562 = vpack.c.b16 %v427, %v424
  %v563 = vpack.c.b16 %v428, %v425
  %v564 = vpack.c.b16 %v432, %v429
  %v565 = vpack.c.b16 %v433, %v430
  %v566 = vpack.c.b16 %v434, %v431
  %v567 = vpack.c.b16 %v438, %v435
  %v568 = vpack.c.b16 %v439, %v436
  %v569 = vpack.c.b16 %v440, %v437
  %v570 = vpack.c.b16 %v444, %v441
  %v571 = vpack.c.b16 %v445, %v442
  %v572 = vpack.c.b16 %v446, %v443
  %v573 = vpack.c.b16 %v450, %v447
  %v574 = vpack.c.b16 %v451, %v448
  %v575 = vpack.c.b16 %v452, %v449
  %v576 = vpack.c.b16 %v456, %v453
  %v577 = vpack.c.b16 %v457, %v454
  %v578 = vpack.c.b16 %v458, %v455
  %v579 = vpack.c.b16 %v462, %v459
  %v580 = vpack.c.b16 %v463, %v460
  %v581 = vpack.c.b16 %v464, %v461
  %v582 = vpack.c.b16 %v468, %v465
  %v583 = vpack.c.b16 %v469, %v466
  %v584 = vpack.c.b16 %v470, %v467
  %v585 = vpack.c.b16 %v474, %v471
  %v586 = vpack.c.b16 %v475, %v472
  %v587 = vpack.c.b16 %v476, %v473
  %v588 = vpack.c.b16 %v480, %v477
  %v589 = vpack.c.b16 %v481, %v478
  %v590 = vpack.c.b16 %v482, %v479
  %v591 = vpack.c.b16 %v486, %v483
  %v592 = vpack.c.b16 %v487, %v484
  %v593 = vpack.c.b16 %v488, %v485
  %v594 = vpack.c.b16 %v492, %v489
  %v595 = vpack.c.b16 %v493, %v490
  %v596 = vpack.c.b16 %v494, %v491
  %v597 = vpack.c.b16 %v498, %v495
  %v598 = vpack.c.b16 %v499, %v496
  %v599 = vpack.c.b16 %v500, %v497
  %v600 = vpack.c.b16 %v504, %v501
  %v601 = vpack.c.b16 %v505, %v502
  %v602 = vpack.c.b16 %v506, %v503
  %699 = vmatprep.subr.bf16.mxu0 %v508
  %700 = vmatpush1.bf16.msra.mxu0 %v507
  %701 = vmatprep.subr.bf16.mxu0 %v511
  %702 = vmatpush1.bf16.msra.mxu0 %v510
  %703 = vmatprep.subr.bf16.mxu0 %v514
  %704 = vmatpush1.bf16.msra.mxu0 %v513
  %705 = vmatprep.subr.bf16.mxu0 %v517
  %706 = vmatpush1.bf16.msra.mxu0 %v516
  %707 = vmatprep.subr.bf16.mxu0 %v520
  %708 = vmatpush1.bf16.msra.mxu0 %v519
  %709 = vmatprep.subr.bf16.mxu0 %v523
  %710 = vmatpush1.bf16.msra.mxu0 %v522
  %711 = vmatprep.subr.bf16.mxu0 %v526
  %712 = vmatpush1.bf16.msra.mxu0 %v525
  %713 = vmatprep.subr.bf16.mxu0 %v529
  %714 = vmatpush1.bf16.msra.mxu0 %v528
  %715 = vmatprep.subr.bf16.mxu0 %v532
  %716 = vmatpush1.bf16.msra.mxu0 %v531
  %717 = vmatprep.subr.bf16.mxu0 %v535
  %718 = vmatpush1.bf16.msra.mxu0 %v534
  %719 = vmatprep.subr.bf16.mxu0 %v538
  %720 = vmatpush1.bf16.msra.mxu0 %v537
  %721 = vmatprep.subr.bf16.mxu0 %v541
  %722 = vmatpush1.bf16.msra.mxu0 %v540
  %723 = vmatprep.subr.bf16.mxu0 %v544
  %724 = vmatpush1.bf16.msra.mxu0 %v543
  %725 = vmatprep.subr.bf16.mxu0 %v547
  %726 = vmatpush1.bf16.msra.mxu0 %v546
  %727 = vmatprep.subr.bf16.mxu0 %v550
  %728 = vmatpush1.bf16.msra.mxu0 %v549
  %729 = vmatprep.subr.bf16.mxu0 %v553
  %730 = vmatpush1.bf16.msra.mxu0 %v552
  %731 = vmatprep.mubr.bf16.mxu0 %v180
  %732 = vmatmul.mubr.bf16.gmra.mrb[0].mxu0 %v179
  %v733 = vpop.f32.mrb[0].mxu0
  %v734 = vadd.f32 %v155, %v733
  %v735 = vpop.f32.mrb[0].mxu0
  %v736 = vadd.f32 %v159, %v735
  %v737 = vpop.f32.mrb[0].mxu0
  %v738 = vadd.f32 %v155, %v737
  %v739 = vpop.f32.mrb[0].mxu0
  %v740 = vadd.f32 %v159, %v739
  %741 = vdwg.mxu0
  %742 = vmatprep.subr.bf16.mxu0 %v556
  %743 = vmatpush1.bf16.msra.mxu0 %v555
  %744 = vmatprep.subr.bf16.mxu0 %v559
  %745 = vmatpush1.bf16.msra.mxu0 %v558
  %746 = vmatprep.subr.bf16.mxu0 %v562
  %747 = vmatpush1.bf16.msra.mxu0 %v561
  %748 = vmatprep.subr.bf16.mxu0 %v565
  %749 = vmatpush1.bf16.msra.mxu0 %v564
  %750 = vmatprep.subr.bf16.mxu0 %v568
  %751 = vmatpush1.bf16.msra.mxu0 %v567
  %752 = vmatprep.subr.bf16.mxu0 %v571
  %753 = vmatpush1.bf16.msra.mxu0 %v570
  %754 = vmatprep.subr.bf16.mxu0 %v574
  %755 = vmatpush1.bf16.msra.mxu0 %v573
  %756 = vmatprep.subr.bf16.mxu0 %v577
  %757 = vmatpush1.bf16.msra.mxu0 %v576
  %758 = vmatprep.subr.bf16.mxu0 %v580
  %759 = vmatpush1.bf16.msra.mxu0 %v579
  %760 = vmatprep.subr.bf16.mxu0 %v583
  %761 = vmatpush1.bf16.msra.mxu0 %v582
  %762 = vmatprep.subr.bf16.mxu0 %v586
  %763 = vmatpush1.bf16.msra.mxu0 %v585
  %764 = vmatprep.subr.bf16.mxu0 %v589
  %765 = vmatpush1.bf16.msra.mxu0 %v588
  %766 = vmatprep.subr.bf16.mxu0 %v592
  %767 = vmatpush1.bf16.msra.mxu0 %v591
  %768 = vmatprep.subr.bf16.mxu0 %v595
  %769 = vmatpush1.bf16.msra.mxu0 %v594
  %770 = vmatprep.subr.bf16.mxu0 %v598
  %771 = vmatpush1.bf16.msra.mxu0 %v597
  %772 = vmatprep.subr.bf16.mxu0 %v601
  %773 = vmatpush1.bf16.msra.mxu0 %v600
  %774 = vmatprep.mubr.bf16.mxu0 %v182
  %775 = vmatmul.mubr.bf16.gmra.mrb[0].mxu0 %v181
  %v776 = vpop.f32.mrb[0].mxu0
  %v777 = vadd.f32 %v734, %v776
  %v778 = vpop.f32.mrb[0].mxu0
  %v779 = vadd.f32 %v736, %v778
  %v780 = vpop.f32.mrb[0].mxu0
  %v781 = vadd.f32 %v738, %v780
  %v782 = vpop.f32.mrb[0].mxu0
  %v783 = vadd.f32 %v740, %v782
  %784 = vdwg.mxu0
  %785 = vmatprep.subr.bf16.mxu0 0
  %786 = vmatpush1.bf16.msra.mxu0 %v509
  %787 = vmatprep.subr.bf16.mxu0 0
  %788 = vmatpush1.bf16.msra.mxu0 %v512
  %789 = vmatprep.subr.bf16.mxu0 0
  %790 = vmatpush1.bf16.msra.mxu0 %v515
  %791 = vmatprep.subr.bf16.mxu0 0
  %792 = vmatpush1.bf16.msra.mxu0 %v518
  %793 = vmatprep.subr.bf16.mxu0 0
  %794 = vmatpush1.bf16.msra.mxu0 %v521
  %795 = vmatprep.subr.bf16.mxu0 0
  %796 = vmatpush1.bf16.msra.mxu0 %v524
  %797 = vmatprep.subr.bf16.mxu0 0
  %798 = vmatpush1.bf16.msra.mxu0 %v527
  %799 = vmatprep.subr.bf16.mxu0 0
  %800 = vmatpush1.bf16.msra.mxu0 %v530
  %801 = vmatprep.subr.bf16.mxu0 0
  %802 = vmatpush1.bf16.msra.mxu0 %v533
  %803 = vmatprep.subr.bf16.mxu0 0
  %804 = vmatpush1.bf16.msra.mxu0 %v536
  %805 = vmatprep.subr.bf16.mxu0 0
  %806 = vmatpush1.bf16.msra.mxu0 %v539
  %807 = vmatprep.subr.bf16.mxu0 0
  %808 = vmatpush1.bf16.msra.mxu0 %v542
  %809 = vmatprep.subr.bf16.mxu0 0
  %810 = vmatpush1.bf16.msra.mxu0 %v545
  %811 = vmatprep.subr.bf16.mxu0 0
  %812 = vmatpush1.bf16.msra.mxu0 %v548
  %813 = vmatprep.subr.bf16.mxu0 0
  %814 = vmatpush1.bf16.msra.mxu0 %v551
  %815 = vmatprep.subr.bf16.mxu0 0
  %816 = vmatpush1.bf16.msra.mxu0 %v554
  %817 = vmatprep.mubr.bf16.mxu0 %v180
  %818 = vmatmul.mubr.bf16.gmra.mrb[0].mxu0 %v179
  %v819 = vpop.f32.mrb[0].mxu0
  %v820 = vadd.f32 %v163, %v819
  %v821 = vpop.f32.mrb[0].mxu0
  %v822 = vpop.f32.mrb[0].mxu0
  %v823 = vadd.f32 %v163, %v822
  %v824 = vpop.f32.mrb[0].mxu0
  %825 = vdwg.mxu0
  %826 = vmatprep.subr.bf16.mxu0 0
  %827 = vmatpush1.bf16.msra.mxu0 %v557
  %828 = vmatprep.subr.bf16.mxu0 0
  %829 = vmatpush1.bf16.msra.mxu0 %v560
  %830 = vmatprep.subr.bf16.mxu0 0
  %831 = vmatpush1.bf16.msra.mxu0 %v563
  %832 = vmatprep.subr.bf16.mxu0 0
  %833 = vmatpush1.bf16.msra.mxu0 %v566
  %834 = vmatprep.subr.bf16.mxu0 0
  %835 = vmatpush1.bf16.msra.mxu0 %v569
  %836 = vmatprep.subr.bf16.mxu0 0
  %837 = vmatpush1.bf16.msra.mxu0 %v572
  %838 = vmatprep.subr.bf16.mxu0 0
  %839 = vmatpush1.bf16.msra.mxu0 %v575
  %840 = vmatprep.subr.bf16.mxu0 0
  %841 = vmatpush1.bf16.msra.mxu0 %v578
  %842 = vmatprep.subr.bf16.mxu0 0
  %843 = vmatpush1.bf16.msra.mxu0 %v581
  %844 = vmatprep.subr.bf16.mxu0 0
  %845 = vmatpush1.bf16.msra.mxu0 %v584
  %846 = vmatprep.subr.bf16.mxu0 0
  %847 = vmatpush1.bf16.msra.mxu0 %v587
  %848 = vmatprep.subr.bf16.mxu0 0
  %849 = vmatpush1.bf16.msra.mxu0 %v590
  %850 = vmatprep.subr.bf16.mxu0 0
  %851 = vmatpush1.bf16.msra.mxu0 %v593
  %852 = vmatprep.subr.bf16.mxu0 0
  %853 = vmatpush1.bf16.msra.mxu0 %v596
  %854 = vmatprep.subr.bf16.mxu0 0
  %855 = vmatpush1.bf16.msra.mxu0 %v599
  %856 = vmatprep.subr.bf16.mxu0 0
  %857 = vmatpush1.bf16.msra.mxu0 %v602
  %858 = vmatprep.mubr.bf16.mxu0 %v182
  %859 = vmatmul.mubr.bf16.gmra.mrb[0].mxu0 %v181
  %v860 = vpop.f32.mrb[0].mxu0
  %v861 = vadd.f32 %v820, %v860
  %v862 = vpop.f32.mrb[0].mxu0
  %v863 = vpop.f32.mrb[0].mxu0
  %v864 = vadd.f32 %v823, %v863
  %v865 = vpop.f32.mrb[0].mxu0
  %866 = vdwg.mxu0
  %v867 = vld [vmem:[%s3] sm:$0x7]
  %v869 = vlaneseq
  %v870 = vshrl.u32 %v869, 7
  %v871 = vsub.s32 0, %v870
  %v872 = vrot.slane %v867, %v871
  %v873 = vlaneseq
  %v874 = vshrl.u32 %v873, 7
  %v875 = vsub.s32 1, %v874
  %v876 = vrot.slane %v867, %v875
  %v877 = vlaneseq
  %v878 = vshrl.u32 %v877, 7
  %v879 = vsub.s32 2, %v878
  %v880 = vrot.slane %v867, %v879
  %v884 = vadd.f32 %v777, %v872
  %v885 = vadd.f32 %v779, %v876
  %v886 = vadd.f32 %v861, %v880
  %v887 = vadd.f32 %v781, %v872
  %v888 = vadd.f32 %v783, %v876
  %v889 = vadd.f32 %v864, %v880
  %890 = vst [vmem:[%s4] sm:$0xff] %v884
  %891 = vst [vmem:[%s4 + $0x8] sm:$0xff] %v885
  %vm892 = vcmask 359424
  %893 = vst.msk [vmem:[%s4 + $0x10] sm:$0xff] %vm892, %v886
  %894 = vst [vmem:[%s4 + $0x18] sm:$0xff] %v887
  %895 = vst [vmem:[%s4 + $0x20] sm:$0xff] %v888
  %896 = vst.msk [vmem:[%s4 + $0x28] sm:$0xff] %vm892, %v889
  // Predicated region
  $region18: #{convnet_cifar10_forward.9} parent=0 // pred_check
    _
  $region19: #{convnet_cifar10_forward.9} parent=0 // pred_check_branch
    %898 = sbr.rel (0) target = $region21
  $region20: #{convnet_cifar10_forward.9} parent=0 // pred_region
    _
  $region21: #{convnet_cifar10_forward.9} parent=0 // pred_fallthru
    _
  // Predicated region
  $region22: #{convnet_cifar10_forward.9} parent=0 // pred_check
    _
  $region23: #{convnet_cifar10_forward.9} parent=0 // pred_check_branch
    %900 = sbr.rel (0) target = $region25
  $region24: #{convnet_cifar10_forward.9} parent=0 // pred_region
    _
  $region25: #{convnet_cifar10_forward.9} parent=0 // pred_fallthru
    _

</llo_original>
